<compile_context>
chip_gen: v7x
topology: tpu7x:2x2x1
jax: 0.10.0
libtpu: 0.0.40
codegen_flags: <defaults>
</compile_context>

<pallas_src>
import jax
import jax.numpy as jnp
from jax import lax
from jax.experimental import pallas as pl
from jax.experimental.pallas import tpu as pltpu

NUM_HEADS = 8
LN_EPS = 1e-5  # fresh nn.LayerNorm created in forward(): weight=1, bias=0, eps=1e-5


# ----------------------------------------------------------------------------
# Pallas kernel: one (branch, batch-element) grid step.
# cross-MHA (all heads batched) -> out-proj -> FFN -> residual -> LayerNorm.
# ----------------------------------------------------------------------------
def _coattn_branch_kernel(q_ref, kv_ref,
                          wq_ref, wk_ref, wv_ref,
                          bq_ref, bk_ref, bv_ref,
                          wo_ref, bo_ref,
                          w1_ref, w2_ref,
                          out_ref, attn_ref):
    L, E = q_ref.shape
    S = kv_ref.shape[0]
    H, _, dh = wq_ref.shape

    q = q_ref[...]                       # [L, E]
    kv = kv_ref[...]                     # [S, E]

    # Head-batched in-projections.  Weights were pre-transposed and split per head in
    # the wrapper to [H, E, dh], so no in-kernel transpose / lane slicing is needed.
    qb = jnp.broadcast_to(q, (H, L, E))
    kb = jnp.broadcast_to(kv, (H, S, E))
    Qh = jnp.einsum('hle,hed->hld', qb, wq_ref[...],
                    preferred_element_type=jnp.float32) + bq_ref[...]   # [H, L, dh]
    Kh = jnp.einsum('hse,hed->hsd', kb, wk_ref[...],
                    preferred_element_type=jnp.float32) + bk_ref[...]   # [H, S, dh]
    Vh = jnp.einsum('hse,hed->hsd', kb, wv_ref[...],
                    preferred_element_type=jnp.float32) + bv_ref[...]   # [H, S, dh]

    # Scaled dot-product attention: all heads in one batched matmul / one softmax.
    scale = 1.0 / (dh ** 0.5)
    s = jnp.einsum('hld,hsd->hls', Qh, Kh,
                   preferred_element_type=jnp.float32) * scale          # [H, L, S]
    s = s - jnp.max(s, axis=-1, keepdims=True)
    p = jnp.exp(s)
    a = p * pl.reciprocal(jnp.sum(p, axis=-1, keepdims=True), approx=True)

    # Head-averaged attention weights (PyTorch default average_attn_weights=True).
    attn_ref[...] = jnp.mean(a, axis=0)                                 # [L, S]

    ctx = jnp.einsum('hls,hsd->hld', a, Vh,
                     preferred_element_type=jnp.float32)                # [H, L, dh]
    # Output projection, still head-batched: sum_h ctx_h @ (Wo^T rows of head h).
    proj = jnp.einsum('hld,hde->hle', ctx, wo_ref[...],
                      preferred_element_type=jnp.float32)               # [H, L, E]
    attn_out = jnp.sum(proj, axis=0) + bo_ref[...]                      # [L, E]

    # PoswiseFeedForwardNet (no biases) + residual + LayerNorm(weight=1, bias=0).
    h1 = jnp.maximum(jnp.dot(attn_out, w1_ref[...],
                             preferred_element_type=jnp.float32), 0.0)  # [L, d_ff]
    y = jnp.dot(h1, w2_ref[...],
                preferred_element_type=jnp.float32) + attn_out          # [L, E]
    mu = jnp.mean(y, axis=-1, keepdims=True)
    var = jnp.mean((y - mu) * (y - mu), axis=-1, keepdims=True)
    out_ref[...] = (y - mu) * lax.rsqrt(var + LN_EPS)


# ----------------------------------------------------------------------------
# pallas_call wrapper: one fused call for both branches, grid = (branch, batch)
# ----------------------------------------------------------------------------
def _coattn_pallas(q_s, kv_s, wq, wk, wv, bq, bk, bv, wo, bo, w1, w2):
    """q_s: [2, N, L, E], kv_s: [2, N, S, E]; params stacked per branch on axis 0."""
    B, N, L, E = q_s.shape
    S = kv_s.shape[2]
    H = NUM_HEADS
    dh = E // H
    d_ff = w1.shape[-1]

    act = lambda b, n: (b, n, 0, 0)         # per (branch, batch) activation block
    par4 = lambda b, n: (b, 0, 0, 0)        # per-branch parameter (4-D)
    par3 = lambda b, n: (b, 0, 0)           # per-branch parameter (3-D)

    in_specs = [
        pl.BlockSpec((None, None, L, E), act),      # q
        pl.BlockSpec((None, None, S, E), act),      # kv
        pl.BlockSpec((None, H, E, dh), par4),       # wq (per-head, pre-transposed)
        pl.BlockSpec((None, H, E, dh), par4),       # wk
        pl.BlockSpec((None, H, E, dh), par4),       # wv
        pl.BlockSpec((None, H, 1, dh), par4),       # bq
        pl.BlockSpec((None, H, 1, dh), par4),       # bk
        pl.BlockSpec((None, H, 1, dh), par4),       # bv
        pl.BlockSpec((None, H, dh, E), par4),       # wo (per-head rows of Wo^T)
        pl.BlockSpec((None, 1, E), par3),           # bo
        pl.BlockSpec((None, E, d_ff), par3),        # w1^T
        pl.BlockSpec((None, d_ff, E), par3),        # w2^T
    ]
    out_specs = [
        pl.BlockSpec((None, None, L, E), act),      # layer output
        pl.BlockSpec((None, None, L, S), act),      # head-averaged attention weights
    ]
    out_shape = [
        jax.ShapeDtypeStruct((B, N, L, E), jnp.float32),
        jax.ShapeDtypeStruct((B, N, L, S), jnp.float32),
    ]
    return pl.pallas_call(
        _coattn_branch_kernel,
        grid=(B, N),
        in_specs=in_specs,
        out_specs=out_specs,
        out_shape=out_shape,
        compiler_params=pltpu.CompilerParams(
            dimension_semantics=("parallel", "parallel")),
    )(q_s, kv_s, wq, wk, wv, bq, bk, bv, wo, bo, w1, w2)


# ----------------------------------------------------------------------------
# Module-level wrapper: weight splitting / pre-transposes + layout glue.
# ----------------------------------------------------------------------------
def _prep_branch(p):
    """Split & pre-transpose one branch's PyTorch-style weights (one-time XLA ops)."""
    E = p["out_w"].shape[0]
    H = NUM_HEADS
    dh = E // H
    wq, wk, wv = jnp.split(p["in_proj_w"], 3, axis=0)        # each [E_out, E_in]
    bq, bk, bv = jnp.split(p["in_proj_b"], 3, axis=0)        # each [E]
    head_w = lambda w: w.T.reshape(E, H, dh).transpose(1, 0, 2)   # [H, E_in, dh]
    head_b = lambda b: b.reshape(H, 1, dh)
    return dict(
        wq=head_w(wq), wk=head_w(wk), wv=head_w(wv),
        bq=head_b(bq), bk=head_b(bk), bv=head_b(bv),
        wo=p["out_w"].T.reshape(H, dh, E),                   # per-head rows of Wo^T
        bo=p["out_b"].reshape(1, E),
        w1=p["w1"].T,                                        # [E, d_ff]
        w2=p["w2"].T,                                        # [d_ff, E]
    )


@jax.jit
def coattention_encoder_layer(enc_inputs1, enc_inputs2, params1, params2):
    """enc_inputs*: [L, N, E] seq-first (nn.MultiheadAttention default layout)."""
    in1 = jnp.transpose(enc_inputs1, (1, 0, 2))              # [N, L, E]
    in2 = jnp.transpose(enc_inputs2, (1, 0, 2))
    # branch 1: attn1(query=enc_inputs2, key/value=enc_inputs1)
    # branch 2: attn2(query=enc_inputs1, key/value=enc_inputs2)
    q_s = jnp.stack([in2, in1])                              # [2, N, L, E]
    kv_s = jnp.stack([in1, in2])                             # [2, N, S, E]
    p1, p2 = _prep_branch(params1), _prep_branch(params2)
    stk = lambda k: jnp.stack([p1[k], p2[k]])
    out, attn = _coattn_pallas(
        q_s, kv_s, stk("wq"), stk("wk"), stk("wv"), stk("bq"), stk("bk"), stk("bv"),
        stk("wo"), stk("bo"), stk("w1"), stk("w2"))
    out1 = jnp.transpose(out[0], (1, 0, 2))                  # back to seq-first [L, N, E]
    out2 = jnp.transpose(out[1], (1, 0, 2))
    return out1, attn[0], out2, attn[1]


# ----------------------------------------------------------------------------
# Pure-JAX reference (correctness check)
# ----------------------------------------------------------------------------
def _ref_branch(q_sf, kv_sf, p):
    E = q_sf.shape[-1]
    H, dh = NUM_HEADS, E // NUM_HEADS
    q = jnp.transpose(q_sf, (1, 0, 2))
    kv = jnp.transpose(kv_sf, (1, 0, 2))
    wq, wk, wv = jnp.split(p["in_proj_w"], 3, axis=0)
    bq, bk, bv = jnp.split(p["in_proj_b"], 3, axis=0)
    Q = q @ wq.T + bq
    K = kv @ wk.T + bk
    V = kv @ wv.T + bv
    N, L, _ = Q.shape
    S = K.shape[1]
    Q = Q.reshape(N, L, H, dh)
    K = K.reshape(N, S, H, dh)
    V = V.reshape(N, S, H, dh)
    scores = jnp.einsum("nlhd,nshd->nhls", Q, K) / jnp.sqrt(jnp.float32(dh))
    attn = jax.nn.softmax(scores, axis=-1)
    ctx = jnp.einsum("nhls,nshd->nlhd", attn, V).reshape(N, L, E)
    ao = ctx @ p["out_w"].T + p["out_b"]
    h1 = jax.nn.relu(ao @ p["w1"].T)
    y = h1 @ p["w2"].T + ao
    mu = y.mean(-1, keepdims=True)
    var = ((y - mu) ** 2).mean(-1, keepdims=True)
    out = (y - mu) / jnp.sqrt(var + LN_EPS)
    return jnp.transpose(out, (1, 0, 2)), attn.mean(axis=1)


def _init_branch_params(key, E, d_ff=512):
    ks = jax.random.split(key, 6)
    return dict(
        in_proj_w=jax.random.normal(ks[0], (3 * E, E), jnp.float32) * 0.05,
        in_proj_b=jax.random.normal(ks[1], (3 * E,), jnp.float32) * 0.05,
        out_w=jax.random.normal(ks[2], (E, E), jnp.float32) * 0.05,
        out_b=jax.random.normal(ks[3], (E,), jnp.float32) * 0.05,
        w1=jax.random.normal(ks[4], (d_ff, E), jnp.float32) * 0.05,
        w2=jax.random.normal(ks[5], (E, d_ff), jnp.float32) * 0.05,
    )


if __name__ == "__main__":
    L, N, E = 8, 2, 32  # seq=8, batch=2, embed_dim=32 (8 heads, head_dim=4)
    key = jax.random.PRNGKey(0)
    k_in1, k_in2, k_p1, k_p2 = jax.random.split(key, 4)

    enc_inputs1 = jax.random.normal(k_in1, (L, N, E), jnp.float32)
    enc_inputs2 = jax.random.normal(k_in2, (L, N, E), jnp.float32)
    params1 = _init_branch_params(k_p1, E)
    params2 = _init_branch_params(k_p2, E)

    out1, attn1, out2, attn2 = coattention_encoder_layer(
        enc_inputs1, enc_inputs2, params1, params2)
    jax.block_until_ready((out1, attn1, out2, attn2))

    # correctness check against pure-JAX reference (tolerances loosened slightly for the
    # EUP approximate reciprocal in the softmax denominator).
    ref_out1, ref_attn1 = _ref_branch(enc_inputs2, enc_inputs1, params1)
    ref_out2, ref_attn2 = _ref_branch(enc_inputs1, enc_inputs2, params2)
    assert jnp.allclose(out1, ref_out1, atol=5e-3, rtol=1e-2), "out1 mismatch"
    assert jnp.allclose(attn1, ref_attn1, atol=2e-3), "attn1 mismatch"
    assert jnp.allclose(out2, ref_out2, atol=5e-3, rtol=1e-2), "out2 mismatch"
    assert jnp.allclose(attn2, ref_attn2, atol=2e-3), "attn2 mismatch"

    print("KERNEL_OK")
</pallas_src>

<mosaic_0001>
module attributes {stable_mosaic.version = 11 : i64} {
  func.func @_coattn_branch_kernel(%arg0: i32, %arg1: i32, %arg2: memref<1x1x8x32xf32, #tpu.memory_space<vmem>>, %arg3: memref<1x1x8x32xf32, #tpu.memory_space<vmem>>, %arg4: memref<1x8x32x4xf32, #tpu.memory_space<vmem>>, %arg5: memref<1x8x32x4xf32, #tpu.memory_space<vmem>>, %arg6: memref<1x8x32x4xf32, #tpu.memory_space<vmem>>, %arg7: memref<1x8x1x4xf32, #tpu.memory_space<vmem>>, %arg8: memref<1x8x1x4xf32, #tpu.memory_space<vmem>>, %arg9: memref<1x8x1x4xf32, #tpu.memory_space<vmem>>, %arg10: memref<1x8x4x32xf32, #tpu.memory_space<vmem>>, %arg11: memref<1x1x32xf32, #tpu.memory_space<vmem>>, %arg12: memref<1x32x512xf32, #tpu.memory_space<vmem>>, %arg13: memref<1x512x32xf32, #tpu.memory_space<vmem>>, %arg14: memref<1x1x8x32xf32, #tpu.memory_space<vmem>>, %arg15: memref<1x1x8x8xf32, #tpu.memory_space<vmem>>) attributes {dimension_semantics = [#tpu.dimension_semantics<parallel>, #tpu.dimension_semantics<parallel>], iteration_bounds = array<i64: 2, 2>, scalar_prefetch = 0 : i64, scratch_operands = 0 : i64, tpu.core_type = #tpu.core_type<tc>, window_params = [{transform_indices = @transform_0, window_bounds = array<i64: 1, 1, 8, 32>}, {transform_indices = @transform_1, window_bounds = array<i64: 1, 1, 8, 32>}, {transform_indices = @transform_2, window_bounds = array<i64: 1, 8, 32, 4>}, {transform_indices = @transform_3, window_bounds = array<i64: 1, 8, 32, 4>}, {transform_indices = @transform_4, window_bounds = array<i64: 1, 8, 32, 4>}, {transform_indices = @transform_5, window_bounds = array<i64: 1, 8, 1, 4>}, {transform_indices = @transform_6, window_bounds = array<i64: 1, 8, 1, 4>}, {transform_indices = @transform_7, window_bounds = array<i64: 1, 8, 1, 4>}, {transform_indices = @transform_8, window_bounds = array<i64: 1, 8, 4, 32>}, {transform_indices = @transform_9, window_bounds = array<i64: 1, 1, 32>}, {transform_indices = @transform_10, window_bounds = array<i64: 1, 32, 512>}, {transform_indices = @transform_11, window_bounds = array<i64: 1, 512, 32>}, {transform_indices = @transform_12, window_bounds = array<i64: 1, 1, 8, 32>}, {transform_indices = @transform_13, window_bounds = array<i64: 1, 1, 8, 8>}]} {
    %c0 = arith.constant 0 : index
    %c0_0 = arith.constant 0 : index
    %c0_1 = arith.constant 0 : index
    %c0_2 = arith.constant 0 : index
    %0 = vector.load %arg2[%c0, %c0_0, %c0_1, %c0_2] : memref<1x1x8x32xf32, #tpu.memory_space<vmem>>, vector<1x1x8x32xf32>
    %1 = vector.shape_cast %0 : vector<1x1x8x32xf32> to vector<8x32xf32>
    %c0_3 = arith.constant 0 : index
    %c0_4 = arith.constant 0 : index
    %c0_5 = arith.constant 0 : index
    %c0_6 = arith.constant 0 : index
    %2 = vector.load %arg3[%c0_3, %c0_4, %c0_5, %c0_6] : memref<1x1x8x32xf32, #tpu.memory_space<vmem>>, vector<1x1x8x32xf32>
    %3 = vector.shape_cast %2 : vector<1x1x8x32xf32> to vector<8x32xf32>
    %4 = vector.shape_cast %1 : vector<8x32xf32> to vector<1x8x32xf32>
    %5 = vector.broadcast %4 : vector<1x8x32xf32> to vector<8x8x32xf32>
    %6 = vector.shape_cast %3 : vector<8x32xf32> to vector<1x8x32xf32>
    %7 = vector.broadcast %6 : vector<1x8x32xf32> to vector<8x8x32xf32>
    %c0_7 = arith.constant 0 : index
    %c0_8 = arith.constant 0 : index
    %c0_9 = arith.constant 0 : index
    %c0_10 = arith.constant 0 : index
    %8 = vector.load %arg4[%c0_7, %c0_8, %c0_9, %c0_10] : memref<1x8x32x4xf32, #tpu.memory_space<vmem>>, vector<1x8x32x4xf32>
    %9 = vector.shape_cast %8 : vector<1x8x32x4xf32> to vector<8x32x4xf32>
    "tpu.trace_start"() <{level = 10 : i32, message = "hle,hed->hld"}> : () -> ()
    %cst = arith.constant dense<0.000000e+00> : vector<8x8x4xf32>
    %10 = tpu.matmul %5, %9, %cst {dimension_numbers = #tpu.dot_dimension_numbers<[2], [1], [1], [2], [0, 0, 0, 1, 1, 2], [0], [0]>} : vector<8x8x32xf32>, vector<8x32x4xf32>, vector<8x8x4xf32> -> vector<8x8x4xf32>
    "tpu.trace_stop"() : () -> ()
    %c0_11 = arith.constant 0 : index
    %c0_12 = arith.constant 0 : index
    %c0_13 = arith.constant 0 : index
    %c0_14 = arith.constant 0 : index
    %11 = vector.load %arg7[%c0_11, %c0_12, %c0_13, %c0_14] : memref<1x8x1x4xf32, #tpu.memory_space<vmem>>, vector<1x8x1x4xf32>
    %12 = vector.shape_cast %11 : vector<1x8x1x4xf32> to vector<8x1x4xf32>
    %13 = vector.broadcast %12 : vector<8x1x4xf32> to vector<8x8x4xf32>
    %14 = arith.addf %10, %13 : vector<8x8x4xf32>
    %c0_15 = arith.constant 0 : index
    %c0_16 = arith.constant 0 : index
    %c0_17 = arith.constant 0 : index
    %c0_18 = arith.constant 0 : index
    %15 = vector.load %arg5[%c0_15, %c0_16, %c0_17, %c0_18] : memref<1x8x32x4xf32, #tpu.memory_space<vmem>>, vector<1x8x32x4xf32>
    %16 = vector.shape_cast %15 : vector<1x8x32x4xf32> to vector<8x32x4xf32>
    "tpu.trace_start"() <{level = 10 : i32, message = "hse,hed->hsd"}> : () -> ()
    %cst_19 = arith.constant dense<0.000000e+00> : vector<8x8x4xf32>
    %17 = tpu.matmul %7, %16, %cst_19 {dimension_numbers = #tpu.dot_dimension_numbers<[2], [1], [1], [2], [0, 0, 0, 1, 1, 2], [0], [0]>} : vector<8x8x32xf32>, vector<8x32x4xf32>, vector<8x8x4xf32> -> vector<8x8x4xf32>
    "tpu.trace_stop"() : () -> ()
    %c0_20 = arith.constant 0 : index
    %c0_21 = arith.constant 0 : index
    %c0_22 = arith.constant 0 : index
    %c0_23 = arith.constant 0 : index
    %18 = vector.load %arg8[%c0_20, %c0_21, %c0_22, %c0_23] : memref<1x8x1x4xf32, #tpu.memory_space<vmem>>, vector<1x8x1x4xf32>
    %19 = vector.shape_cast %18 : vector<1x8x1x4xf32> to vector<8x1x4xf32>
    %20 = vector.broadcast %19 : vector<8x1x4xf32> to vector<8x8x4xf32>
    %21 = arith.addf %17, %20 : vector<8x8x4xf32>
    %c0_24 = arith.constant 0 : index
    %c0_25 = arith.constant 0 : index
    %c0_26 = arith.constant 0 : index
    %c0_27 = arith.constant 0 : index
    %22 = vector.load %arg6[%c0_24, %c0_25, %c0_26, %c0_27] : memref<1x8x32x4xf32, #tpu.memory_space<vmem>>, vector<1x8x32x4xf32>
    %23 = vector.shape_cast %22 : vector<1x8x32x4xf32> to vector<8x32x4xf32>
    "tpu.trace_start"() <{level = 10 : i32, message = "hse,hed->hsd"}> : () -> ()
    %cst_28 = arith.constant dense<0.000000e+00> : vector<8x8x4xf32>
    %24 = tpu.matmul %7, %23, %cst_28 {dimension_numbers = #tpu.dot_dimension_numbers<[2], [1], [1], [2], [0, 0, 0, 1, 1, 2], [0], [0]>} : vector<8x8x32xf32>, vector<8x32x4xf32>, vector<8x8x4xf32> -> vector<8x8x4xf32>
    "tpu.trace_stop"() : () -> ()
    %c0_29 = arith.constant 0 : index
    %c0_30 = arith.constant 0 : index
    %c0_31 = arith.constant 0 : index
    %c0_32 = arith.constant 0 : index
    %25 = vector.load %arg9[%c0_29, %c0_30, %c0_31, %c0_32] : memref<1x8x1x4xf32, #tpu.memory_space<vmem>>, vector<1x8x1x4xf32>
    %26 = vector.shape_cast %25 : vector<1x8x1x4xf32> to vector<8x1x4xf32>
    %27 = vector.broadcast %26 : vector<8x1x4xf32> to vector<8x8x4xf32>
    %28 = arith.addf %24, %27 : vector<8x8x4xf32>
    "tpu.trace_start"() <{level = 10 : i32, message = "hld,hsd->hls"}> : () -> ()
    %cst_33 = arith.constant dense<0.000000e+00> : vector<8x8x8xf32>
    %29 = tpu.matmul %14, %21, %cst_33 {dimension_numbers = #tpu.dot_dimension_numbers<[2], [2], [1], [1], [0, 0, 0, 1, 1, 1], [0], [0]>} : vector<8x8x4xf32>, vector<8x8x4xf32>, vector<8x8x8xf32> -> vector<8x8x8xf32>
    "tpu.trace_stop"() : () -> ()
    %cst_34 = arith.constant 5.000000e-01 : f32
    %30 = vector.broadcast %cst_34 : f32 to vector<8x8x8xf32>
    %31 = arith.mulf %29, %30 : vector<8x8x8xf32>
    %cst_35 = arith.constant dense<0xFF800000> : vector<8x8xf32>
    %32 = vector.multi_reduction <maximumf>, %31, %cst_35 [2] : vector<8x8x8xf32> to vector<8x8xf32>
    %33 = vector.shape_cast %32 : vector<8x8xf32> to vector<8x8x1xf32>
    %34 = vector.broadcast %33 : vector<8x8x1xf32> to vector<8x8x8xf32>
    %35 = arith.subf %31, %34 : vector<8x8x8xf32>
    %36 = math.exp %35 : vector<8x8x8xf32>
    %cst_36 = arith.constant dense<0.000000e+00> : vector<8x8xf32>
    %37 = vector.multi_reduction <add>, %36, %cst_36 [2] : vector<8x8x8xf32> to vector<8x8xf32>
    %38 = vector.shape_cast %37 : vector<8x8xf32> to vector<8x8x1xf32>
    %39 = tpu.reciprocal %38 {approx = true} : vector<8x8x1xf32> -> vector<8x8x1xf32>
    %40 = vector.broadcast %39 : vector<8x8x1xf32> to vector<8x8x8xf32>
    %41 = arith.mulf %36, %40 : vector<8x8x8xf32>
    %cst_37 = arith.constant dense<0.000000e+00> : vector<8x8xf32>
    %42 = vector.multi_reduction <add>, %41, %cst_37 [0] : vector<8x8x8xf32> to vector<8x8xf32>
    %cst_38 = arith.constant 8.000000e+00 : f32
    %43 = vector.broadcast %cst_38 : f32 to vector<8x8xf32>
    %44 = arith.divf %42, %43 : vector<8x8xf32>
    %c0_39 = arith.constant 0 : index
    %c0_40 = arith.constant 0 : index
    %c0_41 = arith.constant 0 : index
    %c0_42 = arith.constant 0 : index
    %45 = vector.load %arg15[%c0_39, %c0_40, %c0_41, %c0_42] : memref<1x1x8x8xf32, #tpu.memory_space<vmem>>, vector<1x1x8x8xf32>
    %46 = vector.shape_cast %45 : vector<1x1x8x8xf32> to vector<8x8xf32>
    %47 = vector.shape_cast %44 : vector<8x8xf32> to vector<1x1x8x8xf32>
    tpu.vector_store %arg15[%c0_39, %c0_40, %c0_41, %c0_42], %47 {strides = array<i32>} : memref<1x1x8x8xf32, #tpu.memory_space<vmem>>, vector<1x1x8x8xf32>,
    "tpu.trace_start"() <{level = 10 : i32, message = "hls,hsd->hld"}> : () -> ()
    %cst_43 = arith.constant dense<0.000000e+00> : vector<8x8x4xf32>
    %48 = tpu.matmul %41, %28, %cst_43 {dimension_numbers = #tpu.dot_dimension_numbers<[2], [1], [1], [2], [0, 0, 0, 1, 1, 2], [0], [0]>} : vector<8x8x8xf32>, vector<8x8x4xf32>, vector<8x8x4xf32> -> vector<8x8x4xf32>
    "tpu.trace_stop"() : () -> ()
    %c0_44 = arith.constant 0 : index
    %c0_45 = arith.constant 0 : index
    %c0_46 = arith.constant 0 : index
    %c0_47 = arith.constant 0 : index
    %49 = vector.load %arg10[%c0_44, %c0_45, %c0_46, %c0_47] : memref<1x8x4x32xf32, #tpu.memory_space<vmem>>, vector<1x8x4x32xf32>
    %50 = vector.shape_cast %49 : vector<1x8x4x32xf32> to vector<8x4x32xf32>
    "tpu.trace_start"() <{level = 10 : i32, message = "hld,hde->hle"}> : () -> ()
    %cst_48 = arith.constant dense<0.000000e+00> : vector<8x8x32xf32>
    %51 = tpu.matmul %48, %50, %cst_48 {dimension_numbers = #tpu.dot_dimension_numbers<[2], [1], [1], [2], [0, 0, 0, 1, 1, 2], [0], [0]>} : vector<8x8x4xf32>, vector<8x4x32xf32>, vector<8x8x32xf32> -> vector<8x8x32xf32>
    "tpu.trace_stop"() : () -> ()
    %cst_49 = arith.constant dense<0.000000e+00> : vector<8x32xf32>
    %52 = vector.multi_reduction <add>, %51, %cst_49 [0] : vector<8x8x32xf32> to vector<8x32xf32>
    %c0_50 = arith.constant 0 : index
    %c0_51 = arith.constant 0 : index
    %c0_52 = arith.constant 0 : index
    %53 = vector.load %arg11[%c0_50, %c0_51, %c0_52] : memref<1x1x32xf32, #tpu.memory_space<vmem>>, vector<1x1x32xf32>
    %54 = vector.shape_cast %53 : vector<1x1x32xf32> to vector<1x32xf32>
    %55 = vector.broadcast %54 : vector<1x32xf32> to vector<8x32xf32>
    %56 = arith.addf %52, %55 : vector<8x32xf32>
    %c0_53 = arith.constant 0 : index
    %c0_54 = arith.constant 0 : index
    %c0_55 = arith.constant 0 : index
    %57 = vector.load %arg12[%c0_53, %c0_54, %c0_55] : memref<1x32x512xf32, #tpu.memory_space<vmem>>, vector<1x32x512xf32>
    %58 = vector.shape_cast %57 : vector<1x32x512xf32> to vector<32x512xf32>
    %cst_56 = arith.constant dense<0.000000e+00> : vector<8x512xf32>
    %59 = tpu.matmul %56, %58, %cst_56 {dimension_numbers = #tpu.dot_dimension_numbers<[1], [0], [0], [1], [0, 0, 1, 1], [], []>} : vector<8x32xf32>, vector<32x512xf32>, vector<8x512xf32> -> vector<8x512xf32>
    %cst_57 = arith.constant 0.000000e+00 : f32
    %60 = vector.broadcast %cst_57 : f32 to vector<8x512xf32>
    %61 = arith.maximumf %59, %60 : vector<8x512xf32>
    %c0_58 = arith.constant 0 : index
    %c0_59 = arith.constant 0 : index
    %c0_60 = arith.constant 0 : index
    %62 = vector.load %arg13[%c0_58, %c0_59, %c0_60] : memref<1x512x32xf32, #tpu.memory_space<vmem>>, vector<1x512x32xf32>
    %63 = vector.shape_cast %62 : vector<1x512x32xf32> to vector<512x32xf32>
    %cst_61 = arith.constant dense<0.000000e+00> : vector<8x32xf32>
    %64 = tpu.matmul %61, %63, %cst_61 {dimension_numbers = #tpu.dot_dimension_numbers<[1], [0], [0], [1], [0, 0, 1, 1], [], []>} : vector<8x512xf32>, vector<512x32xf32>, vector<8x32xf32> -> vector<8x32xf32>
    %65 = arith.addf %64, %56 : vector<8x32xf32>
    %cst_62 = arith.constant dense<0.000000e+00> : vector<8xf32>
    %66 = vector.multi_reduction <add>, %65, %cst_62 [1] : vector<8x32xf32> to vector<8xf32>
    %67 = vector.shape_cast %66 : vector<8xf32> to vector<8x1xf32>
    %cst_63 = arith.constant 3.200000e+01 : f32
    %68 = vector.broadcast %cst_63 : f32 to vector<8x1xf32>
    %69 = arith.divf %67, %68 : vector<8x1xf32>
    %70 = vector.broadcast %69 : vector<8x1xf32> to vector<8x32xf32>
    %71 = arith.subf %65, %70 : vector<8x32xf32>
    %72 = vector.broadcast %69 : vector<8x1xf32> to vector<8x32xf32>
    %73 = arith.subf %65, %72 : vector<8x32xf32>
    %74 = arith.mulf %71, %73 : vector<8x32xf32>
    %cst_64 = arith.constant dense<0.000000e+00> : vector<8xf32>
    %75 = vector.multi_reduction <add>, %74, %cst_64 [1] : vector<8x32xf32> to vector<8xf32>
    %76 = vector.shape_cast %75 : vector<8xf32> to vector<8x1xf32>
    %cst_65 = arith.constant 3.200000e+01 : f32
    %77 = vector.broadcast %cst_65 : f32 to vector<8x1xf32>
    %78 = arith.divf %76, %77 : vector<8x1xf32>
    %79 = vector.broadcast %69 : vector<8x1xf32> to vector<8x32xf32>
    %80 = arith.subf %65, %79 : vector<8x32xf32>
    %cst_66 = arith.constant 9.99999974E-6 : f32
    %81 = vector.broadcast %cst_66 : f32 to vector<8x1xf32>
    %82 = arith.addf %78, %81 : vector<8x1xf32>
    %83 = math.rsqrt %82 : vector<8x1xf32>
    %84 = vector.broadcast %83 : vector<8x1xf32> to vector<8x32xf32>
    %85 = arith.mulf %80, %84 : vector<8x32xf32>
    %c0_67 = arith.constant 0 : index
    %c0_68 = arith.constant 0 : index
    %c0_69 = arith.constant 0 : index
    %c0_70 = arith.constant 0 : index
    %86 = vector.load %arg14[%c0_67, %c0_68, %c0_69, %c0_70] : memref<1x1x8x32xf32, #tpu.memory_space<vmem>>, vector<1x1x8x32xf32>
    %87 = vector.shape_cast %86 : vector<1x1x8x32xf32> to vector<8x32xf32>
    %88 = vector.shape_cast %85 : vector<8x32xf32> to vector<1x1x8x32xf32>
    tpu.vector_store %arg14[%c0_67, %c0_68, %c0_69, %c0_70], %88 {strides = array<i32>} : memref<1x1x8x32xf32, #tpu.memory_space<vmem>>, vector<1x1x8x32xf32>,
    return
  }
  func.func @transform_0(%arg0: i32, %arg1: i32) -> (i32, i32, i32, i32) {
    %c0_i32 = arith.constant 0 : i32
    %c0_i32_0 = arith.constant 0 : i32
    %c0_i32_1 = arith.constant 0 : i32
    return %arg0, %arg1, %c0_i32, %c0_i32_0 : i32, i32, i32, i32
  }
  func.func @transform_1(%arg0: i32, %arg1: i32) -> (i32, i32, i32, i32) {
    %c0_i32 = arith.constant 0 : i32
    %c0_i32_0 = arith.constant 0 : i32
    %c0_i32_1 = arith.constant 0 : i32
    return %arg0, %arg1, %c0_i32, %c0_i32_0 : i32, i32, i32, i32
  }
  func.func @transform_2(%arg0: i32, %arg1: i32) -> (i32, i32, i32, i32) {
    %c0_i32 = arith.constant 0 : i32
    %c0_i32_0 = arith.constant 0 : i32
    %c0_i32_1 = arith.constant 0 : i32
    %c0_i32_2 = arith.constant 0 : i32
    return %arg0, %c0_i32, %c0_i32_0, %c0_i32_1 : i32, i32, i32, i32
  }
  func.func @transform_3(%arg0: i32, %arg1: i32) -> (i32, i32, i32, i32) {
    %c0_i32 = arith.constant 0 : i32
    %c0_i32_0 = arith.constant 0 : i32
    %c0_i32_1 = arith.constant 0 : i32
    %c0_i32_2 = arith.constant 0 : i32
    return %arg0, %c0_i32, %c0_i32_0, %c0_i32_1 : i32, i32, i32, i32
  }
  func.func @transform_4(%arg0: i32, %arg1: i32) -> (i32, i32, i32, i32) {
    %c0_i32 = arith.constant 0 : i32
    %c0_i32_0 = arith.constant 0 : i32
    %c0_i32_1 = arith.constant 0 : i32
    %c0_i32_2 = arith.constant 0 : i32
    return %arg0, %c0_i32, %c0_i32_0, %c0_i32_1 : i32, i32, i32, i32
  }
  func.func @transform_5(%arg0: i32, %arg1: i32) -> (i32, i32, i32, i32) {
    %c0_i32 = arith.constant 0 : i32
    %c0_i32_0 = arith.constant 0 : i32
    %c0_i32_1 = arith.constant 0 : i32
    %c0_i32_2 = arith.constant 0 : i32
    return %arg0, %c0_i32, %c0_i32_0, %c0_i32_1 : i32, i32, i32, i32
  }
  func.func @transform_6(%arg0: i32, %arg1: i32) -> (i32, i32, i32, i32) {
    %c0_i32 = arith.constant 0 : i32
    %c0_i32_0 = arith.constant 0 : i32
    %c0_i32_1 = arith.constant 0 : i32
    %c0_i32_2 = arith.constant 0 : i32
    return %arg0, %c0_i32, %c0_i32_0, %c0_i32_1 : i32, i32, i32, i32
  }
  func.func @transform_7(%arg0: i32, %arg1: i32) -> (i32, i32, i32, i32) {
    %c0_i32 = arith.constant 0 : i32
    %c0_i32_0 = arith.constant 0 : i32
    %c0_i32_1 = arith.constant 0 : i32
    %c0_i32_2 = arith.constant 0 : i32
    return %arg0, %c0_i32, %c0_i32_0, %c0_i32_1 : i32, i32, i32, i32
  }
  func.func @transform_8(%arg0: i32, %arg1: i32) -> (i32, i32, i32, i32) {
    %c0_i32 = arith.constant 0 : i32
    %c0_i32_0 = arith.constant 0 : i32
    %c0_i32_1 = arith.constant 0 : i32
    %c0_i32_2 = arith.constant 0 : i32
    return %arg0, %c0_i32, %c0_i32_0, %c0_i32_1 : i32, i32, i32, i32
  }
  func.func @transform_9(%arg0: i32, %arg1: i32) -> (i32, i32, i32) {
    %c0_i32 = arith.constant 0 : i32
    %c0_i32_0 = arith.constant 0 : i32
    %c0_i32_1 = arith.constant 0 : i32
    return %arg0, %c0_i32, %c0_i32_0 : i32, i32, i32
  }
  func.func @transform_10(%arg0: i32, %arg1: i32) -> (i32, i32, i32) {
    %c0_i32 = arith.constant 0 : i32
    %c0_i32_0 = arith.constant 0 : i32
    %c0_i32_1 = arith.constant 0 : i32
    return %arg0, %c0_i32, %c0_i32_0 : i32, i32, i32
  }
  func.func @transform_11(%arg0: i32, %arg1: i32) -> (i32, i32, i32) {
    %c0_i32 = arith.constant 0 : i32
    %c0_i32_0 = arith.constant 0 : i32
    %c0_i32_1 = arith.constant 0 : i32
    return %arg0, %c0_i32, %c0_i32_0 : i32, i32, i32
  }
  func.func @transform_12(%arg0: i32, %arg1: i32) -> (i32, i32, i32, i32) {
    %c0_i32 = arith.constant 0 : i32
    %c0_i32_0 = arith.constant 0 : i32
    %c0_i32_1 = arith.constant 0 : i32
    return %arg0, %arg1, %c0_i32, %c0_i32_0 : i32, i32, i32, i32
  }
  func.func @transform_13(%arg0: i32, %arg1: i32) -> (i32, i32, i32, i32) {
    %c0_i32 = arith.constant 0 : i32
    %c0_i32_0 = arith.constant 0 : i32
    %c0_i32_1 = arith.constant 0 : i32
    return %arg0, %arg1, %c0_i32, %c0_i32_0 : i32, i32, i32, i32
  }
}

</mosaic_0001>

<llo_original>
// kernel: coattention_encoder_layer.1
$region0: #{coattention_encoder_layer.1}
  #allocation0 [shape = 'u32[]', space=smem, size = 0x4, offset = 0x4, fixed_abs, tag = 'smem constant byte address 0x4 - core index']
  #allocation1 [shape = 'u32[144,128]{1,0:T(1,128)}', space=vmem, size = 0x12000, scoped, tag = 'internal scratch']
  %s0 = inlined_call_operand.vmem [shape: f32[2,2,8,32], index: 0, kind: input, shape index: {}]
  %s1 = inlined_call_operand.vmem [shape: f32[2,2,8,32], index: 1, kind: input, shape index: {}]
  %s2 = inlined_call_operand.vmem [shape: f32[2,8,32,4], index: 2, kind: input, shape index: {}]
  %s3 = inlined_call_operand.vmem [shape: f32[2,8,32,4], index: 3, kind: input, shape index: {}]
  %s4 = inlined_call_operand.vmem [shape: f32[2,8,32,4], index: 4, kind: input, shape index: {}]
  %s5 = inlined_call_operand.vmem [shape: f32[2,8,1,4], index: 5, kind: input, shape index: {}]
  %s6 = inlined_call_operand.vmem [shape: f32[2,8,1,4], index: 6, kind: input, shape index: {}]
  %s7 = inlined_call_operand.vmem [shape: f32[2,8,1,4], index: 7, kind: input, shape index: {}]
  %s8 = inlined_call_operand.vmem [shape: f32[2,8,4,32], index: 8, kind: input, shape index: {}]
  %s9 = inlined_call_operand.vmem [shape: f32[2,1,32], index: 9, kind: input, shape index: {}]
  %s10 = inlined_call_operand.vmem [shape: f32[2,32,512], index: 10, kind: input, shape index: {}]
  %s11 = inlined_call_operand.vmem [shape: f32[2,512,32], index: 11, kind: input, shape index: {}]
  %s12 = inlined_call_operand.vmem [shape: f32[2,2,8,32], index: 12, kind: output, shape index: {0}]
  %s13 = inlined_call_operand.vmem [shape: f32[2,2,8,8], index: 13, kind: output, shape index: {1}]
  %14 = xla_tuple %s12, %s13
  %s15 = sld [smem:[#allocation0]]
  $region89: #{coattention_encoder_layer.1} parent=0
    _
  %s17 = ssub.s32 1, %s15
  %s18 = scalar_select 0, %s17, %s15
  loop: start=0, step=1, limit=6
  $region2: #{coattention_encoder_layer.1} parent=0 // loop_pre_header
    _
  $region3: #{coattention_encoder_layer.1} parent=0 // loop_header
    %s20 = sphi 0, %s24
    %p21 = scmp.ge.s32.totalorder %s20, 6
    %s27 = sphi 0, %s39
    %s28 = sphi 0, %s35
    %s29 = sphi 0, %s27
    %s30 = sphi 0, %s28
    %s31 = sphi 0, %s29
    %s32 = sphi 0, %s30
    %s44 = sphi 0, %s46
    %s47 = sphi 0, %s44
    %s48 = sphi 0, %s47
    %s64 = sphi 0, %s48
    %s72 = sphi 0, %s74
    %s75 = sphi 0, %s72
    %s76 = sphi 0, %s75
    %s92 = sphi 0, %s76
    %s98 = sphi 0, %s100
    %s101 = sphi 0, %s98
    %s102 = sphi 0, %s101
    %s118 = sphi 0, %s102
    %s124 = sphi 0, %s126
    %s127 = sphi 0, %s124
    %s128 = sphi 0, %s127
    %s144 = sphi 0, %s128
    %s150 = sphi 0, %s152
    %s153 = sphi 0, %s150
    %s154 = sphi 0, %s153
    %s170 = sphi 0, %s154
    %s176 = sphi 0, %s178
    %s179 = sphi 0, %s176
    %s180 = sphi 0, %s179
    %s196 = sphi 0, %s180
    %s202 = sphi 0, %s204
    %s205 = sphi 0, %s202
    %s206 = sphi 0, %s205
    %s222 = sphi 0, %s206
    %s228 = sphi 0, %s230
    %s231 = sphi 0, %s228
    %s232 = sphi 0, %s231
    %s248 = sphi 0, %s232
    %s254 = sphi 0, %s256
    %s257 = sphi 0, %s254
    %s258 = sphi 0, %s257
    %s274 = sphi 0, %s258
    %s280 = sphi 0, %s282
    %s283 = sphi 0, %s280
    %s284 = sphi 0, %s283
    %s300 = sphi 0, %s284
    %s306 = sphi 0, %s308
    %s309 = sphi 0, %s306
    %s310 = sphi 0, %s309
    %s326 = sphi 0, %s310
    %s332 = sphi 0, %s334
    %s335 = sphi 0, %s332
    %s336 = sphi 0, %s335
    %s352 = sphi 0, %s336
    %s360 = sphi 0, %s362
    %s363 = sphi 0, %s360
    %s364 = sphi 0, %s363
    %s380 = sphi 0, %s364
    %s388 = sphi 0, %s390
    %s391 = sphi 0, %s388
    %s392 = sphi 0, %s391
    %s408 = sphi 0, %s392
  $region4: #{coattention_encoder_layer.1} parent=0 // loop_header_branch
    %23 = sbr.rel (%p21) target = $region8
  $region5: #{coattention_encoder_layer.1} parent=0 // loop_body
    %s25 = ssub.s32 %s20, 1
    %s26 = ssub.s32 %s20, 2
    %s33 = sadd.s32 1, %s28
    %p34 = scmp.ge.s32.totalorder %s33, 2
    %s35 = scalar_select %p34, 0, %s33
    %s36 = sadd.s32 1, %s27
    %s37 = scalar_select %p34, %s36, %s27
    %p38 = scmp.ge.s32.totalorder %s37, 2
    %s39 = scalar_select %p38, 0, %s37
    %s40 = ssub.s32 %s27, %s39
    %s41 = ssub.s32 %s28, %s35
    %s42 = sor.u32 %s40, %s41
    %p43 = scmp.eq.s32.totalorder %s42, 0
    %s45 = sadd.s32 %s44, 1
    %s46 = scalar_select %p43, %s44, %s45
    %p49 = pneg %p43
    %p50 = scmp.eq.s32.totalorder %s20, 3
    %p51 = por %p49, %p50
    %p52 = scmp.ne.s32.totalorder %s44, %s47
    %p53 = scmp.eq.s32.totalorder %s20, 0
    %p54 = por %p52, %p53
    %p55 = scmp.ne.s32.totalorder %s44, %s47
    %p56 = scmp.eq.s32.totalorder %s25, 3
    %p57 = por %p55, %p56
    %p58 = scmp.ne.s32.totalorder %s47, %s48
    %p59 = scmp.eq.s32.totalorder %s25, 0
    %p60 = por %p58, %p59
    %p61 = scmp.ne.s32.totalorder %s47, %s48
    %p62 = scmp.eq.s32.totalorder %s26, 3
    %p63 = por %p61, %p62
    %p65 = scmp.ne.s32.totalorder %s48, %s64
    %p66 = scmp.eq.s32.totalorder %s26, 0
    %p67 = por %p65, %p66
    %s68 = ssub.s32 %s27, %s39
    %s69 = ssub.s32 %s28, %s35
    %s70 = sor.u32 %s68, %s69
    %p71 = scmp.eq.s32.totalorder %s70, 0
    %s73 = sadd.s32 %s72, 1
    %s74 = scalar_select %p71, %s72, %s73
    %p77 = pneg %p71
    %p78 = scmp.eq.s32.totalorder %s20, 3
    %p79 = por %p77, %p78
    %p80 = scmp.ne.s32.totalorder %s72, %s75
    %p81 = scmp.eq.s32.totalorder %s20, 0
    %p82 = por %p80, %p81
    %p83 = scmp.ne.s32.totalorder %s72, %s75
    %p84 = scmp.eq.s32.totalorder %s25, 3
    %p85 = por %p83, %p84
    %p86 = scmp.ne.s32.totalorder %s75, %s76
    %p87 = scmp.eq.s32.totalorder %s25, 0
    %p88 = por %p86, %p87
    %p89 = scmp.ne.s32.totalorder %s75, %s76
    %p90 = scmp.eq.s32.totalorder %s26, 3
    %p91 = por %p89, %p90
    %p93 = scmp.ne.s32.totalorder %s76, %s92
    %p94 = scmp.eq.s32.totalorder %s26, 0
    %p95 = por %p93, %p94
    %s96 = ssub.s32 %s27, %s39
    %p97 = scmp.eq.s32.totalorder %s96, 0
    %s99 = sadd.s32 %s98, 1
    %s100 = scalar_select %p97, %s98, %s99
    %p103 = pneg %p97
    %p104 = scmp.eq.s32.totalorder %s20, 3
    %p105 = por %p103, %p104
    %p106 = scmp.ne.s32.totalorder %s98, %s101
    %p107 = scmp.eq.s32.totalorder %s20, 0
    %p108 = por %p106, %p107
    %p109 = scmp.ne.s32.totalorder %s98, %s101
    %p110 = scmp.eq.s32.totalorder %s25, 3
    %p111 = por %p109, %p110
    %p112 = scmp.ne.s32.totalorder %s101, %s102
    %p113 = scmp.eq.s32.totalorder %s25, 0
    %p114 = por %p112, %p113
    %p115 = scmp.ne.s32.totalorder %s101, %s102
    %p116 = scmp.eq.s32.totalorder %s26, 3
    %p117 = por %p115, %p116
    %p119 = scmp.ne.s32.totalorder %s102, %s118
    %p120 = scmp.eq.s32.totalorder %s26, 0
    %p121 = por %p119, %p120
    %s122 = ssub.s32 %s27, %s39
    %p123 = scmp.eq.s32.totalorder %s122, 0
    %s125 = sadd.s32 %s124, 1
    %s126 = scalar_select %p123, %s124, %s125
    %p129 = pneg %p123
    %p130 = scmp.eq.s32.totalorder %s20, 3
    %p131 = por %p129, %p130
    %p132 = scmp.ne.s32.totalorder %s124, %s127
    %p133 = scmp.eq.s32.totalorder %s20, 0
    %p134 = por %p132, %p133
    %p135 = scmp.ne.s32.totalorder %s124, %s127
    %p136 = scmp.eq.s32.totalorder %s25, 3
    %p137 = por %p135, %p136
    %p138 = scmp.ne.s32.totalorder %s127, %s128
    %p139 = scmp.eq.s32.totalorder %s25, 0
    %p140 = por %p138, %p139
    %p141 = scmp.ne.s32.totalorder %s127, %s128
    %p142 = scmp.eq.s32.totalorder %s26, 3
    %p143 = por %p141, %p142
    %p145 = scmp.ne.s32.totalorder %s128, %s144
    %p146 = scmp.eq.s32.totalorder %s26, 0
    %p147 = por %p145, %p146
    %s148 = ssub.s32 %s27, %s39
    %p149 = scmp.eq.s32.totalorder %s148, 0
    %s151 = sadd.s32 %s150, 1
    %s152 = scalar_select %p149, %s150, %s151
    %p155 = pneg %p149
    %p156 = scmp.eq.s32.totalorder %s20, 3
    %p157 = por %p155, %p156
    %p158 = scmp.ne.s32.totalorder %s150, %s153
    %p159 = scmp.eq.s32.totalorder %s20, 0
    %p160 = por %p158, %p159
    %p161 = scmp.ne.s32.totalorder %s150, %s153
    %p162 = scmp.eq.s32.totalorder %s25, 3
    %p163 = por %p161, %p162
    %p164 = scmp.ne.s32.totalorder %s153, %s154
    %p165 = scmp.eq.s32.totalorder %s25, 0
    %p166 = por %p164, %p165
    %p167 = scmp.ne.s32.totalorder %s153, %s154
    %p168 = scmp.eq.s32.totalorder %s26, 3
    %p169 = por %p167, %p168
    %p171 = scmp.ne.s32.totalorder %s154, %s170
    %p172 = scmp.eq.s32.totalorder %s26, 0
    %p173 = por %p171, %p172
    %s174 = ssub.s32 %s27, %s39
    %p175 = scmp.eq.s32.totalorder %s174, 0
    %s177 = sadd.s32 %s176, 1
    %s178 = scalar_select %p175, %s176, %s177
    %p181 = pneg %p175
    %p182 = scmp.eq.s32.totalorder %s20, 3
    %p183 = por %p181, %p182
    %p184 = scmp.ne.s32.totalorder %s176, %s179
    %p185 = scmp.eq.s32.totalorder %s20, 0
    %p186 = por %p184, %p185
    %p187 = scmp.ne.s32.totalorder %s176, %s179
    %p188 = scmp.eq.s32.totalorder %s25, 3
    %p189 = por %p187, %p188
    %p190 = scmp.ne.s32.totalorder %s179, %s180
    %p191 = scmp.eq.s32.totalorder %s25, 0
    %p192 = por %p190, %p191
    %p193 = scmp.ne.s32.totalorder %s179, %s180
    %p194 = scmp.eq.s32.totalorder %s26, 3
    %p195 = por %p193, %p194
    %p197 = scmp.ne.s32.totalorder %s180, %s196
    %p198 = scmp.eq.s32.totalorder %s26, 0
    %p199 = por %p197, %p198
    %s200 = ssub.s32 %s27, %s39
    %p201 = scmp.eq.s32.totalorder %s200, 0
    %s203 = sadd.s32 %s202, 1
    %s204 = scalar_select %p201, %s202, %s203
    %p207 = pneg %p201
    %p208 = scmp.eq.s32.totalorder %s20, 3
    %p209 = por %p207, %p208
    %p210 = scmp.ne.s32.totalorder %s202, %s205
    %p211 = scmp.eq.s32.totalorder %s20, 0
    %p212 = por %p210, %p211
    %p213 = scmp.ne.s32.totalorder %s202, %s205
    %p214 = scmp.eq.s32.totalorder %s25, 3
    %p215 = por %p213, %p214
    %p216 = scmp.ne.s32.totalorder %s205, %s206
    %p217 = scmp.eq.s32.totalorder %s25, 0
    %p218 = por %p216, %p217
    %p219 = scmp.ne.s32.totalorder %s205, %s206
    %p220 = scmp.eq.s32.totalorder %s26, 3
    %p221 = por %p219, %p220
    %p223 = scmp.ne.s32.totalorder %s206, %s222
    %p224 = scmp.eq.s32.totalorder %s26, 0
    %p225 = por %p223, %p224
    %s226 = ssub.s32 %s27, %s39
    %p227 = scmp.eq.s32.totalorder %s226, 0
    %s229 = sadd.s32 %s228, 1
    %s230 = scalar_select %p227, %s228, %s229
    %p233 = pneg %p227
    %p234 = scmp.eq.s32.totalorder %s20, 3
    %p235 = por %p233, %p234
    %p236 = scmp.ne.s32.totalorder %s228, %s231
    %p237 = scmp.eq.s32.totalorder %s20, 0
    %p238 = por %p236, %p237
    %p239 = scmp.ne.s32.totalorder %s228, %s231
    %p240 = scmp.eq.s32.totalorder %s25, 3
    %p241 = por %p239, %p240
    %p242 = scmp.ne.s32.totalorder %s231, %s232
    %p243 = scmp.eq.s32.totalorder %s25, 0
    %p244 = por %p242, %p243
    %p245 = scmp.ne.s32.totalorder %s231, %s232
    %p246 = scmp.eq.s32.totalorder %s26, 3
    %p247 = por %p245, %p246
    %p249 = scmp.ne.s32.totalorder %s232, %s248
    %p250 = scmp.eq.s32.totalorder %s26, 0
    %p251 = por %p249, %p250
    %s252 = ssub.s32 %s27, %s39
    %p253 = scmp.eq.s32.totalorder %s252, 0
    %s255 = sadd.s32 %s254, 1
    %s256 = scalar_select %p253, %s254, %s255
    %p259 = pneg %p253
    %p260 = scmp.eq.s32.totalorder %s20, 3
    %p261 = por %p259, %p260
    %p262 = scmp.ne.s32.totalorder %s254, %s257
    %p263 = scmp.eq.s32.totalorder %s20, 0
    %p264 = por %p262, %p263
    %p265 = scmp.ne.s32.totalorder %s254, %s257
    %p266 = scmp.eq.s32.totalorder %s25, 3
    %p267 = por %p265, %p266
    %p268 = scmp.ne.s32.totalorder %s257, %s258
    %p269 = scmp.eq.s32.totalorder %s25, 0
    %p270 = por %p268, %p269
    %p271 = scmp.ne.s32.totalorder %s257, %s258
    %p272 = scmp.eq.s32.totalorder %s26, 3
    %p273 = por %p271, %p272
    %p275 = scmp.ne.s32.totalorder %s258, %s274
    %p276 = scmp.eq.s32.totalorder %s26, 0
    %p277 = por %p275, %p276
    %s278 = ssub.s32 %s27, %s39
    %p279 = scmp.eq.s32.totalorder %s278, 0
    %s281 = sadd.s32 %s280, 1
    %s282 = scalar_select %p279, %s280, %s281
    %p285 = pneg %p279
    %p286 = scmp.eq.s32.totalorder %s20, 3
    %p287 = por %p285, %p286
    %p288 = scmp.ne.s32.totalorder %s280, %s283
    %p289 = scmp.eq.s32.totalorder %s20, 0
    %p290 = por %p288, %p289
    %p291 = scmp.ne.s32.totalorder %s280, %s283
    %p292 = scmp.eq.s32.totalorder %s25, 3
    %p293 = por %p291, %p292
    %p294 = scmp.ne.s32.totalorder %s283, %s284
    %p295 = scmp.eq.s32.totalorder %s25, 0
    %p296 = por %p294, %p295
    %p297 = scmp.ne.s32.totalorder %s283, %s284
    %p298 = scmp.eq.s32.totalorder %s26, 3
    %p299 = por %p297, %p298
    %p301 = scmp.ne.s32.totalorder %s284, %s300
    %p302 = scmp.eq.s32.totalorder %s26, 0
    %p303 = por %p301, %p302
    %s304 = ssub.s32 %s27, %s39
    %p305 = scmp.eq.s32.totalorder %s304, 0
    %s307 = sadd.s32 %s306, 1
    %s308 = scalar_select %p305, %s306, %s307
    %p311 = pneg %p305
    %p312 = scmp.eq.s32.totalorder %s20, 3
    %p313 = por %p311, %p312
    %p314 = scmp.ne.s32.totalorder %s306, %s309
    %p315 = scmp.eq.s32.totalorder %s20, 0
    %p316 = por %p314, %p315
    %p317 = scmp.ne.s32.totalorder %s306, %s309
    %p318 = scmp.eq.s32.totalorder %s25, 3
    %p319 = por %p317, %p318
    %p320 = scmp.ne.s32.totalorder %s309, %s310
    %p321 = scmp.eq.s32.totalorder %s25, 0
    %p322 = por %p320, %p321
    %p323 = scmp.ne.s32.totalorder %s309, %s310
    %p324 = scmp.eq.s32.totalorder %s26, 3
    %p325 = por %p323, %p324
    %p327 = scmp.ne.s32.totalorder %s310, %s326
    %p328 = scmp.eq.s32.totalorder %s26, 0
    %p329 = por %p327, %p328
    %s330 = ssub.s32 %s27, %s39
    %p331 = scmp.eq.s32.totalorder %s330, 0
    %s333 = sadd.s32 %s332, 1
    %s334 = scalar_select %p331, %s332, %s333
    %p337 = pneg %p331
    %p338 = scmp.eq.s32.totalorder %s20, 3
    %p339 = por %p337, %p338
    %p340 = scmp.ne.s32.totalorder %s332, %s335
    %p341 = scmp.eq.s32.totalorder %s20, 0
    %p342 = por %p340, %p341
    %p343 = scmp.ne.s32.totalorder %s332, %s335
    %p344 = scmp.eq.s32.totalorder %s25, 3
    %p345 = por %p343, %p344
    %p346 = scmp.ne.s32.totalorder %s335, %s336
    %p347 = scmp.eq.s32.totalorder %s25, 0
    %p348 = por %p346, %p347
    %p349 = scmp.ne.s32.totalorder %s335, %s336
    %p350 = scmp.eq.s32.totalorder %s26, 3
    %p351 = por %p349, %p350
    %p353 = scmp.ne.s32.totalorder %s336, %s352
    %p354 = scmp.eq.s32.totalorder %s26, 0
    %p355 = por %p353, %p354
    %s356 = ssub.s32 %s27, %s39
    %s357 = ssub.s32 %s28, %s35
    %s358 = sor.u32 %s356, %s357
    %p359 = scmp.eq.s32.totalorder %s358, 0
    %s361 = sadd.s32 %s360, 1
    %s362 = scalar_select %p359, %s360, %s361
    %p365 = pneg %p359
    %p366 = scmp.eq.s32.totalorder %s20, 3
    %p367 = por %p365, %p366
    %p368 = scmp.ne.s32.totalorder %s360, %s363
    %p369 = scmp.eq.s32.totalorder %s20, 0
    %p370 = por %p368, %p369
    %p371 = scmp.ne.s32.totalorder %s360, %s363
    %p372 = scmp.eq.s32.totalorder %s25, 3
    %p373 = por %p371, %p372
    %p374 = scmp.ne.s32.totalorder %s363, %s364
    %p375 = scmp.eq.s32.totalorder %s25, 0
    %p376 = por %p374, %p375
    %p377 = scmp.ne.s32.totalorder %s363, %s364
    %p378 = scmp.eq.s32.totalorder %s26, 3
    %p379 = por %p377, %p378
    %p381 = scmp.ne.s32.totalorder %s364, %s380
    %p382 = scmp.eq.s32.totalorder %s26, 0
    %p383 = por %p381, %p382
    %s384 = ssub.s32 %s27, %s39
    %s385 = ssub.s32 %s28, %s35
    %s386 = sor.u32 %s384, %s385
    %p387 = scmp.eq.s32.totalorder %s386, 0
    %s389 = sadd.s32 %s388, 1
    %s390 = scalar_select %p387, %s388, %s389
    %p393 = pneg %p387
    %p394 = scmp.eq.s32.totalorder %s20, 3
    %p395 = por %p393, %p394
    %p396 = scmp.ne.s32.totalorder %s388, %s391
    %p397 = scmp.eq.s32.totalorder %s20, 0
    %p398 = por %p396, %p397
    %p399 = scmp.ne.s32.totalorder %s388, %s391
    %p400 = scmp.eq.s32.totalorder %s25, 3
    %p401 = por %p399, %p400
    %p402 = scmp.ne.s32.totalorder %s391, %s392
    %p403 = scmp.eq.s32.totalorder %s25, 0
    %p404 = por %p402, %p403
    %p405 = scmp.ne.s32.totalorder %s391, %s392
    %p406 = scmp.eq.s32.totalorder %s26, 3
    %p407 = por %p405, %p406
    %p409 = scmp.ne.s32.totalorder %s392, %s408
    %p410 = scmp.eq.s32.totalorder %s26, 0
    %p411 = por %p409, %p410
    %p412 = scmp.le.s32.totalorder 1, %s20
    %p413 = scmp.lt.s32.totalorder %s20, 5
    %p414 = pnand %p412, %p413
    %p415 = pneg %p414
    // Predicated region
    $region9: #{coattention_encoder_layer.1} parent=5 // pred_check
      _
    $region10: #{coattention_encoder_layer.1} parent=5 // pred_check_branch
      %417 = sbr.rel (%p414) target = $region12
    $region11: #{coattention_encoder_layer.1} parent=5 // pred_region
      %s418 = ssub.s32 %s20, 1
    $region12: #{coattention_encoder_layer.1} parent=5 // pred_fallthru
      _
    %p419 = scmp.lt.s32.totalorder %s20, 4
    // Predicated region
    $region13: #{coattention_encoder_layer.1} parent=5 // pred_check
      %p420 = pneg %p419
    $region14: #{coattention_encoder_layer.1} parent=5 // pred_check_branch
      %422 = sbr.rel (%p420) target = $region16
    $region15: #{coattention_encoder_layer.1} parent=5 // pred_region
      // Predicated region
      $region17: #{coattention_encoder_layer.1} parent=15 // pred_check
        %p423 = pneg %p54
      $region18: #{coattention_encoder_layer.1} parent=15 // pred_check_branch
        %425 = sbr.rel (%p423) target = $region20
      $region19: #{coattention_encoder_layer.1} parent=15 // pred_region
        %p426 = scmp.lt.s32.totalorder %s27, 1
        %s427 = scalar_select %p426, %s27, 1
        %p428 = scmp.lt.s32.totalorder %s28, 1
        %s429 = scalar_select %p428, %s28, 1
        %s430 = smul.addr %s427, 2
        %s431 = sadd.s32 %s429, %s430
        %s432 = smul.addr %s431, 8
        %s433 = scalar_lea.vmem %s0, %s432
      $region20: #{coattention_encoder_layer.1} parent=15 // pred_fallthru
        _
      // Predicated region
      $region21: #{coattention_encoder_layer.1} parent=15 // pred_check
        %p434 = pneg %p82
      $region22: #{coattention_encoder_layer.1} parent=15 // pred_check_branch
        %436 = sbr.rel (%p434) target = $region24
      $region23: #{coattention_encoder_layer.1} parent=15 // pred_region
        %p437 = scmp.lt.s32.totalorder %s27, 1
        %s438 = scalar_select %p437, %s27, 1
        %p439 = scmp.lt.s32.totalorder %s28, 1
        %s440 = scalar_select %p439, %s28, 1
        %s441 = smul.addr %s438, 2
        %s442 = sadd.s32 %s440, %s441
        %s443 = smul.addr %s442, 8
        %s444 = scalar_lea.vmem %s1, %s443
      $region24: #{coattention_encoder_layer.1} parent=15 // pred_fallthru
        _
      // Predicated region
      $region25: #{coattention_encoder_layer.1} parent=15 // pred_check
        %p445 = pneg %p108
      $region26: #{coattention_encoder_layer.1} parent=15 // pred_check_branch
        %447 = sbr.rel (%p445) target = $region28
      $region27: #{coattention_encoder_layer.1} parent=15 // pred_region
        %p448 = scmp.lt.s32.totalorder %s27, 1
        %s449 = scalar_select %p448, %s27, 1
        %s450 = smul.addr %s449, 32
        %s451 = smul.addr %s450, 8
        %s452 = scalar_lea.vmem %s2, %s451
      $region28: #{coattention_encoder_layer.1} parent=15 // pred_fallthru
        _
      // Predicated region
      $region29: #{coattention_encoder_layer.1} parent=15 // pred_check
        %p453 = pneg %p134
      $region30: #{coattention_encoder_layer.1} parent=15 // pred_check_branch
        %455 = sbr.rel (%p453) target = $region32
      $region31: #{coattention_encoder_layer.1} parent=15 // pred_region
        %p456 = scmp.lt.s32.totalorder %s27, 1
        %s457 = scalar_select %p456, %s27, 1
        %s458 = smul.addr %s457, 32
        %s459 = smul.addr %s458, 8
        %s460 = scalar_lea.vmem %s3, %s459
      $region32: #{coattention_encoder_layer.1} parent=15 // pred_fallthru
        _
      // Predicated region
      $region33: #{coattention_encoder_layer.1} parent=15 // pred_check
        %p461 = pneg %p160
      $region34: #{coattention_encoder_layer.1} parent=15 // pred_check_branch
        %463 = sbr.rel (%p461) target = $region36
      $region35: #{coattention_encoder_layer.1} parent=15 // pred_region
        %p464 = scmp.lt.s32.totalorder %s27, 1
        %s465 = scalar_select %p464, %s27, 1
        %s466 = smul.addr %s465, 32
        %s467 = smul.addr %s466, 8
        %s468 = scalar_lea.vmem %s4, %s467
      $region36: #{coattention_encoder_layer.1} parent=15 // pred_fallthru
        _
      // Predicated region
      $region37: #{coattention_encoder_layer.1} parent=15 // pred_check
        %p469 = pneg %p186
      $region38: #{coattention_encoder_layer.1} parent=15 // pred_check_branch
        %471 = sbr.rel (%p469) target = $region40
      $region39: #{coattention_encoder_layer.1} parent=15 // pred_region
        %p472 = scmp.lt.s32.totalorder %s27, 1
        %s473 = scalar_select %p472, %s27, 1
        %s474 = smul.addr %s473, 8
        %s475 = scalar_lea.vmem %s5, %s474
      $region40: #{coattention_encoder_layer.1} parent=15 // pred_fallthru
        _
      // Predicated region
      $region41: #{coattention_encoder_layer.1} parent=15 // pred_check
        %p476 = pneg %p212
      $region42: #{coattention_encoder_layer.1} parent=15 // pred_check_branch
        %478 = sbr.rel (%p476) target = $region44
      $region43: #{coattention_encoder_layer.1} parent=15 // pred_region
        %p479 = scmp.lt.s32.totalorder %s27, 1
        %s480 = scalar_select %p479, %s27, 1
        %s481 = smul.addr %s480, 8
        %s482 = scalar_lea.vmem %s6, %s481
      $region44: #{coattention_encoder_layer.1} parent=15 // pred_fallthru
        _
      // Predicated region
      $region45: #{coattention_encoder_layer.1} parent=15 // pred_check
        %p483 = pneg %p238
      $region46: #{coattention_encoder_layer.1} parent=15 // pred_check_branch
        %485 = sbr.rel (%p483) target = $region48
      $region47: #{coattention_encoder_layer.1} parent=15 // pred_region
        %p486 = scmp.lt.s32.totalorder %s27, 1
        %s487 = scalar_select %p486, %s27, 1
        %s488 = smul.addr %s487, 8
        %s489 = scalar_lea.vmem %s7, %s488
      $region48: #{coattention_encoder_layer.1} parent=15 // pred_fallthru
        _
      // Predicated region
      $region49: #{coattention_encoder_layer.1} parent=15 // pred_check
        %p490 = pneg %p264
      $region50: #{coattention_encoder_layer.1} parent=15 // pred_check_branch
        %492 = sbr.rel (%p490) target = $region52
      $region51: #{coattention_encoder_layer.1} parent=15 // pred_region
        %p493 = scmp.lt.s32.totalorder %s27, 1
        %s494 = scalar_select %p493, %s27, 1
        %s495 = smul.addr %s494, 8
        %s496 = smul.addr %s495, 4
        %s497 = scalar_lea.vmem %s8, %s496
      $region52: #{coattention_encoder_layer.1} parent=15 // pred_fallthru
        _
      // Predicated region
      $region53: #{coattention_encoder_layer.1} parent=15 // pred_check
        %p498 = pneg %p290
      $region54: #{coattention_encoder_layer.1} parent=15 // pred_check_branch
        %500 = sbr.rel (%p498) target = $region56
      $region55: #{coattention_encoder_layer.1} parent=15 // pred_region
        %p501 = scmp.lt.s32.totalorder %s27, 1
        %s502 = scalar_select %p501, %s27, 1
        %s503 = scalar_lea.vmem %s9, %s502
      $region56: #{coattention_encoder_layer.1} parent=15 // pred_fallthru
        _
      // Predicated region
      $region57: #{coattention_encoder_layer.1} parent=15 // pred_check
        %p504 = pneg %p316
      $region58: #{coattention_encoder_layer.1} parent=15 // pred_check_branch
        %506 = sbr.rel (%p504) target = $region60
      $region59: #{coattention_encoder_layer.1} parent=15 // pred_region
        %p507 = scmp.lt.s32.totalorder %s27, 1
        %s508 = scalar_select %p507, %s27, 1
        %s509 = smul.addr %s508, 16
        %s510 = smul.addr %s509, 8
        %s511 = scalar_lea.vmem %s10, %s510
      $region60: #{coattention_encoder_layer.1} parent=15 // pred_fallthru
        _
      // Predicated region
      $region61: #{coattention_encoder_layer.1} parent=15 // pred_check
        %p512 = pneg %p342
      $region62: #{coattention_encoder_layer.1} parent=15 // pred_check_branch
        %514 = sbr.rel (%p512) target = $region64
      $region63: #{coattention_encoder_layer.1} parent=15 // pred_region
        %p515 = scmp.lt.s32.totalorder %s27, 1
        %s516 = scalar_select %p515, %s27, 1
        %s517 = smul.addr %s516, 64
        %s518 = smul.addr %s517, 8
        %s519 = scalar_lea.vmem %s11, %s518
      $region64: #{coattention_encoder_layer.1} parent=15 // pred_fallthru
        _
    $region16: #{coattention_encoder_layer.1} parent=5 // pred_fallthru
      _
    %p520 = scmp.le.s32.totalorder 1, %s20
    %p521 = scmp.lt.s32.totalorder %s20, 5
    %p522 = pnand %p520, %p521
    %p523 = pneg %p522
    // Predicated region
    $region65: #{coattention_encoder_layer.1} parent=5 // pred_check
      _
    $region66: #{coattention_encoder_layer.1} parent=5 // pred_check_branch
      %525 = sbr.rel (%p522) target = $region68
    $region67: #{coattention_encoder_layer.1} parent=5 // pred_region
      %s526 = ssub.s32 %s20, 1
      %p527 = scmp.lt.s32.totalorder %s29, 1
      %s528 = scalar_select %p527, %s29, 1
      %p529 = scmp.lt.s32.totalorder %s30, 1
      %s530 = scalar_select %p529, %s30, 1
      %s531 = smul.addr %s528, 2
      %s532 = sadd.s32 %s530, %s531
      %s533 = smul.addr %s532, 8
      %s534 = scalar_lea.vmem %s0, %s533
      %p535 = pneg %p60
      %p536 = pneg %p57
      %p537 = scmp.lt.s32.totalorder %s29, 1
      %s538 = scalar_select %p537, %s29, 1
      %p539 = scmp.lt.s32.totalorder %s30, 1
      %s540 = scalar_select %p539, %s30, 1
      %s541 = smul.addr %s538, 2
      %s542 = sadd.s32 %s540, %s541
      %s543 = smul.addr %s542, 8
      %s544 = scalar_lea.vmem %s1, %s543
      %p545 = pneg %p88
      %p546 = pneg %p85
      %p547 = scmp.lt.s32.totalorder %s29, 1
      %s548 = scalar_select %p547, %s29, 1
      %s549 = smul.addr %s548, 32
      %s550 = smul.addr %s549, 8
      %s551 = scalar_lea.vmem %s2, %s550
      %p552 = pneg %p114
      %p553 = pneg %p111
      %p554 = scmp.lt.s32.totalorder %s29, 1
      %s555 = scalar_select %p554, %s29, 1
      %s556 = smul.addr %s555, 32
      %s557 = smul.addr %s556, 8
      %s558 = scalar_lea.vmem %s3, %s557
      %p559 = pneg %p140
      %p560 = pneg %p137
      %p561 = scmp.lt.s32.totalorder %s29, 1
      %s562 = scalar_select %p561, %s29, 1
      %s563 = smul.addr %s562, 32
      %s564 = smul.addr %s563, 8
      %s565 = scalar_lea.vmem %s4, %s564
      %p566 = pneg %p166
      %p567 = pneg %p163
      %p568 = scmp.lt.s32.totalorder %s29, 1
      %s569 = scalar_select %p568, %s29, 1
      %s570 = smul.addr %s569, 8
      %s571 = scalar_lea.vmem %s5, %s570
      %p572 = pneg %p192
      %p573 = pneg %p189
      %p574 = scmp.lt.s32.totalorder %s29, 1
      %s575 = scalar_select %p574, %s29, 1
      %s576 = smul.addr %s575, 8
      %s577 = scalar_lea.vmem %s6, %s576
      %p578 = pneg %p218
      %p579 = pneg %p215
      %p580 = scmp.lt.s32.totalorder %s29, 1
      %s581 = scalar_select %p580, %s29, 1
      %s582 = smul.addr %s581, 8
      %s583 = scalar_lea.vmem %s7, %s582
      %p584 = pneg %p244
      %p585 = pneg %p241
      %p586 = scmp.lt.s32.totalorder %s29, 1
      %s587 = scalar_select %p586, %s29, 1
      %s588 = smul.addr %s587, 8
      %s589 = smul.addr %s588, 4
      %s590 = scalar_lea.vmem %s8, %s589
      %p591 = pneg %p270
      %p592 = pneg %p267
      %p593 = scmp.lt.s32.totalorder %s29, 1
      %s594 = scalar_select %p593, %s29, 1
      %s595 = scalar_lea.vmem %s9, %s594
      %p596 = pneg %p296
      %p597 = pneg %p293
      %p598 = scmp.lt.s32.totalorder %s29, 1
      %s599 = scalar_select %p598, %s29, 1
      %s600 = smul.addr %s599, 16
      %s601 = smul.addr %s600, 8
      %s602 = scalar_lea.vmem %s10, %s601
      %p603 = pneg %p322
      %p604 = pneg %p319
      %p605 = scmp.lt.s32.totalorder %s29, 1
      %s606 = scalar_select %p605, %s29, 1
      %s607 = smul.addr %s606, 64
      %s608 = smul.addr %s607, 8
      %s609 = scalar_lea.vmem %s11, %s608
      %p610 = pneg %p348
      %p611 = pneg %p345
      %p612 = pneg %p376
      %p613 = pneg %p373
      %p614 = scmp.lt.s32.totalorder %s29, 1
      %s615 = scalar_select %p614, %s29, 1
      %p616 = scmp.lt.s32.totalorder %s30, 1
      %s617 = scalar_select %p616, %s30, 1
      %s618 = smul.addr %s615, 2
      %s619 = sadd.s32 %s617, %s618
      %s620 = smul.addr %s619, 8
      %s621 = scalar_lea.vmem %s12, %s620
      %p622 = pneg %p404
      %p623 = pneg %p401
      %p624 = scmp.lt.s32.totalorder %s29, 1
      %s625 = scalar_select %p624, %s29, 1
      %p626 = scmp.lt.s32.totalorder %s30, 1
      %s627 = scalar_select %p626, %s30, 1
      %s628 = smul.addr %s625, 2
      %s629 = sadd.s32 %s627, %s628
      %s630 = smul.addr %s629, 8
      %s631 = scalar_lea.vmem %s13, %s630
      %p632 = scmp.lt.s32.totalorder %s29, 1
      %s633 = scalar_select %p632, %s29, 1
      %p634 = scmp.lt.s32.totalorder %s30, 1
      %s635 = scalar_select %p634, %s30, 1
      %s636 = smul.addr %s633, 2
      %s637 = sadd.s32 %s635, %s636
      %s638 = smul.addr %s637, 8
      %s639 = scalar_lea.vmem %s0, %s638
      %p640 = scmp.lt.s32.totalorder %s29, 1
      %s641 = scalar_select %p640, %s29, 1
      %p642 = scmp.lt.s32.totalorder %s30, 1
      %s643 = scalar_select %p642, %s30, 1
      %s644 = smul.addr %s641, 2
      %s645 = sadd.s32 %s643, %s644
      %s646 = smul.addr %s645, 8
      %s647 = scalar_lea.vmem %s1, %s646
      %p648 = scmp.lt.s32.totalorder %s29, 1
      %s649 = scalar_select %p648, %s29, 1
      %s650 = smul.addr %s649, 32
      %s651 = smul.addr %s650, 8
      %s652 = scalar_lea.vmem %s2, %s651
      %p653 = scmp.lt.s32.totalorder %s29, 1
      %s654 = scalar_select %p653, %s29, 1
      %s655 = smul.addr %s654, 32
      %s656 = smul.addr %s655, 8
      %s657 = scalar_lea.vmem %s3, %s656
      %p658 = scmp.lt.s32.totalorder %s29, 1
      %s659 = scalar_select %p658, %s29, 1
      %s660 = smul.addr %s659, 32
      %s661 = smul.addr %s660, 8
      %s662 = scalar_lea.vmem %s4, %s661
      %p663 = scmp.lt.s32.totalorder %s29, 1
      %s664 = scalar_select %p663, %s29, 1
      %s665 = smul.addr %s664, 8
      %s666 = scalar_lea.vmem %s5, %s665
      %p667 = scmp.lt.s32.totalorder %s29, 1
      %s668 = scalar_select %p667, %s29, 1
      %s669 = smul.addr %s668, 8
      %s670 = scalar_lea.vmem %s6, %s669
      %p671 = scmp.lt.s32.totalorder %s29, 1
      %s672 = scalar_select %p671, %s29, 1
      %s673 = smul.addr %s672, 8
      %s674 = scalar_lea.vmem %s7, %s673
      %p675 = scmp.lt.s32.totalorder %s29, 1
      %s676 = scalar_select %p675, %s29, 1
      %s677 = smul.addr %s676, 8
      %s678 = smul.addr %s677, 4
      %s679 = scalar_lea.vmem %s8, %s678
      %p680 = scmp.lt.s32.totalorder %s29, 1
      %s681 = scalar_select %p680, %s29, 1
      %s682 = scalar_lea.vmem %s9, %s681
      %p683 = scmp.lt.s32.totalorder %s29, 1
      %s684 = scalar_select %p683, %s29, 1
      %s685 = smul.addr %s684, 16
      %s686 = smul.addr %s685, 8
      %s687 = scalar_lea.vmem %s10, %s686
      %p688 = scmp.lt.s32.totalorder %s29, 1
      %s689 = scalar_select %p688, %s29, 1
      %s690 = smul.addr %s689, 64
      %s691 = smul.addr %s690, 8
      %s692 = scalar_lea.vmem %s11, %s691
      %p693 = scmp.lt.s32.totalorder %s29, 1
      %s694 = scalar_select %p693, %s29, 1
      %p695 = scmp.lt.s32.totalorder %s30, 1
      %s696 = scalar_select %p695, %s30, 1
      %s697 = smul.addr %s694, 2
      %s698 = sadd.s32 %s696, %s697
      %s699 = smul.addr %s698, 8
      %s700 = scalar_lea.vmem %s12, %s699
      %p701 = scmp.lt.s32.totalorder %s29, 1
      %s702 = scalar_select %p701, %s29, 1
      %p703 = scmp.lt.s32.totalorder %s30, 1
      %s704 = scalar_select %p703, %s30, 1
      %s705 = smul.addr %s702, 2
      %s706 = sadd.s32 %s704, %s705
      %s707 = smul.addr %s706, 8
      %s708 = scalar_lea.vmem %s13, %s707
      %v709 = vld [vmem:[%s639] sm:$0xff]
      %v710 = vld [vmem:[%s647] sm:$0xff]
      %v711 = vld [vmem:[%s652] sm:$0xff]
      %v712 = vld [vmem:[%s652 + $0x8] sm:$0xff]
      %v713 = vld [vmem:[%s652 + $0x10] sm:$0xff]
      %v714 = vld [vmem:[%s652 + $0x18] sm:$0xff]
      %v715 = vld [vmem:[%s652 + $0x20] sm:$0xff]
      %v716 = vld [vmem:[%s652 + $0x28] sm:$0xff]
      %v717 = vld [vmem:[%s652 + $0x30] sm:$0xff]
      %v718 = vld [vmem:[%s652 + $0x38] sm:$0xff]
      %v719 = vld [vmem:[%s652 + $0x40] sm:$0xff]
      %v720 = vld [vmem:[%s652 + $0x48] sm:$0xff]
      %v721 = vld [vmem:[%s652 + $0x50] sm:$0xff]
      %v722 = vld [vmem:[%s652 + $0x58] sm:$0xff]
      %v723 = vld [vmem:[%s652 + $0x60] sm:$0xff]
      %v724 = vld [vmem:[%s652 + $0x68] sm:$0xff]
      %v725 = vld [vmem:[%s652 + $0x70] sm:$0xff]
      %v726 = vld [vmem:[%s652 + $0x78] sm:$0xff]
      %v727 = vld [vmem:[%s652 + $0x80] sm:$0xff]
      %v728 = vld [vmem:[%s652 + $0x88] sm:$0xff]
      %v729 = vld [vmem:[%s652 + $0x90] sm:$0xff]
      %v730 = vld [vmem:[%s652 + $0x98] sm:$0xff]
      %v731 = vld [vmem:[%s652 + $0xa0] sm:$0xff]
      %v732 = vld [vmem:[%s652 + $0xa8] sm:$0xff]
      %v733 = vld [vmem:[%s652 + $0xb0] sm:$0xff]
      %v734 = vld [vmem:[%s652 + $0xb8] sm:$0xff]
      %v735 = vld [vmem:[%s652 + $0xc0] sm:$0xff]
      %v736 = vld [vmem:[%s652 + $0xc8] sm:$0xff]
      %v737 = vld [vmem:[%s652 + $0xd0] sm:$0xff]
      %v738 = vld [vmem:[%s652 + $0xd8] sm:$0xff]
      %v739 = vld [vmem:[%s652 + $0xe0] sm:$0xff]
      %v740 = vld [vmem:[%s652 + $0xe8] sm:$0xff]
      %v741 = vld [vmem:[%s652 + $0xf0] sm:$0xff]
      %v742 = vld [vmem:[%s652 + $0xf8] sm:$0xff]
      %v743 = vld [vmem:[%s666] sm:$0x1]
      %v744 = vld [vmem:[%s666 + $0x1] sm:$0x1]
      %v745 = vld [vmem:[%s666 + $0x2] sm:$0x1]
      %v746 = vld [vmem:[%s666 + $0x3] sm:$0x1]
      %v747 = vld [vmem:[%s666 + $0x4] sm:$0x1]
      %v748 = vld [vmem:[%s666 + $0x5] sm:$0x1]
      %v749 = vld [vmem:[%s666 + $0x6] sm:$0x1]
      %v750 = vld [vmem:[%s666 + $0x7] sm:$0x1]
      %v759 = vlaneseq
      %v760 = vshrl.u32 %v759, 7
      %v761 = vsub.s32 0, %v760
      %v762 = vrot.slane %v743, %v761
      %v763 = vlaneseq
      %v764 = vshrl.u32 %v763, 7
      %v765 = vsub.s32 0, %v764
      %v766 = vrot.slane %v744, %v765
      %v767 = vlaneseq
      %v768 = vshrl.u32 %v767, 7
      %v769 = vsub.s32 0, %v768
      %v770 = vrot.slane %v745, %v769
      %v771 = vlaneseq
      %v772 = vshrl.u32 %v771, 7
      %v773 = vsub.s32 0, %v772
      %v774 = vrot.slane %v746, %v773
      %v775 = vlaneseq
      %v776 = vshrl.u32 %v775, 7
      %v777 = vsub.s32 0, %v776
      %v778 = vrot.slane %v747, %v777
      %v779 = vlaneseq
      %v780 = vshrl.u32 %v779, 7
      %v781 = vsub.s32 0, %v780
      %v782 = vrot.slane %v748, %v781
      %v783 = vlaneseq
      %v784 = vshrl.u32 %v783, 7
      %v785 = vsub.s32 0, %v784
      %v786 = vrot.slane %v749, %v785
      %v787 = vlaneseq
      %v788 = vshrl.u32 %v787, 7
      %v789 = vsub.s32 0, %v788
      %v790 = vrot.slane %v750, %v789
      %vm799 = vcmask 261120
      %v801 = vsel %vm799, %v709, 0
      %803 = vmatprep.subr.mxu0 0.0
      %804 = vmatpush1.msra.mxu0 %v711
      %805 = vmatprep.subr.mxu0 0.0
      %806 = vmatpush1.msra.mxu0 %v712
      %807 = vmatprep.subr.mxu0 0.0
      %808 = vmatpush1.msra.mxu0 %v713
      %809 = vmatprep.subr.mxu0 0.0
      %810 = vmatpush1.msra.mxu0 %v714
      %811 = vmatprep.subr.mxu0 0.0
      %812 = vmatpush1.msra.mxu0 0.0
      %813 = vmatprep.subr.mxu0 0.0
      %814 = vmatpush1.msra.mxu0 0.0
      %815 = vmatprep.subr.mxu0 0.0
      %816 = vmatpush1.msra.mxu0 0.0
      %817 = vmatprep.subr.mxu0 0.0
      %818 = vmatpush1.msra.mxu0 0.0
      %819 = vmatprep.subr.mxu0 0.0
      %820 = vmatpush1.msra.mxu0 0.0
      %821 = vmatprep.subr.mxu0 0.0
      %822 = vmatpush1.msra.mxu0 0.0
      %823 = vmatprep.subr.mxu0 0.0
      %824 = vmatpush1.msra.mxu0 0.0
      %825 = vmatprep.subr.mxu0 0.0
      %826 = vmatpush1.msra.mxu0 0.0
      %827 = vmatprep.subr.mxu0 0.0
      %828 = vmatpush1.msra.mxu0 0.0
      %829 = vmatprep.subr.mxu0 0.0
      %830 = vmatpush1.msra.mxu0 0.0
      %831 = vmatprep.subr.mxu0 0.0
      %832 = vmatpush1.msra.mxu0 0.0
      %833 = vmatprep.subr.mxu0 0.0
      %834 = vmatpush1.msra.mxu0 0.0
      %835 = vmatprep.subr.mxu0 0.0
      %836 = vmatpush1.msra.mxu0 0.0
      %837 = vmatprep.subr.mxu0 0.0
      %838 = vmatpush1.msra.mxu0 0.0
      %839 = vmatprep.subr.mxu0 0.0
      %840 = vmatpush1.msra.mxu0 0.0
      %841 = vmatprep.subr.mxu0 0.0
      %842 = vmatpush1.msra.mxu0 0.0
      %843 = vmatprep.subr.mxu0 0.0
      %844 = vmatpush1.msra.mxu0 0.0
      %845 = vmatprep.subr.mxu0 0.0
      %846 = vmatpush1.msra.mxu0 0.0
      %847 = vmatprep.subr.mxu0 0.0
      %848 = vmatpush1.msra.mxu0 0.0
      %849 = vmatprep.subr.mxu0 0.0
      %850 = vmatpush1.msra.mxu0 0.0
      %851 = vmatprep.subr.mxu0 0.0
      %852 = vmatpush1.msra.mxu0 0.0
      %853 = vmatprep.subr.mxu0 0.0
      %854 = vmatpush1.msra.mxu0 0.0
      %855 = vmatprep.subr.mxu0 0.0
      %856 = vmatpush1.msra.mxu0 0.0
      %857 = vmatprep.subr.mxu0 0.0
      %858 = vmatpush1.msra.mxu0 0.0
      %859 = vmatprep.subr.mxu0 0.0
      %860 = vmatpush1.msra.mxu0 0.0
      %861 = vmatprep.subr.mxu0 0.0
      %862 = vmatpush1.msra.mxu0 0.0
      %863 = vmatprep.subr.mxu0 0.0
      %864 = vmatpush1.msra.mxu0 0.0
      %865 = vmatprep.subr.mxu0 0.0
      %866 = vmatpush1.msra.mxu0 0.0
      %867 = vmatprep.mubr.f32.mxu0 0.0
      %868 = vmatmul.mubr.f32.gmra.mrb[0].mxu0 %v801
      %v869 = vpop.f32.mrb[0].mxu0
      %v870 = vadd.f32 %v762, %v869
      %v871 = vpop.f32.mrb[0].mxu0
      %872 = vdwg.mxu0
      %873 = vmatprep.subr.mxu0 0.0
      %874 = vmatpush1.msra.mxu0 %v715
      %875 = vmatprep.subr.mxu0 0.0
      %876 = vmatpush1.msra.mxu0 %v716
      %877 = vmatprep.subr.mxu0 0.0
      %878 = vmatpush1.msra.mxu0 %v717
      %879 = vmatprep.subr.mxu0 0.0
      %880 = vmatpush1.msra.mxu0 %v718
      %881 = vmatprep.subr.mxu0 0.0
      %882 = vmatpush1.msra.mxu0 0.0
      %883 = vmatprep.subr.mxu0 0.0
      %884 = vmatpush1.msra.mxu0 0.0
      %885 = vmatprep.subr.mxu0 0.0
      %886 = vmatpush1.msra.mxu0 0.0
      %887 = vmatprep.subr.mxu0 0.0
      %888 = vmatpush1.msra.mxu0 0.0
      %889 = vmatprep.subr.mxu0 0.0
      %890 = vmatpush1.msra.mxu0 0.0
      %891 = vmatprep.subr.mxu0 0.0
      %892 = vmatpush1.msra.mxu0 0.0
      %893 = vmatprep.subr.mxu0 0.0
      %894 = vmatpush1.msra.mxu0 0.0
      %895 = vmatprep.subr.mxu0 0.0
      %896 = vmatpush1.msra.mxu0 0.0
      %897 = vmatprep.subr.mxu0 0.0
      %898 = vmatpush1.msra.mxu0 0.0
      %899 = vmatprep.subr.mxu0 0.0
      %900 = vmatpush1.msra.mxu0 0.0
      %901 = vmatprep.subr.mxu0 0.0
      %902 = vmatpush1.msra.mxu0 0.0
      %903 = vmatprep.subr.mxu0 0.0
      %904 = vmatpush1.msra.mxu0 0.0
      %905 = vmatprep.subr.mxu0 0.0
      %906 = vmatpush1.msra.mxu0 0.0
      %907 = vmatprep.subr.mxu0 0.0
      %908 = vmatpush1.msra.mxu0 0.0
      %909 = vmatprep.subr.mxu0 0.0
      %910 = vmatpush1.msra.mxu0 0.0
      %911 = vmatprep.subr.mxu0 0.0
      %912 = vmatpush1.msra.mxu0 0.0
      %913 = vmatprep.subr.mxu0 0.0
      %914 = vmatpush1.msra.mxu0 0.0
      %915 = vmatprep.subr.mxu0 0.0
      %916 = vmatpush1.msra.mxu0 0.0
      %917 = vmatprep.subr.mxu0 0.0
      %918 = vmatpush1.msra.mxu0 0.0
      %919 = vmatprep.subr.mxu0 0.0
      %920 = vmatpush1.msra.mxu0 0.0
      %921 = vmatprep.subr.mxu0 0.0
      %922 = vmatpush1.msra.mxu0 0.0
      %923 = vmatprep.subr.mxu0 0.0
      %924 = vmatpush1.msra.mxu0 0.0
      %925 = vmatprep.subr.mxu0 0.0
      %926 = vmatpush1.msra.mxu0 0.0
      %927 = vmatprep.subr.mxu0 0.0
      %928 = vmatpush1.msra.mxu0 0.0
      %929 = vmatprep.subr.mxu0 0.0
      %930 = vmatpush1.msra.mxu0 0.0
      %931 = vmatprep.subr.mxu0 0.0
      %932 = vmatpush1.msra.mxu0 0.0
      %933 = vmatprep.subr.mxu0 0.0
      %934 = vmatpush1.msra.mxu0 0.0
      %935 = vmatprep.subr.mxu0 0.0
      %936 = vmatpush1.msra.mxu0 0.0
      %937 = vmatprep.mubr.f32.mxu0 0.0
      %938 = vmatmul.mubr.f32.gmra.mrb[0].mxu0 %v801
      %v939 = vpop.f32.mrb[0].mxu0
      %v940 = vadd.f32 %v766, %v939
      %v941 = vpop.f32.mrb[0].mxu0
      %942 = vdwg.mxu0
      %943 = vmatprep.subr.mxu0 0.0
      %944 = vmatpush1.msra.mxu0 %v719
      %945 = vmatprep.subr.mxu0 0.0
      %946 = vmatpush1.msra.mxu0 %v720
      %947 = vmatprep.subr.mxu0 0.0
      %948 = vmatpush1.msra.mxu0 %v721
      %949 = vmatprep.subr.mxu0 0.0
      %950 = vmatpush1.msra.mxu0 %v722
      %951 = vmatprep.subr.mxu0 0.0
      %952 = vmatpush1.msra.mxu0 0.0
      %953 = vmatprep.subr.mxu0 0.0
      %954 = vmatpush1.msra.mxu0 0.0
      %955 = vmatprep.subr.mxu0 0.0
      %956 = vmatpush1.msra.mxu0 0.0
      %957 = vmatprep.subr.mxu0 0.0
      %958 = vmatpush1.msra.mxu0 0.0
      %959 = vmatprep.subr.mxu0 0.0
      %960 = vmatpush1.msra.mxu0 0.0
      %961 = vmatprep.subr.mxu0 0.0
      %962 = vmatpush1.msra.mxu0 0.0
      %963 = vmatprep.subr.mxu0 0.0
      %964 = vmatpush1.msra.mxu0 0.0
      %965 = vmatprep.subr.mxu0 0.0
      %966 = vmatpush1.msra.mxu0 0.0
      %967 = vmatprep.subr.mxu0 0.0
      %968 = vmatpush1.msra.mxu0 0.0
      %969 = vmatprep.subr.mxu0 0.0
      %970 = vmatpush1.msra.mxu0 0.0
      %971 = vmatprep.subr.mxu0 0.0
      %972 = vmatpush1.msra.mxu0 0.0
      %973 = vmatprep.subr.mxu0 0.0
      %974 = vmatpush1.msra.mxu0 0.0
      %975 = vmatprep.subr.mxu0 0.0
      %976 = vmatpush1.msra.mxu0 0.0
      %977 = vmatprep.subr.mxu0 0.0
      %978 = vmatpush1.msra.mxu0 0.0
      %979 = vmatprep.subr.mxu0 0.0
      %980 = vmatpush1.msra.mxu0 0.0
      %981 = vmatprep.subr.mxu0 0.0
      %982 = vmatpush1.msra.mxu0 0.0
      %983 = vmatprep.subr.mxu0 0.0
      %984 = vmatpush1.msra.mxu0 0.0
      %985 = vmatprep.subr.mxu0 0.0
      %986 = vmatpush1.msra.mxu0 0.0
      %987 = vmatprep.subr.mxu0 0.0
      %988 = vmatpush1.msra.mxu0 0.0
      %989 = vmatprep.subr.mxu0 0.0
      %990 = vmatpush1.msra.mxu0 0.0
      %991 = vmatprep.subr.mxu0 0.0
      %992 = vmatpush1.msra.mxu0 0.0
      %993 = vmatprep.subr.mxu0 0.0
      %994 = vmatpush1.msra.mxu0 0.0
      %995 = vmatprep.subr.mxu0 0.0
      %996 = vmatpush1.msra.mxu0 0.0
      %997 = vmatprep.subr.mxu0 0.0
      %998 = vmatpush1.msra.mxu0 0.0
      %999 = vmatprep.subr.mxu0 0.0
      %1000 = vmatpush1.msra.mxu0 0.0
      %1001 = vmatprep.subr.mxu0 0.0
      %1002 = vmatpush1.msra.mxu0 0.0
      %1003 = vmatprep.subr.mxu0 0.0
      %1004 = vmatpush1.msra.mxu0 0.0
      %1005 = vmatprep.subr.mxu0 0.0
      %1006 = vmatpush1.msra.mxu0 0.0
      %1007 = vmatprep.mubr.f32.mxu0 0.0
      %1008 = vmatmul.mubr.f32.gmra.mrb[0].mxu0 %v801
      %v1009 = vpop.f32.mrb[0].mxu0
      %v1010 = vadd.f32 %v770, %v1009
      %v1011 = vpop.f32.mrb[0].mxu0
      %1012 = vdwg.mxu0
      %1013 = vmatprep.subr.mxu0 0.0
      %1014 = vmatpush1.msra.mxu0 %v723
      %1015 = vmatprep.subr.mxu0 0.0
      %1016 = vmatpush1.msra.mxu0 %v724
      %1017 = vmatprep.subr.mxu0 0.0
      %1018 = vmatpush1.msra.mxu0 %v725
      %1019 = vmatprep.subr.mxu0 0.0
      %1020 = vmatpush1.msra.mxu0 %v726
      %1021 = vmatprep.subr.mxu0 0.0
      %1022 = vmatpush1.msra.mxu0 0.0
      %1023 = vmatprep.subr.mxu0 0.0
      %1024 = vmatpush1.msra.mxu0 0.0
      %1025 = vmatprep.subr.mxu0 0.0
      %1026 = vmatpush1.msra.mxu0 0.0
      %1027 = vmatprep.subr.mxu0 0.0
      %1028 = vmatpush1.msra.mxu0 0.0
      %1029 = vmatprep.subr.mxu0 0.0
      %1030 = vmatpush1.msra.mxu0 0.0
      %1031 = vmatprep.subr.mxu0 0.0
      %1032 = vmatpush1.msra.mxu0 0.0
      %1033 = vmatprep.subr.mxu0 0.0
      %1034 = vmatpush1.msra.mxu0 0.0
      %1035 = vmatprep.subr.mxu0 0.0
      %1036 = vmatpush1.msra.mxu0 0.0
      %1037 = vmatprep.subr.mxu0 0.0
      %1038 = vmatpush1.msra.mxu0 0.0
      %1039 = vmatprep.subr.mxu0 0.0
      %1040 = vmatpush1.msra.mxu0 0.0
      %1041 = vmatprep.subr.mxu0 0.0
      %1042 = vmatpush1.msra.mxu0 0.0
      %1043 = vmatprep.subr.mxu0 0.0
      %1044 = vmatpush1.msra.mxu0 0.0
      %1045 = vmatprep.subr.mxu0 0.0
      %1046 = vmatpush1.msra.mxu0 0.0
      %1047 = vmatprep.subr.mxu0 0.0
      %1048 = vmatpush1.msra.mxu0 0.0
      %1049 = vmatprep.subr.mxu0 0.0
      %1050 = vmatpush1.msra.mxu0 0.0
      %1051 = vmatprep.subr.mxu0 0.0
      %1052 = vmatpush1.msra.mxu0 0.0
      %1053 = vmatprep.subr.mxu0 0.0
      %1054 = vmatpush1.msra.mxu0 0.0
      %1055 = vmatprep.subr.mxu0 0.0
      %1056 = vmatpush1.msra.mxu0 0.0
      %1057 = vmatprep.subr.mxu0 0.0
      %1058 = vmatpush1.msra.mxu0 0.0
      %1059 = vmatprep.subr.mxu0 0.0
      %1060 = vmatpush1.msra.mxu0 0.0
      %1061 = vmatprep.subr.mxu0 0.0
      %1062 = vmatpush1.msra.mxu0 0.0
      %1063 = vmatprep.subr.mxu0 0.0
      %1064 = vmatpush1.msra.mxu0 0.0
      %1065 = vmatprep.subr.mxu0 0.0
      %1066 = vmatpush1.msra.mxu0 0.0
      %1067 = vmatprep.subr.mxu0 0.0
      %1068 = vmatpush1.msra.mxu0 0.0
      %1069 = vmatprep.subr.mxu0 0.0
      %1070 = vmatpush1.msra.mxu0 0.0
      %1071 = vmatprep.subr.mxu0 0.0
      %1072 = vmatpush1.msra.mxu0 0.0
      %1073 = vmatprep.subr.mxu0 0.0
      %1074 = vmatpush1.msra.mxu0 0.0
      %1075 = vmatprep.subr.mxu0 0.0
      %1076 = vmatpush1.msra.mxu0 0.0
      %1077 = vmatprep.mubr.f32.mxu0 0.0
      %1078 = vmatmul.mubr.f32.gmra.mrb[0].mxu0 %v801
      %v1079 = vpop.f32.mrb[0].mxu0
      %v1080 = vadd.f32 %v774, %v1079
      %v1081 = vpop.f32.mrb[0].mxu0
      %1082 = vdwg.mxu0
      %1083 = vmatprep.subr.mxu0 0.0
      %1084 = vmatpush1.msra.mxu0 %v727
      %1085 = vmatprep.subr.mxu0 0.0
      %1086 = vmatpush1.msra.mxu0 %v728
      %1087 = vmatprep.subr.mxu0 0.0
      %1088 = vmatpush1.msra.mxu0 %v729
      %1089 = vmatprep.subr.mxu0 0.0
      %1090 = vmatpush1.msra.mxu0 %v730
      %1091 = vmatprep.subr.mxu0 0.0
      %1092 = vmatpush1.msra.mxu0 0.0
      %1093 = vmatprep.subr.mxu0 0.0
      %1094 = vmatpush1.msra.mxu0 0.0
      %1095 = vmatprep.subr.mxu0 0.0
      %1096 = vmatpush1.msra.mxu0 0.0
      %1097 = vmatprep.subr.mxu0 0.0
      %1098 = vmatpush1.msra.mxu0 0.0
      %1099 = vmatprep.subr.mxu0 0.0
      %1100 = vmatpush1.msra.mxu0 0.0
      %1101 = vmatprep.subr.mxu0 0.0
      %1102 = vmatpush1.msra.mxu0 0.0
      %1103 = vmatprep.subr.mxu0 0.0
      %1104 = vmatpush1.msra.mxu0 0.0
      %1105 = vmatprep.subr.mxu0 0.0
      %1106 = vmatpush1.msra.mxu0 0.0
      %1107 = vmatprep.subr.mxu0 0.0
      %1108 = vmatpush1.msra.mxu0 0.0
      %1109 = vmatprep.subr.mxu0 0.0
      %1110 = vmatpush1.msra.mxu0 0.0
      %1111 = vmatprep.subr.mxu0 0.0
      %1112 = vmatpush1.msra.mxu0 0.0
      %1113 = vmatprep.subr.mxu0 0.0
      %1114 = vmatpush1.msra.mxu0 0.0
      %1115 = vmatprep.subr.mxu0 0.0
      %1116 = vmatpush1.msra.mxu0 0.0
      %1117 = vmatprep.subr.mxu0 0.0
      %1118 = vmatpush1.msra.mxu0 0.0
      %1119 = vmatprep.subr.mxu0 0.0
      %1120 = vmatpush1.msra.mxu0 0.0
      %1121 = vmatprep.subr.mxu0 0.0
      %1122 = vmatpush1.msra.mxu0 0.0
      %1123 = vmatprep.subr.mxu0 0.0
      %1124 = vmatpush1.msra.mxu0 0.0
      %1125 = vmatprep.subr.mxu0 0.0
      %1126 = vmatpush1.msra.mxu0 0.0
      %1127 = vmatprep.subr.mxu0 0.0
      %1128 = vmatpush1.msra.mxu0 0.0
      %1129 = vmatprep.subr.mxu0 0.0
      %1130 = vmatpush1.msra.mxu0 0.0
      %1131 = vmatprep.subr.mxu0 0.0
      %1132 = vmatpush1.msra.mxu0 0.0
      %1133 = vmatprep.subr.mxu0 0.0
      %1134 = vmatpush1.msra.mxu0 0.0
      %1135 = vmatprep.subr.mxu0 0.0
      %1136 = vmatpush1.msra.mxu0 0.0
      %1137 = vmatprep.subr.mxu0 0.0
      %1138 = vmatpush1.msra.mxu0 0.0
      %1139 = vmatprep.subr.mxu0 0.0
      %1140 = vmatpush1.msra.mxu0 0.0
      %1141 = vmatprep.subr.mxu0 0.0
      %1142 = vmatpush1.msra.mxu0 0.0
      %1143 = vmatprep.subr.mxu0 0.0
      %1144 = vmatpush1.msra.mxu0 0.0
      %1145 = vmatprep.subr.mxu0 0.0
      %1146 = vmatpush1.msra.mxu0 0.0
      %1147 = vmatprep.mubr.f32.mxu0 0.0
      %1148 = vmatmul.mubr.f32.gmra.mrb[0].mxu0 %v801
      %v1149 = vpop.f32.mrb[0].mxu0
      %v1150 = vadd.f32 %v778, %v1149
      %v1151 = vpop.f32.mrb[0].mxu0
      %1152 = vdwg.mxu0
      %1153 = vmatprep.subr.mxu0 0.0
      %1154 = vmatpush1.msra.mxu0 %v731
      %1155 = vmatprep.subr.mxu0 0.0
      %1156 = vmatpush1.msra.mxu0 %v732
      %1157 = vmatprep.subr.mxu0 0.0
      %1158 = vmatpush1.msra.mxu0 %v733
      %1159 = vmatprep.subr.mxu0 0.0
      %1160 = vmatpush1.msra.mxu0 %v734
      %1161 = vmatprep.subr.mxu0 0.0
      %1162 = vmatpush1.msra.mxu0 0.0
      %1163 = vmatprep.subr.mxu0 0.0
      %1164 = vmatpush1.msra.mxu0 0.0
      %1165 = vmatprep.subr.mxu0 0.0
      %1166 = vmatpush1.msra.mxu0 0.0
      %1167 = vmatprep.subr.mxu0 0.0
      %1168 = vmatpush1.msra.mxu0 0.0
      %1169 = vmatprep.subr.mxu0 0.0
      %1170 = vmatpush1.msra.mxu0 0.0
      %1171 = vmatprep.subr.mxu0 0.0
      %1172 = vmatpush1.msra.mxu0 0.0
      %1173 = vmatprep.subr.mxu0 0.0
      %1174 = vmatpush1.msra.mxu0 0.0
      %1175 = vmatprep.subr.mxu0 0.0
      %1176 = vmatpush1.msra.mxu0 0.0
      %1177 = vmatprep.subr.mxu0 0.0
      %1178 = vmatpush1.msra.mxu0 0.0
      %1179 = vmatprep.subr.mxu0 0.0
      %1180 = vmatpush1.msra.mxu0 0.0
      %1181 = vmatprep.subr.mxu0 0.0
      %1182 = vmatpush1.msra.mxu0 0.0
      %1183 = vmatprep.subr.mxu0 0.0
      %1184 = vmatpush1.msra.mxu0 0.0
      %1185 = vmatprep.subr.mxu0 0.0
      %1186 = vmatpush1.msra.mxu0 0.0
      %1187 = vmatprep.subr.mxu0 0.0
      %1188 = vmatpush1.msra.mxu0 0.0
      %1189 = vmatprep.subr.mxu0 0.0
      %1190 = vmatpush1.msra.mxu0 0.0
      %1191 = vmatprep.subr.mxu0 0.0
      %1192 = vmatpush1.msra.mxu0 0.0
      %1193 = vmatprep.subr.mxu0 0.0
      %1194 = vmatpush1.msra.mxu0 0.0
      %1195 = vmatprep.subr.mxu0 0.0
      %1196 = vmatpush1.msra.mxu0 0.0
      %1197 = vmatprep.subr.mxu0 0.0
      %1198 = vmatpush1.msra.mxu0 0.0
      %1199 = vmatprep.subr.mxu0 0.0
      %1200 = vmatpush1.msra.mxu0 0.0
      %1201 = vmatprep.subr.mxu0 0.0
      %1202 = vmatpush1.msra.mxu0 0.0
      %1203 = vmatprep.subr.mxu0 0.0
      %1204 = vmatpush1.msra.mxu0 0.0
      %1205 = vmatprep.subr.mxu0 0.0
      %1206 = vmatpush1.msra.mxu0 0.0
      %1207 = vmatprep.subr.mxu0 0.0
      %1208 = vmatpush1.msra.mxu0 0.0
      %1209 = vmatprep.subr.mxu0 0.0
      %1210 = vmatpush1.msra.mxu0 0.0
      %1211 = vmatprep.subr.mxu0 0.0
      %1212 = vmatpush1.msra.mxu0 0.0
      %1213 = vmatprep.subr.mxu0 0.0
      %1214 = vmatpush1.msra.mxu0 0.0
      %1215 = vmatprep.subr.mxu0 0.0
      %1216 = vmatpush1.msra.mxu0 0.0
      %1217 = vmatprep.mubr.f32.mxu0 0.0
      %1218 = vmatmul.mubr.f32.gmra.mrb[0].mxu0 %v801
      %v1219 = vpop.f32.mrb[0].mxu0
      %v1220 = vadd.f32 %v782, %v1219
      %v1221 = vpop.f32.mrb[0].mxu0
      %1222 = vdwg.mxu0
      %1223 = vmatprep.subr.mxu0 0.0
      %1224 = vmatpush1.msra.mxu0 %v735
      %1225 = vmatprep.subr.mxu0 0.0
      %1226 = vmatpush1.msra.mxu0 %v736
      %1227 = vmatprep.subr.mxu0 0.0
      %1228 = vmatpush1.msra.mxu0 %v737
      %1229 = vmatprep.subr.mxu0 0.0
      %1230 = vmatpush1.msra.mxu0 %v738
      %1231 = vmatprep.subr.mxu0 0.0
      %1232 = vmatpush1.msra.mxu0 0.0
      %1233 = vmatprep.subr.mxu0 0.0
      %1234 = vmatpush1.msra.mxu0 0.0
      %1235 = vmatprep.subr.mxu0 0.0
      %1236 = vmatpush1.msra.mxu0 0.0
      %1237 = vmatprep.subr.mxu0 0.0
      %1238 = vmatpush1.msra.mxu0 0.0
      %1239 = vmatprep.subr.mxu0 0.0
      %1240 = vmatpush1.msra.mxu0 0.0
      %1241 = vmatprep.subr.mxu0 0.0
      %1242 = vmatpush1.msra.mxu0 0.0
      %1243 = vmatprep.subr.mxu0 0.0
      %1244 = vmatpush1.msra.mxu0 0.0
      %1245 = vmatprep.subr.mxu0 0.0
      %1246 = vmatpush1.msra.mxu0 0.0
      %1247 = vmatprep.subr.mxu0 0.0
      %1248 = vmatpush1.msra.mxu0 0.0
      %1249 = vmatprep.subr.mxu0 0.0
      %1250 = vmatpush1.msra.mxu0 0.0
      %1251 = vmatprep.subr.mxu0 0.0
      %1252 = vmatpush1.msra.mxu0 0.0
      %1253 = vmatprep.subr.mxu0 0.0
      %1254 = vmatpush1.msra.mxu0 0.0
      %1255 = vmatprep.subr.mxu0 0.0
      %1256 = vmatpush1.msra.mxu0 0.0
      %1257 = vmatprep.subr.mxu0 0.0
      %1258 = vmatpush1.msra.mxu0 0.0
      %1259 = vmatprep.subr.mxu0 0.0
      %1260 = vmatpush1.msra.mxu0 0.0
      %1261 = vmatprep.subr.mxu0 0.0
      %1262 = vmatpush1.msra.mxu0 0.0
      %1263 = vmatprep.subr.mxu0 0.0
      %1264 = vmatpush1.msra.mxu0 0.0
      %1265 = vmatprep.subr.mxu0 0.0
      %1266 = vmatpush1.msra.mxu0 0.0
      %1267 = vmatprep.subr.mxu0 0.0
      %1268 = vmatpush1.msra.mxu0 0.0
      %1269 = vmatprep.subr.mxu0 0.0
      %1270 = vmatpush1.msra.mxu0 0.0
      %1271 = vmatprep.subr.mxu0 0.0
      %1272 = vmatpush1.msra.mxu0 0.0
      %1273 = vmatprep.subr.mxu0 0.0
      %1274 = vmatpush1.msra.mxu0 0.0
      %1275 = vmatprep.subr.mxu0 0.0
      %1276 = vmatpush1.msra.mxu0 0.0
      %1277 = vmatprep.subr.mxu0 0.0
      %1278 = vmatpush1.msra.mxu0 0.0
      %1279 = vmatprep.subr.mxu0 0.0
      %1280 = vmatpush1.msra.mxu0 0.0
      %1281 = vmatprep.subr.mxu0 0.0
      %1282 = vmatpush1.msra.mxu0 0.0
      %1283 = vmatprep.subr.mxu0 0.0
      %1284 = vmatpush1.msra.mxu0 0.0
      %1285 = vmatprep.subr.mxu0 0.0
      %1286 = vmatpush1.msra.mxu0 0.0
      %1287 = vmatprep.mubr.f32.mxu0 0.0
      %1288 = vmatmul.mubr.f32.gmra.mrb[0].mxu0 %v801
      %v1289 = vpop.f32.mrb[0].mxu0
      %v1290 = vadd.f32 %v786, %v1289
      %v1291 = vpop.f32.mrb[0].mxu0
      %1292 = vdwg.mxu0
      %1293 = vmatprep.subr.mxu0 0.0
      %1294 = vmatpush1.msra.mxu0 %v739
      %1295 = vmatprep.subr.mxu0 0.0
      %1296 = vmatpush1.msra.mxu0 %v740
      %1297 = vmatprep.subr.mxu0 0.0
      %1298 = vmatpush1.msra.mxu0 %v741
      %1299 = vmatprep.subr.mxu0 0.0
      %1300 = vmatpush1.msra.mxu0 %v742
      %1301 = vmatprep.subr.mxu0 0.0
      %1302 = vmatpush1.msra.mxu0 0.0
      %1303 = vmatprep.subr.mxu0 0.0
      %1304 = vmatpush1.msra.mxu0 0.0
      %1305 = vmatprep.subr.mxu0 0.0
      %1306 = vmatpush1.msra.mxu0 0.0
      %1307 = vmatprep.subr.mxu0 0.0
      %1308 = vmatpush1.msra.mxu0 0.0
      %1309 = vmatprep.subr.mxu0 0.0
      %1310 = vmatpush1.msra.mxu0 0.0
      %1311 = vmatprep.subr.mxu0 0.0
      %1312 = vmatpush1.msra.mxu0 0.0
      %1313 = vmatprep.subr.mxu0 0.0
      %1314 = vmatpush1.msra.mxu0 0.0
      %1315 = vmatprep.subr.mxu0 0.0
      %1316 = vmatpush1.msra.mxu0 0.0
      %1317 = vmatprep.subr.mxu0 0.0
      %1318 = vmatpush1.msra.mxu0 0.0
      %1319 = vmatprep.subr.mxu0 0.0
      %1320 = vmatpush1.msra.mxu0 0.0
      %1321 = vmatprep.subr.mxu0 0.0
      %1322 = vmatpush1.msra.mxu0 0.0
      %1323 = vmatprep.subr.mxu0 0.0
      %1324 = vmatpush1.msra.mxu0 0.0
      %1325 = vmatprep.subr.mxu0 0.0
      %1326 = vmatpush1.msra.mxu0 0.0
      %1327 = vmatprep.subr.mxu0 0.0
      %1328 = vmatpush1.msra.mxu0 0.0
      %1329 = vmatprep.subr.mxu0 0.0
      %1330 = vmatpush1.msra.mxu0 0.0
      %1331 = vmatprep.subr.mxu0 0.0
      %1332 = vmatpush1.msra.mxu0 0.0
      %1333 = vmatprep.subr.mxu0 0.0
      %1334 = vmatpush1.msra.mxu0 0.0
      %1335 = vmatprep.subr.mxu0 0.0
      %1336 = vmatpush1.msra.mxu0 0.0
      %1337 = vmatprep.subr.mxu0 0.0
      %1338 = vmatpush1.msra.mxu0 0.0
      %1339 = vmatprep.subr.mxu0 0.0
      %1340 = vmatpush1.msra.mxu0 0.0
      %1341 = vmatprep.subr.mxu0 0.0
      %1342 = vmatpush1.msra.mxu0 0.0
      %1343 = vmatprep.subr.mxu0 0.0
      %1344 = vmatpush1.msra.mxu0 0.0
      %1345 = vmatprep.subr.mxu0 0.0
      %1346 = vmatpush1.msra.mxu0 0.0
      %1347 = vmatprep.subr.mxu0 0.0
      %1348 = vmatpush1.msra.mxu0 0.0
      %1349 = vmatprep.subr.mxu0 0.0
      %1350 = vmatpush1.msra.mxu0 0.0
      %1351 = vmatprep.subr.mxu0 0.0
      %1352 = vmatpush1.msra.mxu0 0.0
      %1353 = vmatprep.subr.mxu0 0.0
      %1354 = vmatpush1.msra.mxu0 0.0
      %1355 = vmatprep.subr.mxu0 0.0
      %1356 = vmatpush1.msra.mxu0 0.0
      %1357 = vmatprep.mubr.f32.mxu0 0.0
      %1358 = vmatmul.mubr.f32.gmra.mrb[0].mxu0 %v801
      %v1359 = vpop.f32.mrb[0].mxu0
      %v1360 = vadd.f32 %v790, %v1359
      %v1361 = vpop.f32.mrb[0].mxu0
      %1362 = vdwg.mxu0
      %v1363 = vld [vmem:[%s657] sm:$0xff]
      %v1364 = vld [vmem:[%s657 + $0x8] sm:$0xff]
      %v1365 = vld [vmem:[%s657 + $0x10] sm:$0xff]
      %v1366 = vld [vmem:[%s657 + $0x18] sm:$0xff]
      %v1367 = vld [vmem:[%s657 + $0x20] sm:$0xff]
      %v1368 = vld [vmem:[%s657 + $0x28] sm:$0xff]
      %v1369 = vld [vmem:[%s657 + $0x30] sm:$0xff]
      %v1370 = vld [vmem:[%s657 + $0x38] sm:$0xff]
      %v1371 = vld [vmem:[%s657 + $0x40] sm:$0xff]
      %v1372 = vld [vmem:[%s657 + $0x48] sm:$0xff]
      %v1373 = vld [vmem:[%s657 + $0x50] sm:$0xff]
      %v1374 = vld [vmem:[%s657 + $0x58] sm:$0xff]
      %v1375 = vld [vmem:[%s657 + $0x60] sm:$0xff]
      %v1376 = vld [vmem:[%s657 + $0x68] sm:$0xff]
      %v1377 = vld [vmem:[%s657 + $0x70] sm:$0xff]
      %v1378 = vld [vmem:[%s657 + $0x78] sm:$0xff]
      %v1379 = vld [vmem:[%s657 + $0x80] sm:$0xff]
      %v1380 = vld [vmem:[%s657 + $0x88] sm:$0xff]
      %v1381 = vld [vmem:[%s657 + $0x90] sm:$0xff]
      %v1382 = vld [vmem:[%s657 + $0x98] sm:$0xff]
      %v1383 = vld [vmem:[%s657 + $0xa0] sm:$0xff]
      %v1384 = vld [vmem:[%s657 + $0xa8] sm:$0xff]
      %v1385 = vld [vmem:[%s657 + $0xb0] sm:$0xff]
      %v1386 = vld [vmem:[%s657 + $0xb8] sm:$0xff]
      %v1387 = vld [vmem:[%s657 + $0xc0] sm:$0xff]
      %v1388 = vld [vmem:[%s657 + $0xc8] sm:$0xff]
      %v1389 = vld [vmem:[%s657 + $0xd0] sm:$0xff]
      %v1390 = vld [vmem:[%s657 + $0xd8] sm:$0xff]
      %v1391 = vld [vmem:[%s657 + $0xe0] sm:$0xff]
      %v1392 = vld [vmem:[%s657 + $0xe8] sm:$0xff]
      %v1393 = vld [vmem:[%s657 + $0xf0] sm:$0xff]
      %v1394 = vld [vmem:[%s657 + $0xf8] sm:$0xff]
      %v1395 = vld [vmem:[%s670] sm:$0x1]
      %v1396 = vld [vmem:[%s670 + $0x1] sm:$0x1]
      %v1397 = vld [vmem:[%s670 + $0x2] sm:$0x1]
      %v1398 = vld [vmem:[%s670 + $0x3] sm:$0x1]
      %v1399 = vld [vmem:[%s670 + $0x4] sm:$0x1]
      %v1400 = vld [vmem:[%s670 + $0x5] sm:$0x1]
      %v1401 = vld [vmem:[%s670 + $0x6] sm:$0x1]
      %v1402 = vld [vmem:[%s670 + $0x7] sm:$0x1]
      %v1411 = vlaneseq
      %v1412 = vshrl.u32 %v1411, 7
      %v1413 = vsub.s32 0, %v1412
      %v1414 = vrot.slane %v1395, %v1413
      %v1415 = vlaneseq
      %v1416 = vshrl.u32 %v1415, 7
      %v1417 = vsub.s32 0, %v1416
      %v1418 = vrot.slane %v1396, %v1417
      %v1419 = vlaneseq
      %v1420 = vshrl.u32 %v1419, 7
      %v1421 = vsub.s32 0, %v1420
      %v1422 = vrot.slane %v1397, %v1421
      %v1423 = vlaneseq
      %v1424 = vshrl.u32 %v1423, 7
      %v1425 = vsub.s32 0, %v1424
      %v1426 = vrot.slane %v1398, %v1425
      %v1427 = vlaneseq
      %v1428 = vshrl.u32 %v1427, 7
      %v1429 = vsub.s32 0, %v1428
      %v1430 = vrot.slane %v1399, %v1429
      %v1431 = vlaneseq
      %v1432 = vshrl.u32 %v1431, 7
      %v1433 = vsub.s32 0, %v1432
      %v1434 = vrot.slane %v1400, %v1433
      %v1435 = vlaneseq
      %v1436 = vshrl.u32 %v1435, 7
      %v1437 = vsub.s32 0, %v1436
      %v1438 = vrot.slane %v1401, %v1437
      %v1439 = vlaneseq
      %v1440 = vshrl.u32 %v1439, 7
      %v1441 = vsub.s32 0, %v1440
      %v1442 = vrot.slane %v1402, %v1441
      %v1452 = vsel %vm799, %v710, 0
      %1454 = vmatprep.subr.mxu0 0.0
      %1455 = vmatpush1.msra.mxu0 %v1363
      %1456 = vmatprep.subr.mxu0 0.0
      %1457 = vmatpush1.msra.mxu0 %v1364
      %1458 = vmatprep.subr.mxu0 0.0
      %1459 = vmatpush1.msra.mxu0 %v1365
      %1460 = vmatprep.subr.mxu0 0.0
      %1461 = vmatpush1.msra.mxu0 %v1366
      %1462 = vmatprep.subr.mxu0 0.0
      %1463 = vmatpush1.msra.mxu0 0.0
      %1464 = vmatprep.subr.mxu0 0.0
      %1465 = vmatpush1.msra.mxu0 0.0
      %1466 = vmatprep.subr.mxu0 0.0
      %1467 = vmatpush1.msra.mxu0 0.0
      %1468 = vmatprep.subr.mxu0 0.0
      %1469 = vmatpush1.msra.mxu0 0.0
      %1470 = vmatprep.subr.mxu0 0.0
      %1471 = vmatpush1.msra.mxu0 0.0
      %1472 = vmatprep.subr.mxu0 0.0
      %1473 = vmatpush1.msra.mxu0 0.0
      %1474 = vmatprep.subr.mxu0 0.0
      %1475 = vmatpush1.msra.mxu0 0.0
      %1476 = vmatprep.subr.mxu0 0.0
      %1477 = vmatpush1.msra.mxu0 0.0
      %1478 = vmatprep.subr.mxu0 0.0
      %1479 = vmatpush1.msra.mxu0 0.0
      %1480 = vmatprep.subr.mxu0 0.0
      %1481 = vmatpush1.msra.mxu0 0.0
      %1482 = vmatprep.subr.mxu0 0.0
      %1483 = vmatpush1.msra.mxu0 0.0
      %1484 = vmatprep.subr.mxu0 0.0
      %1485 = vmatpush1.msra.mxu0 0.0
      %1486 = vmatprep.subr.mxu0 0.0
      %1487 = vmatpush1.msra.mxu0 0.0
      %1488 = vmatprep.subr.mxu0 0.0
      %1489 = vmatpush1.msra.mxu0 0.0
      %1490 = vmatprep.subr.mxu0 0.0
      %1491 = vmatpush1.msra.mxu0 0.0
      %1492 = vmatprep.subr.mxu0 0.0
      %1493 = vmatpush1.msra.mxu0 0.0
      %1494 = vmatprep.subr.mxu0 0.0
      %1495 = vmatpush1.msra.mxu0 0.0
      %1496 = vmatprep.subr.mxu0 0.0
      %1497 = vmatpush1.msra.mxu0 0.0
      %1498 = vmatprep.subr.mxu0 0.0
      %1499 = vmatpush1.msra.mxu0 0.0
      %1500 = vmatprep.subr.mxu0 0.0
      %1501 = vmatpush1.msra.mxu0 0.0
      %1502 = vmatprep.subr.mxu0 0.0
      %1503 = vmatpush1.msra.mxu0 0.0
      %1504 = vmatprep.subr.mxu0 0.0
      %1505 = vmatpush1.msra.mxu0 0.0
      %1506 = vmatprep.subr.mxu0 0.0
      %1507 = vmatpush1.msra.mxu0 0.0
      %1508 = vmatprep.subr.mxu0 0.0
      %1509 = vmatpush1.msra.mxu0 0.0
      %1510 = vmatprep.subr.mxu0 0.0
      %1511 = vmatpush1.msra.mxu0 0.0
      %1512 = vmatprep.subr.mxu0 0.0
      %1513 = vmatpush1.msra.mxu0 0.0
      %1514 = vmatprep.subr.mxu0 0.0
      %1515 = vmatpush1.msra.mxu0 0.0
      %1516 = vmatprep.subr.mxu0 0.0
      %1517 = vmatpush1.msra.mxu0 0.0
      %1518 = vmatprep.mubr.f32.mxu0 0.0
      %1519 = vmatmul.mubr.f32.gmra.mrb[0].mxu0 %v1452
      %v1520 = vpop.f32.mrb[0].mxu0
      %v1521 = vadd.f32 %v1414, %v1520
      %v1522 = vpop.f32.mrb[0].mxu0
      %1523 = vdwg.mxu0
      %1524 = vmatprep.subr.mxu0 0.0
      %1525 = vmatpush1.msra.mxu0 %v1367
      %1526 = vmatprep.subr.mxu0 0.0
      %1527 = vmatpush1.msra.mxu0 %v1368
      %1528 = vmatprep.subr.mxu0 0.0
      %1529 = vmatpush1.msra.mxu0 %v1369
      %1530 = vmatprep.subr.mxu0 0.0
      %1531 = vmatpush1.msra.mxu0 %v1370
      %1532 = vmatprep.subr.mxu0 0.0
      %1533 = vmatpush1.msra.mxu0 0.0
      %1534 = vmatprep.subr.mxu0 0.0
      %1535 = vmatpush1.msra.mxu0 0.0
      %1536 = vmatprep.subr.mxu0 0.0
      %1537 = vmatpush1.msra.mxu0 0.0
      %1538 = vmatprep.subr.mxu0 0.0
      %1539 = vmatpush1.msra.mxu0 0.0
      %1540 = vmatprep.subr.mxu0 0.0
      %1541 = vmatpush1.msra.mxu0 0.0
      %1542 = vmatprep.subr.mxu0 0.0
      %1543 = vmatpush1.msra.mxu0 0.0
      %1544 = vmatprep.subr.mxu0 0.0
      %1545 = vmatpush1.msra.mxu0 0.0
      %1546 = vmatprep.subr.mxu0 0.0
      %1547 = vmatpush1.msra.mxu0 0.0
      %1548 = vmatprep.subr.mxu0 0.0
      %1549 = vmatpush1.msra.mxu0 0.0
      %1550 = vmatprep.subr.mxu0 0.0
      %1551 = vmatpush1.msra.mxu0 0.0
      %1552 = vmatprep.subr.mxu0 0.0
      %1553 = vmatpush1.msra.mxu0 0.0
      %1554 = vmatprep.subr.mxu0 0.0
      %1555 = vmatpush1.msra.mxu0 0.0
      %1556 = vmatprep.subr.mxu0 0.0
      %1557 = vmatpush1.msra.mxu0 0.0
      %1558 = vmatprep.subr.mxu0 0.0
      %1559 = vmatpush1.msra.mxu0 0.0
      %1560 = vmatprep.subr.mxu0 0.0
      %1561 = vmatpush1.msra.mxu0 0.0
      %1562 = vmatprep.subr.mxu0 0.0
      %1563 = vmatpush1.msra.mxu0 0.0
      %1564 = vmatprep.subr.mxu0 0.0
      %1565 = vmatpush1.msra.mxu0 0.0
      %1566 = vmatprep.subr.mxu0 0.0
      %1567 = vmatpush1.msra.mxu0 0.0
      %1568 = vmatprep.subr.mxu0 0.0
      %1569 = vmatpush1.msra.mxu0 0.0
      %1570 = vmatprep.subr.mxu0 0.0
      %1571 = vmatpush1.msra.mxu0 0.0
      %1572 = vmatprep.subr.mxu0 0.0
      %1573 = vmatpush1.msra.mxu0 0.0
      %1574 = vmatprep.subr.mxu0 0.0
      %1575 = vmatpush1.msra.mxu0 0.0
      %1576 = vmatprep.subr.mxu0 0.0
      %1577 = vmatpush1.msra.mxu0 0.0
      %1578 = vmatprep.subr.mxu0 0.0
      %1579 = vmatpush1.msra.mxu0 0.0
      %1580 = vmatprep.subr.mxu0 0.0
      %1581 = vmatpush1.msra.mxu0 0.0
      %1582 = vmatprep.subr.mxu0 0.0
      %1583 = vmatpush1.msra.mxu0 0.0
      %1584 = vmatprep.subr.mxu0 0.0
      %1585 = vmatpush1.msra.mxu0 0.0
      %1586 = vmatprep.subr.mxu0 0.0
      %1587 = vmatpush1.msra.mxu0 0.0
      %1588 = vmatprep.mubr.f32.mxu0 0.0
      %1589 = vmatmul.mubr.f32.gmra.mrb[0].mxu0 %v1452
      %v1590 = vpop.f32.mrb[0].mxu0
      %v1591 = vadd.f32 %v1418, %v1590
      %v1592 = vpop.f32.mrb[0].mxu0
      %1593 = vdwg.mxu0
      %1594 = vmatprep.subr.mxu0 0.0
      %1595 = vmatpush1.msra.mxu0 %v1371
      %1596 = vmatprep.subr.mxu0 0.0
      %1597 = vmatpush1.msra.mxu0 %v1372
      %1598 = vmatprep.subr.mxu0 0.0
      %1599 = vmatpush1.msra.mxu0 %v1373
      %1600 = vmatprep.subr.mxu0 0.0
      %1601 = vmatpush1.msra.mxu0 %v1374
      %1602 = vmatprep.subr.mxu0 0.0
      %1603 = vmatpush1.msra.mxu0 0.0
      %1604 = vmatprep.subr.mxu0 0.0
      %1605 = vmatpush1.msra.mxu0 0.0
      %1606 = vmatprep.subr.mxu0 0.0
      %1607 = vmatpush1.msra.mxu0 0.0
      %1608 = vmatprep.subr.mxu0 0.0
      %1609 = vmatpush1.msra.mxu0 0.0
      %1610 = vmatprep.subr.mxu0 0.0
      %1611 = vmatpush1.msra.mxu0 0.0
      %1612 = vmatprep.subr.mxu0 0.0
      %1613 = vmatpush1.msra.mxu0 0.0
      %1614 = vmatprep.subr.mxu0 0.0
      %1615 = vmatpush1.msra.mxu0 0.0
      %1616 = vmatprep.subr.mxu0 0.0
      %1617 = vmatpush1.msra.mxu0 0.0
      %1618 = vmatprep.subr.mxu0 0.0
      %1619 = vmatpush1.msra.mxu0 0.0
      %1620 = vmatprep.subr.mxu0 0.0
      %1621 = vmatpush1.msra.mxu0 0.0
      %1622 = vmatprep.subr.mxu0 0.0
      %1623 = vmatpush1.msra.mxu0 0.0
      %1624 = vmatprep.subr.mxu0 0.0
      %1625 = vmatpush1.msra.mxu0 0.0
      %1626 = vmatprep.subr.mxu0 0.0
      %1627 = vmatpush1.msra.mxu0 0.0
      %1628 = vmatprep.subr.mxu0 0.0
      %1629 = vmatpush1.msra.mxu0 0.0
      %1630 = vmatprep.subr.mxu0 0.0
      %1631 = vmatpush1.msra.mxu0 0.0
      %1632 = vmatprep.subr.mxu0 0.0
      %1633 = vmatpush1.msra.mxu0 0.0
      %1634 = vmatprep.subr.mxu0 0.0
      %1635 = vmatpush1.msra.mxu0 0.0
      %1636 = vmatprep.subr.mxu0 0.0
      %1637 = vmatpush1.msra.mxu0 0.0
      %1638 = vmatprep.subr.mxu0 0.0
      %1639 = vmatpush1.msra.mxu0 0.0
      %1640 = vmatprep.subr.mxu0 0.0
      %1641 = vmatpush1.msra.mxu0 0.0
      %1642 = vmatprep.subr.mxu0 0.0
      %1643 = vmatpush1.msra.mxu0 0.0
      %1644 = vmatprep.subr.mxu0 0.0
      %1645 = vmatpush1.msra.mxu0 0.0
      %1646 = vmatprep.subr.mxu0 0.0
      %1647 = vmatpush1.msra.mxu0 0.0
      %1648 = vmatprep.subr.mxu0 0.0
      %1649 = vmatpush1.msra.mxu0 0.0
      %1650 = vmatprep.subr.mxu0 0.0
      %1651 = vmatpush1.msra.mxu0 0.0
      %1652 = vmatprep.subr.mxu0 0.0
      %1653 = vmatpush1.msra.mxu0 0.0
      %1654 = vmatprep.subr.mxu0 0.0
      %1655 = vmatpush1.msra.mxu0 0.0
      %1656 = vmatprep.subr.mxu0 0.0
      %1657 = vmatpush1.msra.mxu0 0.0
      %1658 = vmatprep.mubr.f32.mxu0 0.0
      %1659 = vmatmul.mubr.f32.gmra.mrb[0].mxu0 %v1452
      %v1660 = vpop.f32.mrb[0].mxu0
      %v1661 = vadd.f32 %v1422, %v1660
      %v1662 = vpop.f32.mrb[0].mxu0
      %1663 = vdwg.mxu0
      %1664 = vmatprep.subr.mxu0 0.0
      %1665 = vmatpush1.msra.mxu0 %v1375
      %1666 = vmatprep.subr.mxu0 0.0
      %1667 = vmatpush1.msra.mxu0 %v1376
      %1668 = vmatprep.subr.mxu0 0.0
      %1669 = vmatpush1.msra.mxu0 %v1377
      %1670 = vmatprep.subr.mxu0 0.0
      %1671 = vmatpush1.msra.mxu0 %v1378
      %1672 = vmatprep.subr.mxu0 0.0
      %1673 = vmatpush1.msra.mxu0 0.0
      %1674 = vmatprep.subr.mxu0 0.0
      %1675 = vmatpush1.msra.mxu0 0.0
      %1676 = vmatprep.subr.mxu0 0.0
      %1677 = vmatpush1.msra.mxu0 0.0
      %1678 = vmatprep.subr.mxu0 0.0
      %1679 = vmatpush1.msra.mxu0 0.0
      %1680 = vmatprep.subr.mxu0 0.0
      %1681 = vmatpush1.msra.mxu0 0.0
      %1682 = vmatprep.subr.mxu0 0.0
      %1683 = vmatpush1.msra.mxu0 0.0
      %1684 = vmatprep.subr.mxu0 0.0
      %1685 = vmatpush1.msra.mxu0 0.0
      %1686 = vmatprep.subr.mxu0 0.0
      %1687 = vmatpush1.msra.mxu0 0.0
      %1688 = vmatprep.subr.mxu0 0.0
      %1689 = vmatpush1.msra.mxu0 0.0
      %1690 = vmatprep.subr.mxu0 0.0
      %1691 = vmatpush1.msra.mxu0 0.0
      %1692 = vmatprep.subr.mxu0 0.0
      %1693 = vmatpush1.msra.mxu0 0.0
      %1694 = vmatprep.subr.mxu0 0.0
      %1695 = vmatpush1.msra.mxu0 0.0
      %1696 = vmatprep.subr.mxu0 0.0
      %1697 = vmatpush1.msra.mxu0 0.0
      %1698 = vmatprep.subr.mxu0 0.0
      %1699 = vmatpush1.msra.mxu0 0.0
      %1700 = vmatprep.subr.mxu0 0.0
      %1701 = vmatpush1.msra.mxu0 0.0
      %1702 = vmatprep.subr.mxu0 0.0
      %1703 = vmatpush1.msra.mxu0 0.0
      %1704 = vmatprep.subr.mxu0 0.0
      %1705 = vmatpush1.msra.mxu0 0.0
      %1706 = vmatprep.subr.mxu0 0.0
      %1707 = vmatpush1.msra.mxu0 0.0
      %1708 = vmatprep.subr.mxu0 0.0
      %1709 = vmatpush1.msra.mxu0 0.0
      %1710 = vmatprep.subr.mxu0 0.0
      %1711 = vmatpush1.msra.mxu0 0.0
      %1712 = vmatprep.subr.mxu0 0.0
      %1713 = vmatpush1.msra.mxu0 0.0
      %1714 = vmatprep.subr.mxu0 0.0
      %1715 = vmatpush1.msra.mxu0 0.0
      %1716 = vmatprep.subr.mxu0 0.0
      %1717 = vmatpush1.msra.mxu0 0.0
      %1718 = vmatprep.subr.mxu0 0.0
      %1719 = vmatpush1.msra.mxu0 0.0
      %1720 = vmatprep.subr.mxu0 0.0
      %1721 = vmatpush1.msra.mxu0 0.0
      %1722 = vmatprep.subr.mxu0 0.0
      %1723 = vmatpush1.msra.mxu0 0.0
      %1724 = vmatprep.subr.mxu0 0.0
      %1725 = vmatpush1.msra.mxu0 0.0
      %1726 = vmatprep.subr.mxu0 0.0
      %1727 = vmatpush1.msra.mxu0 0.0
      %1728 = vmatprep.mubr.f32.mxu0 0.0
      %1729 = vmatmul.mubr.f32.gmra.mrb[0].mxu0 %v1452
      %v1730 = vpop.f32.mrb[0].mxu0
      %v1731 = vadd.f32 %v1426, %v1730
      %v1732 = vpop.f32.mrb[0].mxu0
      %1733 = vdwg.mxu0
      %1734 = vmatprep.subr.mxu0 0.0
      %1735 = vmatpush1.msra.mxu0 %v1379
      %1736 = vmatprep.subr.mxu0 0.0
      %1737 = vmatpush1.msra.mxu0 %v1380
      %1738 = vmatprep.subr.mxu0 0.0
      %1739 = vmatpush1.msra.mxu0 %v1381
      %1740 = vmatprep.subr.mxu0 0.0
      %1741 = vmatpush1.msra.mxu0 %v1382
      %1742 = vmatprep.subr.mxu0 0.0
      %1743 = vmatpush1.msra.mxu0 0.0
      %1744 = vmatprep.subr.mxu0 0.0
      %1745 = vmatpush1.msra.mxu0 0.0
      %1746 = vmatprep.subr.mxu0 0.0
      %1747 = vmatpush1.msra.mxu0 0.0
      %1748 = vmatprep.subr.mxu0 0.0
      %1749 = vmatpush1.msra.mxu0 0.0
      %1750 = vmatprep.subr.mxu0 0.0
      %1751 = vmatpush1.msra.mxu0 0.0
      %1752 = vmatprep.subr.mxu0 0.0
      %1753 = vmatpush1.msra.mxu0 0.0
      %1754 = vmatprep.subr.mxu0 0.0
      %1755 = vmatpush1.msra.mxu0 0.0
      %1756 = vmatprep.subr.mxu0 0.0
      %1757 = vmatpush1.msra.mxu0 0.0
      %1758 = vmatprep.subr.mxu0 0.0
      %1759 = vmatpush1.msra.mxu0 0.0
      %1760 = vmatprep.subr.mxu0 0.0
      %1761 = vmatpush1.msra.mxu0 0.0
      %1762 = vmatprep.subr.mxu0 0.0
      %1763 = vmatpush1.msra.mxu0 0.0
      %1764 = vmatprep.subr.mxu0 0.0
      %1765 = vmatpush1.msra.mxu0 0.0
      %1766 = vmatprep.subr.mxu0 0.0
      %1767 = vmatpush1.msra.mxu0 0.0
      %1768 = vmatprep.subr.mxu0 0.0
      %1769 = vmatpush1.msra.mxu0 0.0
      %1770 = vmatprep.subr.mxu0 0.0
      %1771 = vmatpush1.msra.mxu0 0.0
      %1772 = vmatprep.subr.mxu0 0.0
      %1773 = vmatpush1.msra.mxu0 0.0
      %1774 = vmatprep.subr.mxu0 0.0
      %1775 = vmatpush1.msra.mxu0 0.0
      %1776 = vmatprep.subr.mxu0 0.0
      %1777 = vmatpush1.msra.mxu0 0.0
      %1778 = vmatprep.subr.mxu0 0.0
      %1779 = vmatpush1.msra.mxu0 0.0
      %1780 = vmatprep.subr.mxu0 0.0
      %1781 = vmatpush1.msra.mxu0 0.0
      %1782 = vmatprep.subr.mxu0 0.0
      %1783 = vmatpush1.msra.mxu0 0.0
      %1784 = vmatprep.subr.mxu0 0.0
      %1785 = vmatpush1.msra.mxu0 0.0
      %1786 = vmatprep.subr.mxu0 0.0
      %1787 = vmatpush1.msra.mxu0 0.0
      %1788 = vmatprep.subr.mxu0 0.0
      %1789 = vmatpush1.msra.mxu0 0.0
      %1790 = vmatprep.subr.mxu0 0.0
      %1791 = vmatpush1.msra.mxu0 0.0
      %1792 = vmatprep.subr.mxu0 0.0
      %1793 = vmatpush1.msra.mxu0 0.0
      %1794 = vmatprep.subr.mxu0 0.0
      %1795 = vmatpush1.msra.mxu0 0.0
      %1796 = vmatprep.subr.mxu0 0.0
      %1797 = vmatpush1.msra.mxu0 0.0
      %1798 = vmatprep.mubr.f32.mxu0 0.0
      %1799 = vmatmul.mubr.f32.gmra.mrb[0].mxu0 %v1452
      %v1800 = vpop.f32.mrb[0].mxu0
      %v1801 = vadd.f32 %v1430, %v1800
      %v1802 = vpop.f32.mrb[0].mxu0
      %1803 = vdwg.mxu0
      %1804 = vmatprep.subr.mxu0 0.0
      %1805 = vmatpush1.msra.mxu0 %v1383
      %1806 = vmatprep.subr.mxu0 0.0
      %1807 = vmatpush1.msra.mxu0 %v1384
      %1808 = vmatprep.subr.mxu0 0.0
      %1809 = vmatpush1.msra.mxu0 %v1385
      %1810 = vmatprep.subr.mxu0 0.0
      %1811 = vmatpush1.msra.mxu0 %v1386
      %1812 = vmatprep.subr.mxu0 0.0
      %1813 = vmatpush1.msra.mxu0 0.0
      %1814 = vmatprep.subr.mxu0 0.0
      %1815 = vmatpush1.msra.mxu0 0.0
      %1816 = vmatprep.subr.mxu0 0.0
      %1817 = vmatpush1.msra.mxu0 0.0
      %1818 = vmatprep.subr.mxu0 0.0
      %1819 = vmatpush1.msra.mxu0 0.0
      %1820 = vmatprep.subr.mxu0 0.0
      %1821 = vmatpush1.msra.mxu0 0.0
      %1822 = vmatprep.subr.mxu0 0.0
      %1823 = vmatpush1.msra.mxu0 0.0
      %1824 = vmatprep.subr.mxu0 0.0
      %1825 = vmatpush1.msra.mxu0 0.0
      %1826 = vmatprep.subr.mxu0 0.0
      %1827 = vmatpush1.msra.mxu0 0.0
      %1828 = vmatprep.subr.mxu0 0.0
      %1829 = vmatpush1.msra.mxu0 0.0
      %1830 = vmatprep.subr.mxu0 0.0
      %1831 = vmatpush1.msra.mxu0 0.0
      %1832 = vmatprep.subr.mxu0 0.0
      %1833 = vmatpush1.msra.mxu0 0.0
      %1834 = vmatprep.subr.mxu0 0.0
      %1835 = vmatpush1.msra.mxu0 0.0
      %1836 = vmatprep.subr.mxu0 0.0
      %1837 = vmatpush1.msra.mxu0 0.0
      %1838 = vmatprep.subr.mxu0 0.0
      %1839 = vmatpush1.msra.mxu0 0.0
      %1840 = vmatprep.subr.mxu0 0.0
      %1841 = vmatpush1.msra.mxu0 0.0
      %1842 = vmatprep.subr.mxu0 0.0
      %1843 = vmatpush1.msra.mxu0 0.0
      %1844 = vmatprep.subr.mxu0 0.0
      %1845 = vmatpush1.msra.mxu0 0.0
      %1846 = vmatprep.subr.mxu0 0.0
      %1847 = vmatpush1.msra.mxu0 0.0
      %1848 = vmatprep.subr.mxu0 0.0
      %1849 = vmatpush1.msra.mxu0 0.0
      %1850 = vmatprep.subr.mxu0 0.0
      %1851 = vmatpush1.msra.mxu0 0.0
      %1852 = vmatprep.subr.mxu0 0.0
      %1853 = vmatpush1.msra.mxu0 0.0
      %1854 = vmatprep.subr.mxu0 0.0
      %1855 = vmatpush1.msra.mxu0 0.0
      %1856 = vmatprep.subr.mxu0 0.0
      %1857 = vmatpush1.msra.mxu0 0.0
      %1858 = vmatprep.subr.mxu0 0.0
      %1859 = vmatpush1.msra.mxu0 0.0
      %1860 = vmatprep.subr.mxu0 0.0
      %1861 = vmatpush1.msra.mxu0 0.0
      %1862 = vmatprep.subr.mxu0 0.0
      %1863 = vmatpush1.msra.mxu0 0.0
      %1864 = vmatprep.subr.mxu0 0.0
      %1865 = vmatpush1.msra.mxu0 0.0
      %1866 = vmatprep.subr.mxu0 0.0
      %1867 = vmatpush1.msra.mxu0 0.0
      %1868 = vmatprep.mubr.f32.mxu0 0.0
      %1869 = vmatmul.mubr.f32.gmra.mrb[0].mxu0 %v1452
      %v1870 = vpop.f32.mrb[0].mxu0
      %v1871 = vadd.f32 %v1434, %v1870
      %v1872 = vpop.f32.mrb[0].mxu0
      %1873 = vdwg.mxu0
      %1874 = vmatprep.subr.mxu0 0.0
      %1875 = vmatpush1.msra.mxu0 %v1387
      %1876 = vmatprep.subr.mxu0 0.0
      %1877 = vmatpush1.msra.mxu0 %v1388
      %1878 = vmatprep.subr.mxu0 0.0
      %1879 = vmatpush1.msra.mxu0 %v1389
      %1880 = vmatprep.subr.mxu0 0.0
      %1881 = vmatpush1.msra.mxu0 %v1390
      %1882 = vmatprep.subr.mxu0 0.0
      %1883 = vmatpush1.msra.mxu0 0.0
      %1884 = vmatprep.subr.mxu0 0.0
      %1885 = vmatpush1.msra.mxu0 0.0
      %1886 = vmatprep.subr.mxu0 0.0
      %1887 = vmatpush1.msra.mxu0 0.0
      %1888 = vmatprep.subr.mxu0 0.0
      %1889 = vmatpush1.msra.mxu0 0.0
      %1890 = vmatprep.subr.mxu0 0.0
      %1891 = vmatpush1.msra.mxu0 0.0
      %1892 = vmatprep.subr.mxu0 0.0
      %1893 = vmatpush1.msra.mxu0 0.0
      %1894 = vmatprep.subr.mxu0 0.0
      %1895 = vmatpush1.msra.mxu0 0.0
      %1896 = vmatprep.subr.mxu0 0.0
      %1897 = vmatpush1.msra.mxu0 0.0
      %1898 = vmatprep.subr.mxu0 0.0
      %1899 = vmatpush1.msra.mxu0 0.0
      %1900 = vmatprep.subr.mxu0 0.0
      %1901 = vmatpush1.msra.mxu0 0.0
      %1902 = vmatprep.subr.mxu0 0.0
      %1903 = vmatpush1.msra.mxu0 0.0
      %1904 = vmatprep.subr.mxu0 0.0
      %1905 = vmatpush1.msra.mxu0 0.0
      %1906 = vmatprep.subr.mxu0 0.0
      %1907 = vmatpush1.msra.mxu0 0.0
      %1908 = vmatprep.subr.mxu0 0.0
      %1909 = vmatpush1.msra.mxu0 0.0
      %1910 = vmatprep.subr.mxu0 0.0
      %1911 = vmatpush1.msra.mxu0 0.0
      %1912 = vmatprep.subr.mxu0 0.0
      %1913 = vmatpush1.msra.mxu0 0.0
      %1914 = vmatprep.subr.mxu0 0.0
      %1915 = vmatpush1.msra.mxu0 0.0
      %1916 = vmatprep.subr.mxu0 0.0
      %1917 = vmatpush1.msra.mxu0 0.0
      %1918 = vmatprep.subr.mxu0 0.0
      %1919 = vmatpush1.msra.mxu0 0.0
      %1920 = vmatprep.subr.mxu0 0.0
      %1921 = vmatpush1.msra.mxu0 0.0
      %1922 = vmatprep.subr.mxu0 0.0
      %1923 = vmatpush1.msra.mxu0 0.0
      %1924 = vmatprep.subr.mxu0 0.0
      %1925 = vmatpush1.msra.mxu0 0.0
      %1926 = vmatprep.subr.mxu0 0.0
      %1927 = vmatpush1.msra.mxu0 0.0
      %1928 = vmatprep.subr.mxu0 0.0
      %1929 = vmatpush1.msra.mxu0 0.0
      %1930 = vmatprep.subr.mxu0 0.0
      %1931 = vmatpush1.msra.mxu0 0.0
      %1932 = vmatprep.subr.mxu0 0.0
      %1933 = vmatpush1.msra.mxu0 0.0
      %1934 = vmatprep.subr.mxu0 0.0
      %1935 = vmatpush1.msra.mxu0 0.0
      %1936 = vmatprep.subr.mxu0 0.0
      %1937 = vmatpush1.msra.mxu0 0.0
      %1938 = vmatprep.mubr.f32.mxu0 0.0
      %1939 = vmatmul.mubr.f32.gmra.mrb[0].mxu0 %v1452
      %v1940 = vpop.f32.mrb[0].mxu0
      %v1941 = vadd.f32 %v1438, %v1940
      %v1942 = vpop.f32.mrb[0].mxu0
      %1943 = vdwg.mxu0
      %1944 = vmatprep.subr.mxu0 0.0
      %1945 = vmatpush1.msra.mxu0 %v1391
      %1946 = vmatprep.subr.mxu0 0.0
      %1947 = vmatpush1.msra.mxu0 %v1392
      %1948 = vmatprep.subr.mxu0 0.0
      %1949 = vmatpush1.msra.mxu0 %v1393
      %1950 = vmatprep.subr.mxu0 0.0
      %1951 = vmatpush1.msra.mxu0 %v1394
      %1952 = vmatprep.subr.mxu0 0.0
      %1953 = vmatpush1.msra.mxu0 0.0
      %1954 = vmatprep.subr.mxu0 0.0
      %1955 = vmatpush1.msra.mxu0 0.0
      %1956 = vmatprep.subr.mxu0 0.0
      %1957 = vmatpush1.msra.mxu0 0.0
      %1958 = vmatprep.subr.mxu0 0.0
      %1959 = vmatpush1.msra.mxu0 0.0
      %1960 = vmatprep.subr.mxu0 0.0
      %1961 = vmatpush1.msra.mxu0 0.0
      %1962 = vmatprep.subr.mxu0 0.0
      %1963 = vmatpush1.msra.mxu0 0.0
      %1964 = vmatprep.subr.mxu0 0.0
      %1965 = vmatpush1.msra.mxu0 0.0
      %1966 = vmatprep.subr.mxu0 0.0
      %1967 = vmatpush1.msra.mxu0 0.0
      %1968 = vmatprep.subr.mxu0 0.0
      %1969 = vmatpush1.msra.mxu0 0.0
      %1970 = vmatprep.subr.mxu0 0.0
      %1971 = vmatpush1.msra.mxu0 0.0
      %1972 = vmatprep.subr.mxu0 0.0
      %1973 = vmatpush1.msra.mxu0 0.0
      %1974 = vmatprep.subr.mxu0 0.0
      %1975 = vmatpush1.msra.mxu0 0.0
      %1976 = vmatprep.subr.mxu0 0.0
      %1977 = vmatpush1.msra.mxu0 0.0
      %1978 = vmatprep.subr.mxu0 0.0
      %1979 = vmatpush1.msra.mxu0 0.0
      %1980 = vmatprep.subr.mxu0 0.0
      %1981 = vmatpush1.msra.mxu0 0.0
      %1982 = vmatprep.subr.mxu0 0.0
      %1983 = vmatpush1.msra.mxu0 0.0
      %1984 = vmatprep.subr.mxu0 0.0
      %1985 = vmatpush1.msra.mxu0 0.0
      %1986 = vmatprep.subr.mxu0 0.0
      %1987 = vmatpush1.msra.mxu0 0.0
      %1988 = vmatprep.subr.mxu0 0.0
      %1989 = vmatpush1.msra.mxu0 0.0
      %1990 = vmatprep.subr.mxu0 0.0
      %1991 = vmatpush1.msra.mxu0 0.0
      %1992 = vmatprep.subr.mxu0 0.0
      %1993 = vmatpush1.msra.mxu0 0.0
      %1994 = vmatprep.subr.mxu0 0.0
      %1995 = vmatpush1.msra.mxu0 0.0
      %1996 = vmatprep.subr.mxu0 0.0
      %1997 = vmatpush1.msra.mxu0 0.0
      %1998 = vmatprep.subr.mxu0 0.0
      %1999 = vmatpush1.msra.mxu0 0.0
      %2000 = vmatprep.subr.mxu0 0.0
      %2001 = vmatpush1.msra.mxu0 0.0
      %2002 = vmatprep.subr.mxu0 0.0
      %2003 = vmatpush1.msra.mxu0 0.0
      %2004 = vmatprep.subr.mxu0 0.0
      %2005 = vmatpush1.msra.mxu0 0.0
      %2006 = vmatprep.subr.mxu0 0.0
      %2007 = vmatpush1.msra.mxu0 0.0
      %2008 = vmatprep.mubr.f32.mxu0 0.0
      %2009 = vmatmul.mubr.f32.gmra.mrb[0].mxu0 %v1452
      %v2010 = vpop.f32.mrb[0].mxu0
      %v2011 = vadd.f32 %v1442, %v2010
      %v2012 = vpop.f32.mrb[0].mxu0
      %2013 = vdwg.mxu0
      %v2014 = vld [vmem:[%s662] sm:$0xff]
      %v2015 = vld [vmem:[%s662 + $0x8] sm:$0xff]
      %v2016 = vld [vmem:[%s662 + $0x10] sm:$0xff]
      %v2017 = vld [vmem:[%s662 + $0x18] sm:$0xff]
      %v2018 = vld [vmem:[%s662 + $0x20] sm:$0xff]
      %v2019 = vld [vmem:[%s662 + $0x28] sm:$0xff]
      %v2020 = vld [vmem:[%s662 + $0x30] sm:$0xff]
      %v2021 = vld [vmem:[%s662 + $0x38] sm:$0xff]
      %v2022 = vld [vmem:[%s662 + $0x40] sm:$0xff]
      %v2023 = vld [vmem:[%s662 + $0x48] sm:$0xff]
      %v2024 = vld [vmem:[%s662 + $0x50] sm:$0xff]
      %v2025 = vld [vmem:[%s662 + $0x58] sm:$0xff]
      %v2026 = vld [vmem:[%s662 + $0x60] sm:$0xff]
      %v2027 = vld [vmem:[%s662 + $0x68] sm:$0xff]
      %v2028 = vld [vmem:[%s662 + $0x70] sm:$0xff]
      %v2029 = vld [vmem:[%s662 + $0x78] sm:$0xff]
      %v2030 = vld [vmem:[%s662 + $0x80] sm:$0xff]
      %v2031 = vld [vmem:[%s662 + $0x88] sm:$0xff]
      %v2032 = vld [vmem:[%s662 + $0x90] sm:$0xff]
      %v2033 = vld [vmem:[%s662 + $0x98] sm:$0xff]
      %v2034 = vld [vmem:[%s662 + $0xa0] sm:$0xff]
      %v2035 = vld [vmem:[%s662 + $0xa8] sm:$0xff]
      %v2036 = vld [vmem:[%s662 + $0xb0] sm:$0xff]
      %v2037 = vld [vmem:[%s662 + $0xb8] sm:$0xff]
      %v2038 = vld [vmem:[%s662 + $0xc0] sm:$0xff]
      %v2039 = vld [vmem:[%s662 + $0xc8] sm:$0xff]
      %v2040 = vld [vmem:[%s662 + $0xd0] sm:$0xff]
      %v2041 = vld [vmem:[%s662 + $0xd8] sm:$0xff]
      %v2042 = vld [vmem:[%s662 + $0xe0] sm:$0xff]
      %v2043 = vld [vmem:[%s662 + $0xe8] sm:$0xff]
      %v2044 = vld [vmem:[%s662 + $0xf0] sm:$0xff]
      %v2045 = vld [vmem:[%s662 + $0xf8] sm:$0xff]
      %v2046 = vld [vmem:[%s674] sm:$0x1]
      %v2047 = vld [vmem:[%s674 + $0x1] sm:$0x1]
      %v2048 = vld [vmem:[%s674 + $0x2] sm:$0x1]
      %v2049 = vld [vmem:[%s674 + $0x3] sm:$0x1]
      %v2050 = vld [vmem:[%s674 + $0x4] sm:$0x1]
      %v2051 = vld [vmem:[%s674 + $0x5] sm:$0x1]
      %v2052 = vld [vmem:[%s674 + $0x6] sm:$0x1]
      %v2053 = vld [vmem:[%s674 + $0x7] sm:$0x1]
      %v2062 = vlaneseq
      %v2063 = vshrl.u32 %v2062, 7
      %v2064 = vsub.s32 0, %v2063
      %v2065 = vrot.slane %v2046, %v2064
      %v2066 = vlaneseq
      %v2067 = vshrl.u32 %v2066, 7
      %v2068 = vsub.s32 0, %v2067
      %v2069 = vrot.slane %v2047, %v2068
      %v2070 = vlaneseq
      %v2071 = vshrl.u32 %v2070, 7
      %v2072 = vsub.s32 0, %v2071
      %v2073 = vrot.slane %v2048, %v2072
      %v2074 = vlaneseq
      %v2075 = vshrl.u32 %v2074, 7
      %v2076 = vsub.s32 0, %v2075
      %v2077 = vrot.slane %v2049, %v2076
      %v2078 = vlaneseq
      %v2079 = vshrl.u32 %v2078, 7
      %v2080 = vsub.s32 0, %v2079
      %v2081 = vrot.slane %v2050, %v2080
      %v2082 = vlaneseq
      %v2083 = vshrl.u32 %v2082, 7
      %v2084 = vsub.s32 0, %v2083
      %v2085 = vrot.slane %v2051, %v2084
      %v2086 = vlaneseq
      %v2087 = vshrl.u32 %v2086, 7
      %v2088 = vsub.s32 0, %v2087
      %v2089 = vrot.slane %v2052, %v2088
      %v2090 = vlaneseq
      %v2091 = vshrl.u32 %v2090, 7
      %v2092 = vsub.s32 0, %v2091
      %v2093 = vrot.slane %v2053, %v2092
      %2102 = vmatprep.subr.mxu0 0.0
      %2103 = vmatpush1.msra.mxu0 %v2014
      %2104 = vmatprep.subr.mxu0 0.0
      %2105 = vmatpush1.msra.mxu0 %v2015
      %2106 = vmatprep.subr.mxu0 0.0
      %2107 = vmatpush1.msra.mxu0 %v2016
      %2108 = vmatprep.subr.mxu0 0.0
      %2109 = vmatpush1.msra.mxu0 %v2017
      %2110 = vmatprep.subr.mxu0 0.0
      %2111 = vmatpush1.msra.mxu0 0.0
      %2112 = vmatprep.subr.mxu0 0.0
      %2113 = vmatpush1.msra.mxu0 0.0
      %2114 = vmatprep.subr.mxu0 0.0
      %2115 = vmatpush1.msra.mxu0 0.0
      %2116 = vmatprep.subr.mxu0 0.0
      %2117 = vmatpush1.msra.mxu0 0.0
      %2118 = vmatprep.subr.mxu0 0.0
      %2119 = vmatpush1.msra.mxu0 0.0
      %2120 = vmatprep.subr.mxu0 0.0
      %2121 = vmatpush1.msra.mxu0 0.0
      %2122 = vmatprep.subr.mxu0 0.0
      %2123 = vmatpush1.msra.mxu0 0.0
      %2124 = vmatprep.subr.mxu0 0.0
      %2125 = vmatpush1.msra.mxu0 0.0
      %2126 = vmatprep.subr.mxu0 0.0
      %2127 = vmatpush1.msra.mxu0 0.0
      %2128 = vmatprep.subr.mxu0 0.0
      %2129 = vmatpush1.msra.mxu0 0.0
      %2130 = vmatprep.subr.mxu0 0.0
      %2131 = vmatpush1.msra.mxu0 0.0
      %2132 = vmatprep.subr.mxu0 0.0
      %2133 = vmatpush1.msra.mxu0 0.0
      %2134 = vmatprep.subr.mxu0 0.0
      %2135 = vmatpush1.msra.mxu0 0.0
      %2136 = vmatprep.subr.mxu0 0.0
      %2137 = vmatpush1.msra.mxu0 0.0
      %2138 = vmatprep.subr.mxu0 0.0
      %2139 = vmatpush1.msra.mxu0 0.0
      %2140 = vmatprep.subr.mxu0 0.0
      %2141 = vmatpush1.msra.mxu0 0.0
      %2142 = vmatprep.subr.mxu0 0.0
      %2143 = vmatpush1.msra.mxu0 0.0
      %2144 = vmatprep.subr.mxu0 0.0
      %2145 = vmatpush1.msra.mxu0 0.0
      %2146 = vmatprep.subr.mxu0 0.0
      %2147 = vmatpush1.msra.mxu0 0.0
      %2148 = vmatprep.subr.mxu0 0.0
      %2149 = vmatpush1.msra.mxu0 0.0
      %2150 = vmatprep.subr.mxu0 0.0
      %2151 = vmatpush1.msra.mxu0 0.0
      %2152 = vmatprep.subr.mxu0 0.0
      %2153 = vmatpush1.msra.mxu0 0.0
      %2154 = vmatprep.subr.mxu0 0.0
      %2155 = vmatpush1.msra.mxu0 0.0
      %2156 = vmatprep.subr.mxu0 0.0
      %2157 = vmatpush1.msra.mxu0 0.0
      %2158 = vmatprep.subr.mxu0 0.0
      %2159 = vmatpush1.msra.mxu0 0.0
      %2160 = vmatprep.subr.mxu0 0.0
      %2161 = vmatpush1.msra.mxu0 0.0
      %2162 = vmatprep.subr.mxu0 0.0
      %2163 = vmatpush1.msra.mxu0 0.0
      %2164 = vmatprep.subr.mxu0 0.0
      %2165 = vmatpush1.msra.mxu0 0.0
      %2166 = vmatprep.mubr.f32.mxu0 0.0
      %2167 = vmatmul.mubr.f32.gmra.mrb[0].mxu0 %v1452
      %v2168 = vpop.f32.mrb[0].mxu0
      %v2169 = vadd.f32 %v2065, %v2168
      %v2170 = vpop.f32.mrb[0].mxu0
      %2171 = vdwg.mxu0
      %2172 = vmatprep.subr.mxu0 0.0
      %2173 = vmatpush1.msra.mxu0 %v2018
      %2174 = vmatprep.subr.mxu0 0.0
      %2175 = vmatpush1.msra.mxu0 %v2019
      %2176 = vmatprep.subr.mxu0 0.0
      %2177 = vmatpush1.msra.mxu0 %v2020
      %2178 = vmatprep.subr.mxu0 0.0
      %2179 = vmatpush1.msra.mxu0 %v2021
      %2180 = vmatprep.subr.mxu0 0.0
      %2181 = vmatpush1.msra.mxu0 0.0
      %2182 = vmatprep.subr.mxu0 0.0
      %2183 = vmatpush1.msra.mxu0 0.0
      %2184 = vmatprep.subr.mxu0 0.0
      %2185 = vmatpush1.msra.mxu0 0.0
      %2186 = vmatprep.subr.mxu0 0.0
      %2187 = vmatpush1.msra.mxu0 0.0
      %2188 = vmatprep.subr.mxu0 0.0
      %2189 = vmatpush1.msra.mxu0 0.0
      %2190 = vmatprep.subr.mxu0 0.0
      %2191 = vmatpush1.msra.mxu0 0.0
      %2192 = vmatprep.subr.mxu0 0.0
      %2193 = vmatpush1.msra.mxu0 0.0
      %2194 = vmatprep.subr.mxu0 0.0
      %2195 = vmatpush1.msra.mxu0 0.0
      %2196 = vmatprep.subr.mxu0 0.0
      %2197 = vmatpush1.msra.mxu0 0.0
      %2198 = vmatprep.subr.mxu0 0.0
      %2199 = vmatpush1.msra.mxu0 0.0
      %2200 = vmatprep.subr.mxu0 0.0
      %2201 = vmatpush1.msra.mxu0 0.0
      %2202 = vmatprep.subr.mxu0 0.0
      %2203 = vmatpush1.msra.mxu0 0.0
      %2204 = vmatprep.subr.mxu0 0.0
      %2205 = vmatpush1.msra.mxu0 0.0
      %2206 = vmatprep.subr.mxu0 0.0
      %2207 = vmatpush1.msra.mxu0 0.0
      %2208 = vmatprep.subr.mxu0 0.0
      %2209 = vmatpush1.msra.mxu0 0.0
      %2210 = vmatprep.subr.mxu0 0.0
      %2211 = vmatpush1.msra.mxu0 0.0
      %2212 = vmatprep.subr.mxu0 0.0
      %2213 = vmatpush1.msra.mxu0 0.0
      %2214 = vmatprep.subr.mxu0 0.0
      %2215 = vmatpush1.msra.mxu0 0.0
      %2216 = vmatprep.subr.mxu0 0.0
      %2217 = vmatpush1.msra.mxu0 0.0
      %2218 = vmatprep.subr.mxu0 0.0
      %2219 = vmatpush1.msra.mxu0 0.0
      %2220 = vmatprep.subr.mxu0 0.0
      %2221 = vmatpush1.msra.mxu0 0.0
      %2222 = vmatprep.subr.mxu0 0.0
      %2223 = vmatpush1.msra.mxu0 0.0
      %2224 = vmatprep.subr.mxu0 0.0
      %2225 = vmatpush1.msra.mxu0 0.0
      %2226 = vmatprep.subr.mxu0 0.0
      %2227 = vmatpush1.msra.mxu0 0.0
      %2228 = vmatprep.subr.mxu0 0.0
      %2229 = vmatpush1.msra.mxu0 0.0
      %2230 = vmatprep.subr.mxu0 0.0
      %2231 = vmatpush1.msra.mxu0 0.0
      %2232 = vmatprep.subr.mxu0 0.0
      %2233 = vmatpush1.msra.mxu0 0.0
      %2234 = vmatprep.subr.mxu0 0.0
      %2235 = vmatpush1.msra.mxu0 0.0
      %2236 = vmatprep.mubr.f32.mxu0 0.0
      %2237 = vmatmul.mubr.f32.gmra.mrb[0].mxu0 %v1452
      %v2238 = vpop.f32.mrb[0].mxu0
      %v2239 = vadd.f32 %v2069, %v2238
      %v2240 = vpop.f32.mrb[0].mxu0
      %2241 = vdwg.mxu0
      %2242 = vmatprep.subr.mxu0 0.0
      %2243 = vmatpush1.msra.mxu0 %v2022
      %2244 = vmatprep.subr.mxu0 0.0
      %2245 = vmatpush1.msra.mxu0 %v2023
      %2246 = vmatprep.subr.mxu0 0.0
      %2247 = vmatpush1.msra.mxu0 %v2024
      %2248 = vmatprep.subr.mxu0 0.0
      %2249 = vmatpush1.msra.mxu0 %v2025
      %2250 = vmatprep.subr.mxu0 0.0
      %2251 = vmatpush1.msra.mxu0 0.0
      %2252 = vmatprep.subr.mxu0 0.0
      %2253 = vmatpush1.msra.mxu0 0.0
      %2254 = vmatprep.subr.mxu0 0.0
      %2255 = vmatpush1.msra.mxu0 0.0
      %2256 = vmatprep.subr.mxu0 0.0
      %2257 = vmatpush1.msra.mxu0 0.0
      %2258 = vmatprep.subr.mxu0 0.0
      %2259 = vmatpush1.msra.mxu0 0.0
      %2260 = vmatprep.subr.mxu0 0.0
      %2261 = vmatpush1.msra.mxu0 0.0
      %2262 = vmatprep.subr.mxu0 0.0
      %2263 = vmatpush1.msra.mxu0 0.0
      %2264 = vmatprep.subr.mxu0 0.0
      %2265 = vmatpush1.msra.mxu0 0.0
      %2266 = vmatprep.subr.mxu0 0.0
      %2267 = vmatpush1.msra.mxu0 0.0
      %2268 = vmatprep.subr.mxu0 0.0
      %2269 = vmatpush1.msra.mxu0 0.0
      %2270 = vmatprep.subr.mxu0 0.0
      %2271 = vmatpush1.msra.mxu0 0.0
      %2272 = vmatprep.subr.mxu0 0.0
      %2273 = vmatpush1.msra.mxu0 0.0
      %2274 = vmatprep.subr.mxu0 0.0
      %2275 = vmatpush1.msra.mxu0 0.0
      %2276 = vmatprep.subr.mxu0 0.0
      %2277 = vmatpush1.msra.mxu0 0.0
      %2278 = vmatprep.subr.mxu0 0.0
      %2279 = vmatpush1.msra.mxu0 0.0
      %2280 = vmatprep.subr.mxu0 0.0
      %2281 = vmatpush1.msra.mxu0 0.0
      %2282 = vmatprep.subr.mxu0 0.0
      %2283 = vmatpush1.msra.mxu0 0.0
      %2284 = vmatprep.subr.mxu0 0.0
      %2285 = vmatpush1.msra.mxu0 0.0
      %2286 = vmatprep.subr.mxu0 0.0
      %2287 = vmatpush1.msra.mxu0 0.0
      %2288 = vmatprep.subr.mxu0 0.0
      %2289 = vmatpush1.msra.mxu0 0.0
      %2290 = vmatprep.subr.mxu0 0.0
      %2291 = vmatpush1.msra.mxu0 0.0
      %2292 = vmatprep.subr.mxu0 0.0
      %2293 = vmatpush1.msra.mxu0 0.0
      %2294 = vmatprep.subr.mxu0 0.0
      %2295 = vmatpush1.msra.mxu0 0.0
      %2296 = vmatprep.subr.mxu0 0.0
      %2297 = vmatpush1.msra.mxu0 0.0
      %2298 = vmatprep.subr.mxu0 0.0
      %2299 = vmatpush1.msra.mxu0 0.0
      %2300 = vmatprep.subr.mxu0 0.0
      %2301 = vmatpush1.msra.mxu0 0.0
      %2302 = vmatprep.subr.mxu0 0.0
      %2303 = vmatpush1.msra.mxu0 0.0
      %2304 = vmatprep.subr.mxu0 0.0
      %2305 = vmatpush1.msra.mxu0 0.0
      %2306 = vmatprep.mubr.f32.mxu0 0.0
      %2307 = vmatmul.mubr.f32.gmra.mrb[0].mxu0 %v1452
      %v2308 = vpop.f32.mrb[0].mxu0
      %v2309 = vadd.f32 %v2073, %v2308
      %v2310 = vpop.f32.mrb[0].mxu0
      %2311 = vdwg.mxu0
      %2312 = vmatprep.subr.mxu0 0.0
      %2313 = vmatpush1.msra.mxu0 %v2026
      %2314 = vmatprep.subr.mxu0 0.0
      %2315 = vmatpush1.msra.mxu0 %v2027
      %2316 = vmatprep.subr.mxu0 0.0
      %2317 = vmatpush1.msra.mxu0 %v2028
      %2318 = vmatprep.subr.mxu0 0.0
      %2319 = vmatpush1.msra.mxu0 %v2029
      %2320 = vmatprep.subr.mxu0 0.0
      %2321 = vmatpush1.msra.mxu0 0.0
      %2322 = vmatprep.subr.mxu0 0.0
      %2323 = vmatpush1.msra.mxu0 0.0
      %2324 = vmatprep.subr.mxu0 0.0
      %2325 = vmatpush1.msra.mxu0 0.0
      %2326 = vmatprep.subr.mxu0 0.0
      %2327 = vmatpush1.msra.mxu0 0.0
      %2328 = vmatprep.subr.mxu0 0.0
      %2329 = vmatpush1.msra.mxu0 0.0
      %2330 = vmatprep.subr.mxu0 0.0
      %2331 = vmatpush1.msra.mxu0 0.0
      %2332 = vmatprep.subr.mxu0 0.0
      %2333 = vmatpush1.msra.mxu0 0.0
      %2334 = vmatprep.subr.mxu0 0.0
      %2335 = vmatpush1.msra.mxu0 0.0
      %2336 = vmatprep.subr.mxu0 0.0
      %2337 = vmatpush1.msra.mxu0 0.0
      %2338 = vmatprep.subr.mxu0 0.0
      %2339 = vmatpush1.msra.mxu0 0.0
      %2340 = vmatprep.subr.mxu0 0.0
      %2341 = vmatpush1.msra.mxu0 0.0
      %2342 = vmatprep.subr.mxu0 0.0
      %2343 = vmatpush1.msra.mxu0 0.0
      %2344 = vmatprep.subr.mxu0 0.0
      %2345 = vmatpush1.msra.mxu0 0.0
      %2346 = vmatprep.subr.mxu0 0.0
      %2347 = vmatpush1.msra.mxu0 0.0
      %2348 = vmatprep.subr.mxu0 0.0
      %2349 = vmatpush1.msra.mxu0 0.0
      %2350 = vmatprep.subr.mxu0 0.0
      %2351 = vmatpush1.msra.mxu0 0.0
      %2352 = vmatprep.subr.mxu0 0.0
      %2353 = vmatpush1.msra.mxu0 0.0
      %2354 = vmatprep.subr.mxu0 0.0
      %2355 = vmatpush1.msra.mxu0 0.0
      %2356 = vmatprep.subr.mxu0 0.0
      %2357 = vmatpush1.msra.mxu0 0.0
      %2358 = vmatprep.subr.mxu0 0.0
      %2359 = vmatpush1.msra.mxu0 0.0
      %2360 = vmatprep.subr.mxu0 0.0
      %2361 = vmatpush1.msra.mxu0 0.0
      %2362 = vmatprep.subr.mxu0 0.0
      %2363 = vmatpush1.msra.mxu0 0.0
      %2364 = vmatprep.subr.mxu0 0.0
      %2365 = vmatpush1.msra.mxu0 0.0
      %2366 = vmatprep.subr.mxu0 0.0
      %2367 = vmatpush1.msra.mxu0 0.0
      %2368 = vmatprep.subr.mxu0 0.0
      %2369 = vmatpush1.msra.mxu0 0.0
      %2370 = vmatprep.subr.mxu0 0.0
      %2371 = vmatpush1.msra.mxu0 0.0
      %2372 = vmatprep.subr.mxu0 0.0
      %2373 = vmatpush1.msra.mxu0 0.0
      %2374 = vmatprep.subr.mxu0 0.0
      %2375 = vmatpush1.msra.mxu0 0.0
      %2376 = vmatprep.mubr.f32.mxu0 0.0
      %2377 = vmatmul.mubr.f32.gmra.mrb[0].mxu0 %v1452
      %v2378 = vpop.f32.mrb[0].mxu0
      %v2379 = vadd.f32 %v2077, %v2378
      %v2380 = vpop.f32.mrb[0].mxu0
      %2381 = vdwg.mxu0
      %2382 = vmatprep.subr.mxu0 0.0
      %2383 = vmatpush1.msra.mxu0 %v2030
      %2384 = vmatprep.subr.mxu0 0.0
      %2385 = vmatpush1.msra.mxu0 %v2031
      %2386 = vmatprep.subr.mxu0 0.0
      %2387 = vmatpush1.msra.mxu0 %v2032
      %2388 = vmatprep.subr.mxu0 0.0
      %2389 = vmatpush1.msra.mxu0 %v2033
      %2390 = vmatprep.subr.mxu0 0.0
      %2391 = vmatpush1.msra.mxu0 0.0
      %2392 = vmatprep.subr.mxu0 0.0
      %2393 = vmatpush1.msra.mxu0 0.0
      %2394 = vmatprep.subr.mxu0 0.0
      %2395 = vmatpush1.msra.mxu0 0.0
      %2396 = vmatprep.subr.mxu0 0.0
      %2397 = vmatpush1.msra.mxu0 0.0
      %2398 = vmatprep.subr.mxu0 0.0
      %2399 = vmatpush1.msra.mxu0 0.0
      %2400 = vmatprep.subr.mxu0 0.0
      %2401 = vmatpush1.msra.mxu0 0.0
      %2402 = vmatprep.subr.mxu0 0.0
      %2403 = vmatpush1.msra.mxu0 0.0
      %2404 = vmatprep.subr.mxu0 0.0
      %2405 = vmatpush1.msra.mxu0 0.0
      %2406 = vmatprep.subr.mxu0 0.0
      %2407 = vmatpush1.msra.mxu0 0.0
      %2408 = vmatprep.subr.mxu0 0.0
      %2409 = vmatpush1.msra.mxu0 0.0
      %2410 = vmatprep.subr.mxu0 0.0
      %2411 = vmatpush1.msra.mxu0 0.0
      %2412 = vmatprep.subr.mxu0 0.0
      %2413 = vmatpush1.msra.mxu0 0.0
      %2414 = vmatprep.subr.mxu0 0.0
      %2415 = vmatpush1.msra.mxu0 0.0
      %2416 = vmatprep.subr.mxu0 0.0
      %2417 = vmatpush1.msra.mxu0 0.0
      %2418 = vmatprep.subr.mxu0 0.0
      %2419 = vmatpush1.msra.mxu0 0.0
      %2420 = vmatprep.subr.mxu0 0.0
      %2421 = vmatpush1.msra.mxu0 0.0
      %2422 = vmatprep.subr.mxu0 0.0
      %2423 = vmatpush1.msra.mxu0 0.0
      %2424 = vmatprep.subr.mxu0 0.0
      %2425 = vmatpush1.msra.mxu0 0.0
      %2426 = vmatprep.subr.mxu0 0.0
      %2427 = vmatpush1.msra.mxu0 0.0
      %2428 = vmatprep.subr.mxu0 0.0
      %2429 = vmatpush1.msra.mxu0 0.0
      %2430 = vmatprep.subr.mxu0 0.0
      %2431 = vmatpush1.msra.mxu0 0.0
      %2432 = vmatprep.subr.mxu0 0.0
      %2433 = vmatpush1.msra.mxu0 0.0
      %2434 = vmatprep.subr.mxu0 0.0
      %2435 = vmatpush1.msra.mxu0 0.0
      %2436 = vmatprep.subr.mxu0 0.0
      %2437 = vmatpush1.msra.mxu0 0.0
      %2438 = vmatprep.subr.mxu0 0.0
      %2439 = vmatpush1.msra.mxu0 0.0
      %2440 = vmatprep.subr.mxu0 0.0
      %2441 = vmatpush1.msra.mxu0 0.0
      %2442 = vmatprep.subr.mxu0 0.0
      %2443 = vmatpush1.msra.mxu0 0.0
      %2444 = vmatprep.subr.mxu0 0.0
      %2445 = vmatpush1.msra.mxu0 0.0
      %2446 = vmatprep.mubr.f32.mxu0 0.0
      %2447 = vmatmul.mubr.f32.gmra.mrb[0].mxu0 %v1452
      %v2448 = vpop.f32.mrb[0].mxu0
      %v2449 = vadd.f32 %v2081, %v2448
      %v2450 = vpop.f32.mrb[0].mxu0
      %2451 = vdwg.mxu0
      %2452 = vmatprep.subr.mxu0 0.0
      %2453 = vmatpush1.msra.mxu0 %v2034
      %2454 = vmatprep.subr.mxu0 0.0
      %2455 = vmatpush1.msra.mxu0 %v2035
      %2456 = vmatprep.subr.mxu0 0.0
      %2457 = vmatpush1.msra.mxu0 %v2036
      %2458 = vmatprep.subr.mxu0 0.0
      %2459 = vmatpush1.msra.mxu0 %v2037
      %2460 = vmatprep.subr.mxu0 0.0
      %2461 = vmatpush1.msra.mxu0 0.0
      %2462 = vmatprep.subr.mxu0 0.0
      %2463 = vmatpush1.msra.mxu0 0.0
      %2464 = vmatprep.subr.mxu0 0.0
      %2465 = vmatpush1.msra.mxu0 0.0
      %2466 = vmatprep.subr.mxu0 0.0
      %2467 = vmatpush1.msra.mxu0 0.0
      %2468 = vmatprep.subr.mxu0 0.0
      %2469 = vmatpush1.msra.mxu0 0.0
      %2470 = vmatprep.subr.mxu0 0.0
      %2471 = vmatpush1.msra.mxu0 0.0
      %2472 = vmatprep.subr.mxu0 0.0
      %2473 = vmatpush1.msra.mxu0 0.0
      %2474 = vmatprep.subr.mxu0 0.0
      %2475 = vmatpush1.msra.mxu0 0.0
      %2476 = vmatprep.subr.mxu0 0.0
      %2477 = vmatpush1.msra.mxu0 0.0
      %2478 = vmatprep.subr.mxu0 0.0
      %2479 = vmatpush1.msra.mxu0 0.0
      %2480 = vmatprep.subr.mxu0 0.0
      %2481 = vmatpush1.msra.mxu0 0.0
      %2482 = vmatprep.subr.mxu0 0.0
      %2483 = vmatpush1.msra.mxu0 0.0
      %2484 = vmatprep.subr.mxu0 0.0
      %2485 = vmatpush1.msra.mxu0 0.0
      %2486 = vmatprep.subr.mxu0 0.0
      %2487 = vmatpush1.msra.mxu0 0.0
      %2488 = vmatprep.subr.mxu0 0.0
      %2489 = vmatpush1.msra.mxu0 0.0
      %2490 = vmatprep.subr.mxu0 0.0
      %2491 = vmatpush1.msra.mxu0 0.0
      %2492 = vmatprep.subr.mxu0 0.0
      %2493 = vmatpush1.msra.mxu0 0.0
      %2494 = vmatprep.subr.mxu0 0.0
      %2495 = vmatpush1.msra.mxu0 0.0
      %2496 = vmatprep.subr.mxu0 0.0
      %2497 = vmatpush1.msra.mxu0 0.0
      %2498 = vmatprep.subr.mxu0 0.0
      %2499 = vmatpush1.msra.mxu0 0.0
      %2500 = vmatprep.subr.mxu0 0.0
      %2501 = vmatpush1.msra.mxu0 0.0
      %2502 = vmatprep.subr.mxu0 0.0
      %2503 = vmatpush1.msra.mxu0 0.0
      %2504 = vmatprep.subr.mxu0 0.0
      %2505 = vmatpush1.msra.mxu0 0.0
      %2506 = vmatprep.subr.mxu0 0.0
      %2507 = vmatpush1.msra.mxu0 0.0
      %2508 = vmatprep.subr.mxu0 0.0
      %2509 = vmatpush1.msra.mxu0 0.0
      %2510 = vmatprep.subr.mxu0 0.0
      %2511 = vmatpush1.msra.mxu0 0.0
      %2512 = vmatprep.subr.mxu0 0.0
      %2513 = vmatpush1.msra.mxu0 0.0
      %2514 = vmatprep.subr.mxu0 0.0
      %2515 = vmatpush1.msra.mxu0 0.0
      %2516 = vmatprep.mubr.f32.mxu0 0.0
      %2517 = vmatmul.mubr.f32.gmra.mrb[0].mxu0 %v1452
      %v2518 = vpop.f32.mrb[0].mxu0
      %v2519 = vadd.f32 %v2085, %v2518
      %v2520 = vpop.f32.mrb[0].mxu0
      %2521 = vdwg.mxu0
      %2522 = vmatprep.subr.mxu0 0.0
      %2523 = vmatpush1.msra.mxu0 %v2038
      %2524 = vmatprep.subr.mxu0 0.0
      %2525 = vmatpush1.msra.mxu0 %v2039
      %2526 = vmatprep.subr.mxu0 0.0
      %2527 = vmatpush1.msra.mxu0 %v2040
      %2528 = vmatprep.subr.mxu0 0.0
      %2529 = vmatpush1.msra.mxu0 %v2041
      %2530 = vmatprep.subr.mxu0 0.0
      %2531 = vmatpush1.msra.mxu0 0.0
      %2532 = vmatprep.subr.mxu0 0.0
      %2533 = vmatpush1.msra.mxu0 0.0
      %2534 = vmatprep.subr.mxu0 0.0
      %2535 = vmatpush1.msra.mxu0 0.0
      %2536 = vmatprep.subr.mxu0 0.0
      %2537 = vmatpush1.msra.mxu0 0.0
      %2538 = vmatprep.subr.mxu0 0.0
      %2539 = vmatpush1.msra.mxu0 0.0
      %2540 = vmatprep.subr.mxu0 0.0
      %2541 = vmatpush1.msra.mxu0 0.0
      %2542 = vmatprep.subr.mxu0 0.0
      %2543 = vmatpush1.msra.mxu0 0.0
      %2544 = vmatprep.subr.mxu0 0.0
      %2545 = vmatpush1.msra.mxu0 0.0
      %2546 = vmatprep.subr.mxu0 0.0
      %2547 = vmatpush1.msra.mxu0 0.0
      %2548 = vmatprep.subr.mxu0 0.0
      %2549 = vmatpush1.msra.mxu0 0.0
      %2550 = vmatprep.subr.mxu0 0.0
      %2551 = vmatpush1.msra.mxu0 0.0
      %2552 = vmatprep.subr.mxu0 0.0
      %2553 = vmatpush1.msra.mxu0 0.0
      %2554 = vmatprep.subr.mxu0 0.0
      %2555 = vmatpush1.msra.mxu0 0.0
      %2556 = vmatprep.subr.mxu0 0.0
      %2557 = vmatpush1.msra.mxu0 0.0
      %2558 = vmatprep.subr.mxu0 0.0
      %2559 = vmatpush1.msra.mxu0 0.0
      %2560 = vmatprep.subr.mxu0 0.0
      %2561 = vmatpush1.msra.mxu0 0.0
      %2562 = vmatprep.subr.mxu0 0.0
      %2563 = vmatpush1.msra.mxu0 0.0
      %2564 = vmatprep.subr.mxu0 0.0
      %2565 = vmatpush1.msra.mxu0 0.0
      %2566 = vmatprep.subr.mxu0 0.0
      %2567 = vmatpush1.msra.mxu0 0.0
      %2568 = vmatprep.subr.mxu0 0.0
      %2569 = vmatpush1.msra.mxu0 0.0
      %2570 = vmatprep.subr.mxu0 0.0
      %2571 = vmatpush1.msra.mxu0 0.0
      %2572 = vmatprep.subr.mxu0 0.0
      %2573 = vmatpush1.msra.mxu0 0.0
      %2574 = vmatprep.subr.mxu0 0.0
      %2575 = vmatpush1.msra.mxu0 0.0
      %2576 = vmatprep.subr.mxu0 0.0
      %2577 = vmatpush1.msra.mxu0 0.0
      %2578 = vmatprep.subr.mxu0 0.0
      %2579 = vmatpush1.msra.mxu0 0.0
      %2580 = vmatprep.subr.mxu0 0.0
      %2581 = vmatpush1.msra.mxu0 0.0
      %2582 = vmatprep.subr.mxu0 0.0
      %2583 = vmatpush1.msra.mxu0 0.0
      %2584 = vmatprep.subr.mxu0 0.0
      %2585 = vmatpush1.msra.mxu0 0.0
      %2586 = vmatprep.mubr.f32.mxu0 0.0
      %2587 = vmatmul.mubr.f32.gmra.mrb[0].mxu0 %v1452
      %v2588 = vpop.f32.mrb[0].mxu0
      %v2589 = vadd.f32 %v2089, %v2588
      %v2590 = vpop.f32.mrb[0].mxu0
      %2591 = vdwg.mxu0
      %2592 = vmatprep.subr.mxu0 0.0
      %2593 = vmatpush1.msra.mxu0 %v2042
      %2594 = vmatprep.subr.mxu0 0.0
      %2595 = vmatpush1.msra.mxu0 %v2043
      %2596 = vmatprep.subr.mxu0 0.0
      %2597 = vmatpush1.msra.mxu0 %v2044
      %2598 = vmatprep.subr.mxu0 0.0
      %2599 = vmatpush1.msra.mxu0 %v2045
      %2600 = vmatprep.subr.mxu0 0.0
      %2601 = vmatpush1.msra.mxu0 0.0
      %2602 = vmatprep.subr.mxu0 0.0
      %2603 = vmatpush1.msra.mxu0 0.0
      %2604 = vmatprep.subr.mxu0 0.0
      %2605 = vmatpush1.msra.mxu0 0.0
      %2606 = vmatprep.subr.mxu0 0.0
      %2607 = vmatpush1.msra.mxu0 0.0
      %2608 = vmatprep.subr.mxu0 0.0
      %2609 = vmatpush1.msra.mxu0 0.0
      %2610 = vmatprep.subr.mxu0 0.0
      %2611 = vmatpush1.msra.mxu0 0.0
      %2612 = vmatprep.subr.mxu0 0.0
      %2613 = vmatpush1.msra.mxu0 0.0
      %2614 = vmatprep.subr.mxu0 0.0
      %2615 = vmatpush1.msra.mxu0 0.0
      %2616 = vmatprep.subr.mxu0 0.0
      %2617 = vmatpush1.msra.mxu0 0.0
      %2618 = vmatprep.subr.mxu0 0.0
      %2619 = vmatpush1.msra.mxu0 0.0
      %2620 = vmatprep.subr.mxu0 0.0
      %2621 = vmatpush1.msra.mxu0 0.0
      %2622 = vmatprep.subr.mxu0 0.0
      %2623 = vmatpush1.msra.mxu0 0.0
      %2624 = vmatprep.subr.mxu0 0.0
      %2625 = vmatpush1.msra.mxu0 0.0
      %2626 = vmatprep.subr.mxu0 0.0
      %2627 = vmatpush1.msra.mxu0 0.0
      %2628 = vmatprep.subr.mxu0 0.0
      %2629 = vmatpush1.msra.mxu0 0.0
      %2630 = vmatprep.subr.mxu0 0.0
      %2631 = vmatpush1.msra.mxu0 0.0
      %2632 = vmatprep.subr.mxu0 0.0
      %2633 = vmatpush1.msra.mxu0 0.0
      %2634 = vmatprep.subr.mxu0 0.0
      %2635 = vmatpush1.msra.mxu0 0.0
      %2636 = vmatprep.subr.mxu0 0.0
      %2637 = vmatpush1.msra.mxu0 0.0
      %2638 = vmatprep.subr.mxu0 0.0
      %2639 = vmatpush1.msra.mxu0 0.0
      %2640 = vmatprep.subr.mxu0 0.0
      %2641 = vmatpush1.msra.mxu0 0.0
      %2642 = vmatprep.subr.mxu0 0.0
      %2643 = vmatpush1.msra.mxu0 0.0
      %2644 = vmatprep.subr.mxu0 0.0
      %2645 = vmatpush1.msra.mxu0 0.0
      %2646 = vmatprep.subr.mxu0 0.0
      %2647 = vmatpush1.msra.mxu0 0.0
      %2648 = vmatprep.subr.mxu0 0.0
      %2649 = vmatpush1.msra.mxu0 0.0
      %2650 = vmatprep.subr.mxu0 0.0
      %2651 = vmatpush1.msra.mxu0 0.0
      %2652 = vmatprep.subr.mxu0 0.0
      %2653 = vmatpush1.msra.mxu0 0.0
      %2654 = vmatprep.subr.mxu0 0.0
      %2655 = vmatpush1.msra.mxu0 0.0
      %2656 = vmatprep.mubr.f32.mxu0 0.0
      %2657 = vmatmul.mubr.f32.gmra.mrb[0].mxu0 %v1452
      %v2658 = vpop.f32.mrb[0].mxu0
      %v2659 = vadd.f32 %v2093, %v2658
      %v2660 = vpop.f32.mrb[0].mxu0
      %2661 = vdwg.mxu0
      %vm2662 = vcmask 31744
      %v2664 = vsel %vm2662, %v870, 0
      %v2667 = vsel %vm2662, %v1521, 0
      %2669 = vmatprep.subr.mxu0 0.0
      %2670 = vmatpush1.xpose.msra.mxu0 %v2667
      %2671 = vmatprep.subr.mxu0 0.0
      %2672 = vmatpush1.xpose.msra.mxu0 0.0
      %2673 = vmatprep.subr.mxu0 0.0
      %2674 = vmatpush1.xpose.msra.mxu0 0.0
      %2675 = vmatprep.subr.mxu0 0.0
      %2676 = vmatpush1.xpose.msra.mxu0 0.0
      %2677 = vmatprep.subr.mxu0 0.0
      %2678 = vmatpush1.xpose.msra.mxu0 0.0
      %2679 = vmatprep.subr.mxu0 0.0
      %2680 = vmatpush1.xpose.msra.mxu0 0.0
      %2681 = vmatprep.subr.mxu0 0.0
      %2682 = vmatpush1.xpose.msra.mxu0 0.0
      %2683 = vmatprep.subr.mxu0 0.0
      %2684 = vmatpush1.xpose.msra.mxu0 0.0
      %2685 = vmatprep.subr.mxu0 0.0
      %2686 = vmatpush1.xpose.msra.mxu0 0.0
      %2687 = vmatprep.subr.mxu0 0.0
      %2688 = vmatpush1.xpose.msra.mxu0 0.0
      %2689 = vmatprep.subr.mxu0 0.0
      %2690 = vmatpush1.xpose.msra.mxu0 0.0
      %2691 = vmatprep.subr.mxu0 0.0
      %2692 = vmatpush1.xpose.msra.mxu0 0.0
      %2693 = vmatprep.subr.mxu0 0.0
      %2694 = vmatpush1.xpose.msra.mxu0 0.0
      %2695 = vmatprep.subr.mxu0 0.0
      %2696 = vmatpush1.xpose.msra.mxu0 0.0
      %2697 = vmatprep.subr.mxu0 0.0
      %2698 = vmatpush1.xpose.msra.mxu0 0.0
      %2699 = vmatprep.subr.mxu0 0.0
      %2700 = vmatpush1.xpose.msra.mxu0 0.0
      %2701 = vmatprep.subr.mxu0 0.0
      %2702 = vmatpush1.xpose.msra.mxu0 0.0
      %2703 = vmatprep.subr.mxu0 0.0
      %2704 = vmatpush1.xpose.msra.mxu0 0.0
      %2705 = vmatprep.subr.mxu0 0.0
      %2706 = vmatpush1.xpose.msra.mxu0 0.0
      %2707 = vmatprep.subr.mxu0 0.0
      %2708 = vmatpush1.xpose.msra.mxu0 0.0
      %2709 = vmatprep.subr.mxu0 0.0
      %2710 = vmatpush1.xpose.msra.mxu0 0.0
      %2711 = vmatprep.subr.mxu0 0.0
      %2712 = vmatpush1.xpose.msra.mxu0 0.0
      %2713 = vmatprep.subr.mxu0 0.0
      %2714 = vmatpush1.xpose.msra.mxu0 0.0
      %2715 = vmatprep.subr.mxu0 0.0
      %2716 = vmatpush1.xpose.msra.mxu0 0.0
      %2717 = vmatprep.subr.mxu0 0.0
      %2718 = vmatpush1.xpose.msra.mxu0 0.0
      %2719 = vmatprep.subr.mxu0 0.0
      %2720 = vmatpush1.xpose.msra.mxu0 0.0
      %2721 = vmatprep.subr.mxu0 0.0
      %2722 = vmatpush1.xpose.msra.mxu0 0.0
      %2723 = vmatprep.subr.mxu0 0.0
      %2724 = vmatpush1.xpose.msra.mxu0 0.0
      %2725 = vmatprep.subr.mxu0 0.0
      %2726 = vmatpush1.xpose.msra.mxu0 0.0
      %2727 = vmatprep.subr.mxu0 0.0
      %2728 = vmatpush1.xpose.msra.mxu0 0.0
      %2729 = vmatprep.subr.mxu0 0.0
      %2730 = vmatpush1.xpose.msra.mxu0 0.0
      %2731 = vmatprep.subr.mxu0 0.0
      %2732 = vmatpush1.xpose.msra.mxu0 0.0
      %2733 = vmatprep.mubr.f32.mxu0 0.0
      %2734 = vmatmul.mubr.f32.gmra.mrb[0].mxu0 %v2664
      %v2735 = vpop.f32.mrb[0].mxu0
      %v2736 = vadd.f32 0.0, %v2735
      %v2737 = vpop.f32.mrb[0].mxu0
      %2738 = vdwg.mxu0
      %v2740 = vsel %vm2662, %v940, 0
      %v2743 = vsel %vm2662, %v1591, 0
      %2745 = vmatprep.subr.mxu0 0.0
      %2746 = vmatpush1.xpose.msra.mxu0 %v2743
      %2747 = vmatprep.subr.mxu0 0.0
      %2748 = vmatpush1.xpose.msra.mxu0 0.0
      %2749 = vmatprep.subr.mxu0 0.0
      %2750 = vmatpush1.xpose.msra.mxu0 0.0
      %2751 = vmatprep.subr.mxu0 0.0
      %2752 = vmatpush1.xpose.msra.mxu0 0.0
      %2753 = vmatprep.subr.mxu0 0.0
      %2754 = vmatpush1.xpose.msra.mxu0 0.0
      %2755 = vmatprep.subr.mxu0 0.0
      %2756 = vmatpush1.xpose.msra.mxu0 0.0
      %2757 = vmatprep.subr.mxu0 0.0
      %2758 = vmatpush1.xpose.msra.mxu0 0.0
      %2759 = vmatprep.subr.mxu0 0.0
      %2760 = vmatpush1.xpose.msra.mxu0 0.0
      %2761 = vmatprep.subr.mxu0 0.0
      %2762 = vmatpush1.xpose.msra.mxu0 0.0
      %2763 = vmatprep.subr.mxu0 0.0
      %2764 = vmatpush1.xpose.msra.mxu0 0.0
      %2765 = vmatprep.subr.mxu0 0.0
      %2766 = vmatpush1.xpose.msra.mxu0 0.0
      %2767 = vmatprep.subr.mxu0 0.0
      %2768 = vmatpush1.xpose.msra.mxu0 0.0
      %2769 = vmatprep.subr.mxu0 0.0
      %2770 = vmatpush1.xpose.msra.mxu0 0.0
      %2771 = vmatprep.subr.mxu0 0.0
      %2772 = vmatpush1.xpose.msra.mxu0 0.0
      %2773 = vmatprep.subr.mxu0 0.0
      %2774 = vmatpush1.xpose.msra.mxu0 0.0
      %2775 = vmatprep.subr.mxu0 0.0
      %2776 = vmatpush1.xpose.msra.mxu0 0.0
      %2777 = vmatprep.subr.mxu0 0.0
      %2778 = vmatpush1.xpose.msra.mxu0 0.0
      %2779 = vmatprep.subr.mxu0 0.0
      %2780 = vmatpush1.xpose.msra.mxu0 0.0
      %2781 = vmatprep.subr.mxu0 0.0
      %2782 = vmatpush1.xpose.msra.mxu0 0.0
      %2783 = vmatprep.subr.mxu0 0.0
      %2784 = vmatpush1.xpose.msra.mxu0 0.0
      %2785 = vmatprep.subr.mxu0 0.0
      %2786 = vmatpush1.xpose.msra.mxu0 0.0
      %2787 = vmatprep.subr.mxu0 0.0
      %2788 = vmatpush1.xpose.msra.mxu0 0.0
      %2789 = vmatprep.subr.mxu0 0.0
      %2790 = vmatpush1.xpose.msra.mxu0 0.0
      %2791 = vmatprep.subr.mxu0 0.0
      %2792 = vmatpush1.xpose.msra.mxu0 0.0
      %2793 = vmatprep.subr.mxu0 0.0
      %2794 = vmatpush1.xpose.msra.mxu0 0.0
      %2795 = vmatprep.subr.mxu0 0.0
      %2796 = vmatpush1.xpose.msra.mxu0 0.0
      %2797 = vmatprep.subr.mxu0 0.0
      %2798 = vmatpush1.xpose.msra.mxu0 0.0
      %2799 = vmatprep.subr.mxu0 0.0
      %2800 = vmatpush1.xpose.msra.mxu0 0.0
      %2801 = vmatprep.subr.mxu0 0.0
      %2802 = vmatpush1.xpose.msra.mxu0 0.0
      %2803 = vmatprep.subr.mxu0 0.0
      %2804 = vmatpush1.xpose.msra.mxu0 0.0
      %2805 = vmatprep.subr.mxu0 0.0
      %2806 = vmatpush1.xpose.msra.mxu0 0.0
      %2807 = vmatprep.subr.mxu0 0.0
      %2808 = vmatpush1.xpose.msra.mxu0 0.0
      %2809 = vmatprep.mubr.f32.mxu0 0.0
      %2810 = vmatmul.mubr.f32.gmra.mrb[0].mxu0 %v2740
      %v2811 = vpop.f32.mrb[0].mxu0
      %v2812 = vadd.f32 0.0, %v2811
      %v2813 = vpop.f32.mrb[0].mxu0
      %2814 = vdwg.mxu0
      %v2816 = vsel %vm2662, %v1010, 0
      %v2819 = vsel %vm2662, %v1661, 0
      %2821 = vmatprep.subr.mxu0 0.0
      %2822 = vmatpush1.xpose.msra.mxu0 %v2819
      %2823 = vmatprep.subr.mxu0 0.0
      %2824 = vmatpush1.xpose.msra.mxu0 0.0
      %2825 = vmatprep.subr.mxu0 0.0
      %2826 = vmatpush1.xpose.msra.mxu0 0.0
      %2827 = vmatprep.subr.mxu0 0.0
      %2828 = vmatpush1.xpose.msra.mxu0 0.0
      %2829 = vmatprep.subr.mxu0 0.0
      %2830 = vmatpush1.xpose.msra.mxu0 0.0
      %2831 = vmatprep.subr.mxu0 0.0
      %2832 = vmatpush1.xpose.msra.mxu0 0.0
      %2833 = vmatprep.subr.mxu0 0.0
      %2834 = vmatpush1.xpose.msra.mxu0 0.0
      %2835 = vmatprep.subr.mxu0 0.0
      %2836 = vmatpush1.xpose.msra.mxu0 0.0
      %2837 = vmatprep.subr.mxu0 0.0
      %2838 = vmatpush1.xpose.msra.mxu0 0.0
      %2839 = vmatprep.subr.mxu0 0.0
      %2840 = vmatpush1.xpose.msra.mxu0 0.0
      %2841 = vmatprep.subr.mxu0 0.0
      %2842 = vmatpush1.xpose.msra.mxu0 0.0
      %2843 = vmatprep.subr.mxu0 0.0
      %2844 = vmatpush1.xpose.msra.mxu0 0.0
      %2845 = vmatprep.subr.mxu0 0.0
      %2846 = vmatpush1.xpose.msra.mxu0 0.0
      %2847 = vmatprep.subr.mxu0 0.0
      %2848 = vmatpush1.xpose.msra.mxu0 0.0
      %2849 = vmatprep.subr.mxu0 0.0
      %2850 = vmatpush1.xpose.msra.mxu0 0.0
      %2851 = vmatprep.subr.mxu0 0.0
      %2852 = vmatpush1.xpose.msra.mxu0 0.0
      %2853 = vmatprep.subr.mxu0 0.0
      %2854 = vmatpush1.xpose.msra.mxu0 0.0
      %2855 = vmatprep.subr.mxu0 0.0
      %2856 = vmatpush1.xpose.msra.mxu0 0.0
      %2857 = vmatprep.subr.mxu0 0.0
      %2858 = vmatpush1.xpose.msra.mxu0 0.0
      %2859 = vmatprep.subr.mxu0 0.0
      %2860 = vmatpush1.xpose.msra.mxu0 0.0
      %2861 = vmatprep.subr.mxu0 0.0
      %2862 = vmatpush1.xpose.msra.mxu0 0.0
      %2863 = vmatprep.subr.mxu0 0.0
      %2864 = vmatpush1.xpose.msra.mxu0 0.0
      %2865 = vmatprep.subr.mxu0 0.0
      %2866 = vmatpush1.xpose.msra.mxu0 0.0
      %2867 = vmatprep.subr.mxu0 0.0
      %2868 = vmatpush1.xpose.msra.mxu0 0.0
      %2869 = vmatprep.subr.mxu0 0.0
      %2870 = vmatpush1.xpose.msra.mxu0 0.0
      %2871 = vmatprep.subr.mxu0 0.0
      %2872 = vmatpush1.xpose.msra.mxu0 0.0
      %2873 = vmatprep.subr.mxu0 0.0
      %2874 = vmatpush1.xpose.msra.mxu0 0.0
      %2875 = vmatprep.subr.mxu0 0.0
      %2876 = vmatpush1.xpose.msra.mxu0 0.0
      %2877 = vmatprep.subr.mxu0 0.0
      %2878 = vmatpush1.xpose.msra.mxu0 0.0
      %2879 = vmatprep.subr.mxu0 0.0
      %2880 = vmatpush1.xpose.msra.mxu0 0.0
      %2881 = vmatprep.subr.mxu0 0.0
      %2882 = vmatpush1.xpose.msra.mxu0 0.0
      %2883 = vmatprep.subr.mxu0 0.0
      %2884 = vmatpush1.xpose.msra.mxu0 0.0
      %2885 = vmatprep.mubr.f32.mxu0 0.0
      %2886 = vmatmul.mubr.f32.gmra.mrb[0].mxu0 %v2816
      %v2887 = vpop.f32.mrb[0].mxu0
      %v2888 = vadd.f32 0.0, %v2887
      %v2889 = vpop.f32.mrb[0].mxu0
      %2890 = vdwg.mxu0
      %v2892 = vsel %vm2662, %v1080, 0
      %v2895 = vsel %vm2662, %v1731, 0
      %2897 = vmatprep.subr.mxu0 0.0
      %2898 = vmatpush1.xpose.msra.mxu0 %v2895
      %2899 = vmatprep.subr.mxu0 0.0
      %2900 = vmatpush1.xpose.msra.mxu0 0.0
      %2901 = vmatprep.subr.mxu0 0.0
      %2902 = vmatpush1.xpose.msra.mxu0 0.0
      %2903 = vmatprep.subr.mxu0 0.0
      %2904 = vmatpush1.xpose.msra.mxu0 0.0
      %2905 = vmatprep.subr.mxu0 0.0
      %2906 = vmatpush1.xpose.msra.mxu0 0.0
      %2907 = vmatprep.subr.mxu0 0.0
      %2908 = vmatpush1.xpose.msra.mxu0 0.0
      %2909 = vmatprep.subr.mxu0 0.0
      %2910 = vmatpush1.xpose.msra.mxu0 0.0
      %2911 = vmatprep.subr.mxu0 0.0
      %2912 = vmatpush1.xpose.msra.mxu0 0.0
      %2913 = vmatprep.subr.mxu0 0.0
      %2914 = vmatpush1.xpose.msra.mxu0 0.0
      %2915 = vmatprep.subr.mxu0 0.0
      %2916 = vmatpush1.xpose.msra.mxu0 0.0
      %2917 = vmatprep.subr.mxu0 0.0
      %2918 = vmatpush1.xpose.msra.mxu0 0.0
      %2919 = vmatprep.subr.mxu0 0.0
      %2920 = vmatpush1.xpose.msra.mxu0 0.0
      %2921 = vmatprep.subr.mxu0 0.0
      %2922 = vmatpush1.xpose.msra.mxu0 0.0
      %2923 = vmatprep.subr.mxu0 0.0
      %2924 = vmatpush1.xpose.msra.mxu0 0.0
      %2925 = vmatprep.subr.mxu0 0.0
      %2926 = vmatpush1.xpose.msra.mxu0 0.0
      %2927 = vmatprep.subr.mxu0 0.0
      %2928 = vmatpush1.xpose.msra.mxu0 0.0
      %2929 = vmatprep.subr.mxu0 0.0
      %2930 = vmatpush1.xpose.msra.mxu0 0.0
      %2931 = vmatprep.subr.mxu0 0.0
      %2932 = vmatpush1.xpose.msra.mxu0 0.0
      %2933 = vmatprep.subr.mxu0 0.0
      %2934 = vmatpush1.xpose.msra.mxu0 0.0
      %2935 = vmatprep.subr.mxu0 0.0
      %2936 = vmatpush1.xpose.msra.mxu0 0.0
      %2937 = vmatprep.subr.mxu0 0.0
      %2938 = vmatpush1.xpose.msra.mxu0 0.0
      %2939 = vmatprep.subr.mxu0 0.0
      %2940 = vmatpush1.xpose.msra.mxu0 0.0
      %2941 = vmatprep.subr.mxu0 0.0
      %2942 = vmatpush1.xpose.msra.mxu0 0.0
      %2943 = vmatprep.subr.mxu0 0.0
      %2944 = vmatpush1.xpose.msra.mxu0 0.0
      %2945 = vmatprep.subr.mxu0 0.0
      %2946 = vmatpush1.xpose.msra.mxu0 0.0
      %2947 = vmatprep.subr.mxu0 0.0
      %2948 = vmatpush1.xpose.msra.mxu0 0.0
      %2949 = vmatprep.subr.mxu0 0.0
      %2950 = vmatpush1.xpose.msra.mxu0 0.0
      %2951 = vmatprep.subr.mxu0 0.0
      %2952 = vmatpush1.xpose.msra.mxu0 0.0
      %2953 = vmatprep.subr.mxu0 0.0
      %2954 = vmatpush1.xpose.msra.mxu0 0.0
      %2955 = vmatprep.subr.mxu0 0.0
      %2956 = vmatpush1.xpose.msra.mxu0 0.0
      %2957 = vmatprep.subr.mxu0 0.0
      %2958 = vmatpush1.xpose.msra.mxu0 0.0
      %2959 = vmatprep.subr.mxu0 0.0
      %2960 = vmatpush1.xpose.msra.mxu0 0.0
      %2961 = vmatprep.mubr.f32.mxu0 0.0
      %2962 = vmatmul.mubr.f32.gmra.mrb[0].mxu0 %v2892
      %v2963 = vpop.f32.mrb[0].mxu0
      %v2964 = vadd.f32 0.0, %v2963
      %v2965 = vpop.f32.mrb[0].mxu0
      %2966 = vdwg.mxu0
      %v2968 = vsel %vm2662, %v1150, 0
      %v2971 = vsel %vm2662, %v1801, 0
      %2973 = vmatprep.subr.mxu0 0.0
      %2974 = vmatpush1.xpose.msra.mxu0 %v2971
      %2975 = vmatprep.subr.mxu0 0.0
      %2976 = vmatpush1.xpose.msra.mxu0 0.0
      %2977 = vmatprep.subr.mxu0 0.0
      %2978 = vmatpush1.xpose.msra.mxu0 0.0
      %2979 = vmatprep.subr.mxu0 0.0
      %2980 = vmatpush1.xpose.msra.mxu0 0.0
      %2981 = vmatprep.subr.mxu0 0.0
      %2982 = vmatpush1.xpose.msra.mxu0 0.0
      %2983 = vmatprep.subr.mxu0 0.0
      %2984 = vmatpush1.xpose.msra.mxu0 0.0
      %2985 = vmatprep.subr.mxu0 0.0
      %2986 = vmatpush1.xpose.msra.mxu0 0.0
      %2987 = vmatprep.subr.mxu0 0.0
      %2988 = vmatpush1.xpose.msra.mxu0 0.0
      %2989 = vmatprep.subr.mxu0 0.0
      %2990 = vmatpush1.xpose.msra.mxu0 0.0
      %2991 = vmatprep.subr.mxu0 0.0
      %2992 = vmatpush1.xpose.msra.mxu0 0.0
      %2993 = vmatprep.subr.mxu0 0.0
      %2994 = vmatpush1.xpose.msra.mxu0 0.0
      %2995 = vmatprep.subr.mxu0 0.0
      %2996 = vmatpush1.xpose.msra.mxu0 0.0
      %2997 = vmatprep.subr.mxu0 0.0
      %2998 = vmatpush1.xpose.msra.mxu0 0.0
      %2999 = vmatprep.subr.mxu0 0.0
      %3000 = vmatpush1.xpose.msra.mxu0 0.0
      %3001 = vmatprep.subr.mxu0 0.0
      %3002 = vmatpush1.xpose.msra.mxu0 0.0
      %3003 = vmatprep.subr.mxu0 0.0
      %3004 = vmatpush1.xpose.msra.mxu0 0.0
      %3005 = vmatprep.subr.mxu0 0.0
      %3006 = vmatpush1.xpose.msra.mxu0 0.0
      %3007 = vmatprep.subr.mxu0 0.0
      %3008 = vmatpush1.xpose.msra.mxu0 0.0
      %3009 = vmatprep.subr.mxu0 0.0
      %3010 = vmatpush1.xpose.msra.mxu0 0.0
      %3011 = vmatprep.subr.mxu0 0.0
      %3012 = vmatpush1.xpose.msra.mxu0 0.0
      %3013 = vmatprep.subr.mxu0 0.0
      %3014 = vmatpush1.xpose.msra.mxu0 0.0
      %3015 = vmatprep.subr.mxu0 0.0
      %3016 = vmatpush1.xpose.msra.mxu0 0.0
      %3017 = vmatprep.subr.mxu0 0.0
      %3018 = vmatpush1.xpose.msra.mxu0 0.0
      %3019 = vmatprep.subr.mxu0 0.0
      %3020 = vmatpush1.xpose.msra.mxu0 0.0
      %3021 = vmatprep.subr.mxu0 0.0
      %3022 = vmatpush1.xpose.msra.mxu0 0.0
      %3023 = vmatprep.subr.mxu0 0.0
      %3024 = vmatpush1.xpose.msra.mxu0 0.0
      %3025 = vmatprep.subr.mxu0 0.0
      %3026 = vmatpush1.xpose.msra.mxu0 0.0
      %3027 = vmatprep.subr.mxu0 0.0
      %3028 = vmatpush1.xpose.msra.mxu0 0.0
      %3029 = vmatprep.subr.mxu0 0.0
      %3030 = vmatpush1.xpose.msra.mxu0 0.0
      %3031 = vmatprep.subr.mxu0 0.0
      %3032 = vmatpush1.xpose.msra.mxu0 0.0
      %3033 = vmatprep.subr.mxu0 0.0
      %3034 = vmatpush1.xpose.msra.mxu0 0.0
      %3035 = vmatprep.subr.mxu0 0.0
      %3036 = vmatpush1.xpose.msra.mxu0 0.0
      %3037 = vmatprep.mubr.f32.mxu0 0.0
      %3038 = vmatmul.mubr.f32.gmra.mrb[0].mxu0 %v2968
      %v3039 = vpop.f32.mrb[0].mxu0
      %v3040 = vadd.f32 0.0, %v3039
      %v3041 = vpop.f32.mrb[0].mxu0
      %3042 = vdwg.mxu0
      %v3044 = vsel %vm2662, %v1220, 0
      %v3047 = vsel %vm2662, %v1871, 0
      %3049 = vmatprep.subr.mxu0 0.0
      %3050 = vmatpush1.xpose.msra.mxu0 %v3047
      %3051 = vmatprep.subr.mxu0 0.0
      %3052 = vmatpush1.xpose.msra.mxu0 0.0
      %3053 = vmatprep.subr.mxu0 0.0
      %3054 = vmatpush1.xpose.msra.mxu0 0.0
      %3055 = vmatprep.subr.mxu0 0.0
      %3056 = vmatpush1.xpose.msra.mxu0 0.0
      %3057 = vmatprep.subr.mxu0 0.0
      %3058 = vmatpush1.xpose.msra.mxu0 0.0
      %3059 = vmatprep.subr.mxu0 0.0
      %3060 = vmatpush1.xpose.msra.mxu0 0.0
      %3061 = vmatprep.subr.mxu0 0.0
      %3062 = vmatpush1.xpose.msra.mxu0 0.0
      %3063 = vmatprep.subr.mxu0 0.0
      %3064 = vmatpush1.xpose.msra.mxu0 0.0
      %3065 = vmatprep.subr.mxu0 0.0
      %3066 = vmatpush1.xpose.msra.mxu0 0.0
      %3067 = vmatprep.subr.mxu0 0.0
      %3068 = vmatpush1.xpose.msra.mxu0 0.0
      %3069 = vmatprep.subr.mxu0 0.0
      %3070 = vmatpush1.xpose.msra.mxu0 0.0
      %3071 = vmatprep.subr.mxu0 0.0
      %3072 = vmatpush1.xpose.msra.mxu0 0.0
      %3073 = vmatprep.subr.mxu0 0.0
      %3074 = vmatpush1.xpose.msra.mxu0 0.0
      %3075 = vmatprep.subr.mxu0 0.0
      %3076 = vmatpush1.xpose.msra.mxu0 0.0
      %3077 = vmatprep.subr.mxu0 0.0
      %3078 = vmatpush1.xpose.msra.mxu0 0.0
      %3079 = vmatprep.subr.mxu0 0.0
      %3080 = vmatpush1.xpose.msra.mxu0 0.0
      %3081 = vmatprep.subr.mxu0 0.0
      %3082 = vmatpush1.xpose.msra.mxu0 0.0
      %3083 = vmatprep.subr.mxu0 0.0
      %3084 = vmatpush1.xpose.msra.mxu0 0.0
      %3085 = vmatprep.subr.mxu0 0.0
      %3086 = vmatpush1.xpose.msra.mxu0 0.0
      %3087 = vmatprep.subr.mxu0 0.0
      %3088 = vmatpush1.xpose.msra.mxu0 0.0
      %3089 = vmatprep.subr.mxu0 0.0
      %3090 = vmatpush1.xpose.msra.mxu0 0.0
      %3091 = vmatprep.subr.mxu0 0.0
      %3092 = vmatpush1.xpose.msra.mxu0 0.0
      %3093 = vmatprep.subr.mxu0 0.0
      %3094 = vmatpush1.xpose.msra.mxu0 0.0
      %3095 = vmatprep.subr.mxu0 0.0
      %3096 = vmatpush1.xpose.msra.mxu0 0.0
      %3097 = vmatprep.subr.mxu0 0.0
      %3098 = vmatpush1.xpose.msra.mxu0 0.0
      %3099 = vmatprep.subr.mxu0 0.0
      %3100 = vmatpush1.xpose.msra.mxu0 0.0
      %3101 = vmatprep.subr.mxu0 0.0
      %3102 = vmatpush1.xpose.msra.mxu0 0.0
      %3103 = vmatprep.subr.mxu0 0.0
      %3104 = vmatpush1.xpose.msra.mxu0 0.0
      %3105 = vmatprep.subr.mxu0 0.0
      %3106 = vmatpush1.xpose.msra.mxu0 0.0
      %3107 = vmatprep.subr.mxu0 0.0
      %3108 = vmatpush1.xpose.msra.mxu0 0.0
      %3109 = vmatprep.subr.mxu0 0.0
      %3110 = vmatpush1.xpose.msra.mxu0 0.0
      %3111 = vmatprep.subr.mxu0 0.0
      %3112 = vmatpush1.xpose.msra.mxu0 0.0
      %3113 = vmatprep.mubr.f32.mxu0 0.0
      %3114 = vmatmul.mubr.f32.gmra.mrb[0].mxu0 %v3044
      %v3115 = vpop.f32.mrb[0].mxu0
      %v3116 = vadd.f32 0.0, %v3115
      %v3117 = vpop.f32.mrb[0].mxu0
      %3118 = vdwg.mxu0
      %v3120 = vsel %vm2662, %v1290, 0
      %v3123 = vsel %vm2662, %v1941, 0
      %3125 = vmatprep.subr.mxu0 0.0
      %3126 = vmatpush1.xpose.msra.mxu0 %v3123
      %3127 = vmatprep.subr.mxu0 0.0
      %3128 = vmatpush1.xpose.msra.mxu0 0.0
      %3129 = vmatprep.subr.mxu0 0.0
      %3130 = vmatpush1.xpose.msra.mxu0 0.0
      %3131 = vmatprep.subr.mxu0 0.0
      %3132 = vmatpush1.xpose.msra.mxu0 0.0
      %3133 = vmatprep.subr.mxu0 0.0
      %3134 = vmatpush1.xpose.msra.mxu0 0.0
      %3135 = vmatprep.subr.mxu0 0.0
      %3136 = vmatpush1.xpose.msra.mxu0 0.0
      %3137 = vmatprep.subr.mxu0 0.0
      %3138 = vmatpush1.xpose.msra.mxu0 0.0
      %3139 = vmatprep.subr.mxu0 0.0
      %3140 = vmatpush1.xpose.msra.mxu0 0.0
      %3141 = vmatprep.subr.mxu0 0.0
      %3142 = vmatpush1.xpose.msra.mxu0 0.0
      %3143 = vmatprep.subr.mxu0 0.0
      %3144 = vmatpush1.xpose.msra.mxu0 0.0
      %3145 = vmatprep.subr.mxu0 0.0
      %3146 = vmatpush1.xpose.msra.mxu0 0.0
      %3147 = vmatprep.subr.mxu0 0.0
      %3148 = vmatpush1.xpose.msra.mxu0 0.0
      %3149 = vmatprep.subr.mxu0 0.0
      %3150 = vmatpush1.xpose.msra.mxu0 0.0
      %3151 = vmatprep.subr.mxu0 0.0
      %3152 = vmatpush1.xpose.msra.mxu0 0.0
      %3153 = vmatprep.subr.mxu0 0.0
      %3154 = vmatpush1.xpose.msra.mxu0 0.0
      %3155 = vmatprep.subr.mxu0 0.0
      %3156 = vmatpush1.xpose.msra.mxu0 0.0
      %3157 = vmatprep.subr.mxu0 0.0
      %3158 = vmatpush1.xpose.msra.mxu0 0.0
      %3159 = vmatprep.subr.mxu0 0.0
      %3160 = vmatpush1.xpose.msra.mxu0 0.0
      %3161 = vmatprep.subr.mxu0 0.0
      %3162 = vmatpush1.xpose.msra.mxu0 0.0
      %3163 = vmatprep.subr.mxu0 0.0
      %3164 = vmatpush1.xpose.msra.mxu0 0.0
      %3165 = vmatprep.subr.mxu0 0.0
      %3166 = vmatpush1.xpose.msra.mxu0 0.0
      %3167 = vmatprep.subr.mxu0 0.0
      %3168 = vmatpush1.xpose.msra.mxu0 0.0
      %3169 = vmatprep.subr.mxu0 0.0
      %3170 = vmatpush1.xpose.msra.mxu0 0.0
      %3171 = vmatprep.subr.mxu0 0.0
      %3172 = vmatpush1.xpose.msra.mxu0 0.0
      %3173 = vmatprep.subr.mxu0 0.0
      %3174 = vmatpush1.xpose.msra.mxu0 0.0
      %3175 = vmatprep.subr.mxu0 0.0
      %3176 = vmatpush1.xpose.msra.mxu0 0.0
      %3177 = vmatprep.subr.mxu0 0.0
      %3178 = vmatpush1.xpose.msra.mxu0 0.0
      %3179 = vmatprep.subr.mxu0 0.0
      %3180 = vmatpush1.xpose.msra.mxu0 0.0
      %3181 = vmatprep.subr.mxu0 0.0
      %3182 = vmatpush1.xpose.msra.mxu0 0.0
      %3183 = vmatprep.subr.mxu0 0.0
      %3184 = vmatpush1.xpose.msra.mxu0 0.0
      %3185 = vmatprep.subr.mxu0 0.0
      %3186 = vmatpush1.xpose.msra.mxu0 0.0
      %3187 = vmatprep.subr.mxu0 0.0
      %3188 = vmatpush1.xpose.msra.mxu0 0.0
      %3189 = vmatprep.mubr.f32.mxu0 0.0
      %3190 = vmatmul.mubr.f32.gmra.mrb[0].mxu0 %v3120
      %v3191 = vpop.f32.mrb[0].mxu0
      %v3192 = vadd.f32 0.0, %v3191
      %v3193 = vpop.f32.mrb[0].mxu0
      %3194 = vdwg.mxu0
      %v3196 = vsel %vm2662, %v1360, 0
      %v3199 = vsel %vm2662, %v2011, 0
      %3201 = vmatprep.subr.mxu0 0.0
      %3202 = vmatpush1.xpose.msra.mxu0 %v3199
      %3203 = vmatprep.subr.mxu0 0.0
      %3204 = vmatpush1.xpose.msra.mxu0 0.0
      %3205 = vmatprep.subr.mxu0 0.0
      %3206 = vmatpush1.xpose.msra.mxu0 0.0
      %3207 = vmatprep.subr.mxu0 0.0
      %3208 = vmatpush1.xpose.msra.mxu0 0.0
      %3209 = vmatprep.subr.mxu0 0.0
      %3210 = vmatpush1.xpose.msra.mxu0 0.0
      %3211 = vmatprep.subr.mxu0 0.0
      %3212 = vmatpush1.xpose.msra.mxu0 0.0
      %3213 = vmatprep.subr.mxu0 0.0
      %3214 = vmatpush1.xpose.msra.mxu0 0.0
      %3215 = vmatprep.subr.mxu0 0.0
      %3216 = vmatpush1.xpose.msra.mxu0 0.0
      %3217 = vmatprep.subr.mxu0 0.0
      %3218 = vmatpush1.xpose.msra.mxu0 0.0
      %3219 = vmatprep.subr.mxu0 0.0
      %3220 = vmatpush1.xpose.msra.mxu0 0.0
      %3221 = vmatprep.subr.mxu0 0.0
      %3222 = vmatpush1.xpose.msra.mxu0 0.0
      %3223 = vmatprep.subr.mxu0 0.0
      %3224 = vmatpush1.xpose.msra.mxu0 0.0
      %3225 = vmatprep.subr.mxu0 0.0
      %3226 = vmatpush1.xpose.msra.mxu0 0.0
      %3227 = vmatprep.subr.mxu0 0.0
      %3228 = vmatpush1.xpose.msra.mxu0 0.0
      %3229 = vmatprep.subr.mxu0 0.0
      %3230 = vmatpush1.xpose.msra.mxu0 0.0
      %3231 = vmatprep.subr.mxu0 0.0
      %3232 = vmatpush1.xpose.msra.mxu0 0.0
      %3233 = vmatprep.subr.mxu0 0.0
      %3234 = vmatpush1.xpose.msra.mxu0 0.0
      %3235 = vmatprep.subr.mxu0 0.0
      %3236 = vmatpush1.xpose.msra.mxu0 0.0
      %3237 = vmatprep.subr.mxu0 0.0
      %3238 = vmatpush1.xpose.msra.mxu0 0.0
      %3239 = vmatprep.subr.mxu0 0.0
      %3240 = vmatpush1.xpose.msra.mxu0 0.0
      %3241 = vmatprep.subr.mxu0 0.0
      %3242 = vmatpush1.xpose.msra.mxu0 0.0
      %3243 = vmatprep.subr.mxu0 0.0
      %3244 = vmatpush1.xpose.msra.mxu0 0.0
      %3245 = vmatprep.subr.mxu0 0.0
      %3246 = vmatpush1.xpose.msra.mxu0 0.0
      %3247 = vmatprep.subr.mxu0 0.0
      %3248 = vmatpush1.xpose.msra.mxu0 0.0
      %3249 = vmatprep.subr.mxu0 0.0
      %3250 = vmatpush1.xpose.msra.mxu0 0.0
      %3251 = vmatprep.subr.mxu0 0.0
      %3252 = vmatpush1.xpose.msra.mxu0 0.0
      %3253 = vmatprep.subr.mxu0 0.0
      %3254 = vmatpush1.xpose.msra.mxu0 0.0
      %3255 = vmatprep.subr.mxu0 0.0
      %3256 = vmatpush1.xpose.msra.mxu0 0.0
      %3257 = vmatprep.subr.mxu0 0.0
      %3258 = vmatpush1.xpose.msra.mxu0 0.0
      %3259 = vmatprep.subr.mxu0 0.0
      %3260 = vmatpush1.xpose.msra.mxu0 0.0
      %3261 = vmatprep.subr.mxu0 0.0
      %3262 = vmatpush1.xpose.msra.mxu0 0.0
      %3263 = vmatprep.subr.mxu0 0.0
      %3264 = vmatpush1.xpose.msra.mxu0 0.0
      %3265 = vmatprep.mubr.f32.mxu0 0.0
      %3266 = vmatmul.mubr.f32.gmra.mrb[0].mxu0 %v3196
      %v3267 = vpop.f32.mrb[0].mxu0
      %v3268 = vadd.f32 0.0, %v3267
      %v3269 = vpop.f32.mrb[0].mxu0
      %3270 = vdwg.mxu0
      %v3271 = vmul.f32 %v2736, 0.5
      %v3272 = vmul.f32 %v2812, 0.5
      %v3273 = vmul.f32 %v2888, 0.5
      %v3274 = vmul.f32 %v2964, 0.5
      %v3275 = vmul.f32 %v3040, 0.5
      %v3276 = vmul.f32 %v3116, 0.5
      %v3277 = vmul.f32 %v3192, 0.5
      %v3278 = vmul.f32 %v3268, 0.5
      %vm3279 = vcmask 64512
      %v3280 = vsel %vm3279, %v3271, -inf
      %3281 = vmax.xlane.f32.xlu0 %v3280
      %v3282 = vpop.xlane.xlu0 %3281
      %v3283 = vsel %vm3279, %v3272, -inf
      %3284 = vmax.xlane.f32.xlu0 %v3283
      %v3285 = vpop.xlane.xlu0 %3284
      %v3286 = vsel %vm3279, %v3273, -inf
      %3287 = vmax.xlane.f32.xlu0 %v3286
      %v3288 = vpop.xlane.xlu0 %3287
      %v3289 = vsel %vm3279, %v3274, -inf
      %3290 = vmax.xlane.f32.xlu0 %v3289
      %v3291 = vpop.xlane.xlu0 %3290
      %v3292 = vsel %vm3279, %v3275, -inf
      %3293 = vmax.xlane.f32.xlu0 %v3292
      %v3294 = vpop.xlane.xlu0 %3293
      %v3295 = vsel %vm3279, %v3276, -inf
      %3296 = vmax.xlane.f32.xlu0 %v3295
      %v3297 = vpop.xlane.xlu0 %3296
      %v3298 = vsel %vm3279, %v3277, -inf
      %3299 = vmax.xlane.f32.xlu0 %v3298
      %v3300 = vpop.xlane.xlu0 %3299
      %v3301 = vsel %vm3279, %v3278, -inf
      %3302 = vmax.xlane.f32.xlu0 %v3301
      %v3303 = vpop.xlane.xlu0 %3302
      %v3304 = vsub.f32 %v3271, %v3282
      %v3305 = vsub.f32 %v3272, %v3285
      %v3306 = vsub.f32 %v3273, %v3288
      %v3307 = vsub.f32 %v3274, %v3291
      %v3308 = vsub.f32 %v3275, %v3294
      %v3309 = vsub.f32 %v3276, %v3297
      %v3310 = vsub.f32 %v3277, %v3300
      %v3311 = vsub.f32 %v3278, %v3303
      %v3312 = vmul.f32 %v3304, 1.442695
      %v3313 = vpow.pop %v3312
      %v3314 = vmul.f32 %v3305, 1.442695
      %v3315 = vpow.pop %v3314
      %v3316 = vmul.f32 %v3306, 1.442695
      %v3317 = vpow.pop %v3316
      %v3318 = vmul.f32 %v3307, 1.442695
      %v3319 = vpow.pop %v3318
      %v3320 = vmul.f32 %v3308, 1.442695
      %v3321 = vpow.pop %v3320
      %v3322 = vmul.f32 %v3309, 1.442695
      %v3323 = vpow.pop %v3322
      %v3324 = vmul.f32 %v3310, 1.442695
      %v3325 = vpow.pop %v3324
      %v3326 = vmul.f32 %v3311, 1.442695
      %v3327 = vpow.pop %v3326
      %v3328 = vsel %vm3279, %v3313, 0.0
      %3329 = vadd.xlane.f32.xlu0 %v3328
      %v3330 = vpop.xlane.xlu0 %3329
      %v3331 = vsel %vm3279, %v3315, 0.0
      %3332 = vadd.xlane.f32.xlu0 %v3331
      %v3333 = vpop.xlane.xlu0 %3332
      %v3334 = vsel %vm3279, %v3317, 0.0
      %3335 = vadd.xlane.f32.xlu0 %v3334
      %v3336 = vpop.xlane.xlu0 %3335
      %v3337 = vsel %vm3279, %v3319, 0.0
      %3338 = vadd.xlane.f32.xlu0 %v3337
      %v3339 = vpop.xlane.xlu0 %3338
      %v3340 = vsel %vm3279, %v3321, 0.0
      %3341 = vadd.xlane.f32.xlu0 %v3340
      %v3342 = vpop.xlane.xlu0 %3341
      %v3343 = vsel %vm3279, %v3323, 0.0
      %3344 = vadd.xlane.f32.xlu0 %v3343
      %v3345 = vpop.xlane.xlu0 %3344
      %v3346 = vsel %vm3279, %v3325, 0.0
      %3347 = vadd.xlane.f32.xlu0 %v3346
      %v3348 = vpop.xlane.xlu0 %3347
      %v3349 = vsel %vm3279, %v3327, 0.0
      %3350 = vadd.xlane.f32.xlu0 %v3349
      %v3351 = vpop.xlane.xlu0 %3350
      %v3352 = vrcp.pop %v3330
      %v3353 = vrcp.pop %v3333
      %v3354 = vrcp.pop %v3336
      %v3355 = vrcp.pop %v3339
      %v3356 = vrcp.pop %v3342
      %v3357 = vrcp.pop %v3345
      %v3358 = vrcp.pop %v3348
      %v3359 = vrcp.pop %v3351
      %v3360 = vmul.f32 %v3313, %v3352
      %v3361 = vmul.f32 %v3315, %v3353
      %v3362 = vmul.f32 %v3317, %v3354
      %v3363 = vmul.f32 %v3319, %v3355
      %v3364 = vmul.f32 %v3321, %v3356
      %v3365 = vmul.f32 %v3323, %v3357
      %v3366 = vmul.f32 %v3325, %v3358
      %v3367 = vmul.f32 %v3327, %v3359
      %v3368 = vsel %vm3279, %v3360, 0.0
      %v3369 = vsel %vm3279, %v3361, 0.0
      %v3370 = vadd.f32 %v3368, %v3369
      %v3371 = vsel %vm3279, %v3362, 0.0
      %v3372 = vadd.f32 %v3370, %v3371
      %v3373 = vsel %vm3279, %v3363, 0.0
      %v3374 = vadd.f32 %v3372, %v3373
      %v3375 = vsel %vm3279, %v3364, 0.0
      %v3376 = vadd.f32 %v3374, %v3375
      %v3377 = vsel %vm3279, %v3365, 0.0
      %v3378 = vadd.f32 %v3376, %v3377
      %v3379 = vsel %vm3279, %v3366, 0.0
      %v3380 = vadd.f32 %v3378, %v3379
      %v3381 = vsel %vm3279, %v3367, 0.0
      %v3382 = vadd.f32 %v3380, %v3381
      %v3383 = vrcp.pop 8.0
      %v3384 = vmul.f32 %v3382, %v3383
      %3385 = vst.msk [vmem:[%s708] sm:$0xff] %vm3279, %v3384
      %v3387 = vsel %vm3279, %v3360, 0
      %3389 = vmatprep.subr.mxu0 0.0
      %3390 = vmatpush1.msra.mxu0 %v2169
      %3391 = vmatprep.subr.mxu0 0.0
      %3392 = vmatpush1.msra.mxu0 0.0
      %3393 = vmatprep.subr.mxu0 0.0
      %3394 = vmatpush1.msra.mxu0 0.0
      %3395 = vmatprep.subr.mxu0 0.0
      %3396 = vmatpush1.msra.mxu0 0.0
      %3397 = vmatprep.subr.mxu0 0.0
      %3398 = vmatpush1.msra.mxu0 0.0
      %3399 = vmatprep.subr.mxu0 0.0
      %3400 = vmatpush1.msra.mxu0 0.0
      %3401 = vmatprep.subr.mxu0 0.0
      %3402 = vmatpush1.msra.mxu0 0.0
      %3403 = vmatprep.subr.mxu0 0.0
      %3404 = vmatpush1.msra.mxu0 0.0
      %3405 = vmatprep.subr.mxu0 0.0
      %3406 = vmatpush1.msra.mxu0 0.0
      %3407 = vmatprep.subr.mxu0 0.0
      %3408 = vmatpush1.msra.mxu0 0.0
      %3409 = vmatprep.subr.mxu0 0.0
      %3410 = vmatpush1.msra.mxu0 0.0
      %3411 = vmatprep.subr.mxu0 0.0
      %3412 = vmatpush1.msra.mxu0 0.0
      %3413 = vmatprep.subr.mxu0 0.0
      %3414 = vmatpush1.msra.mxu0 0.0
      %3415 = vmatprep.subr.mxu0 0.0
      %3416 = vmatpush1.msra.mxu0 0.0
      %3417 = vmatprep.subr.mxu0 0.0
      %3418 = vmatpush1.msra.mxu0 0.0
      %3419 = vmatprep.subr.mxu0 0.0
      %3420 = vmatpush1.msra.mxu0 0.0
      %3421 = vmatprep.subr.mxu0 0.0
      %3422 = vmatpush1.msra.mxu0 0.0
      %3423 = vmatprep.subr.mxu0 0.0
      %3424 = vmatpush1.msra.mxu0 0.0
      %3425 = vmatprep.subr.mxu0 0.0
      %3426 = vmatpush1.msra.mxu0 0.0
      %3427 = vmatprep.subr.mxu0 0.0
      %3428 = vmatpush1.msra.mxu0 0.0
      %3429 = vmatprep.subr.mxu0 0.0
      %3430 = vmatpush1.msra.mxu0 0.0
      %3431 = vmatprep.subr.mxu0 0.0
      %3432 = vmatpush1.msra.mxu0 0.0
      %3433 = vmatprep.subr.mxu0 0.0
      %3434 = vmatpush1.msra.mxu0 0.0
      %3435 = vmatprep.subr.mxu0 0.0
      %3436 = vmatpush1.msra.mxu0 0.0
      %3437 = vmatprep.subr.mxu0 0.0
      %3438 = vmatpush1.msra.mxu0 0.0
      %3439 = vmatprep.subr.mxu0 0.0
      %3440 = vmatpush1.msra.mxu0 0.0
      %3441 = vmatprep.subr.mxu0 0.0
      %3442 = vmatpush1.msra.mxu0 0.0
      %3443 = vmatprep.subr.mxu0 0.0
      %3444 = vmatpush1.msra.mxu0 0.0
      %3445 = vmatprep.subr.mxu0 0.0
      %3446 = vmatpush1.msra.mxu0 0.0
      %3447 = vmatprep.subr.mxu0 0.0
      %3448 = vmatpush1.msra.mxu0 0.0
      %3449 = vmatprep.subr.mxu0 0.0
      %3450 = vmatpush1.msra.mxu0 0.0
      %3451 = vmatprep.subr.mxu0 0.0
      %3452 = vmatpush1.msra.mxu0 0.0
      %3453 = vmatprep.mubr.f32.mxu0 0.0
      %3454 = vmatmul.mubr.f32.gmra.mrb[0].mxu0 %v3387
      %v3455 = vpop.f32.mrb[0].mxu0
      %v3456 = vadd.f32 0.0, %v3455
      %v3457 = vpop.f32.mrb[0].mxu0
      %3458 = vdwg.mxu0
      %v3460 = vsel %vm3279, %v3361, 0
      %3462 = vmatprep.subr.mxu0 0.0
      %3463 = vmatpush1.msra.mxu0 %v2239
      %3464 = vmatprep.subr.mxu0 0.0
      %3465 = vmatpush1.msra.mxu0 0.0
      %3466 = vmatprep.subr.mxu0 0.0
      %3467 = vmatpush1.msra.mxu0 0.0
      %3468 = vmatprep.subr.mxu0 0.0
      %3469 = vmatpush1.msra.mxu0 0.0
      %3470 = vmatprep.subr.mxu0 0.0
      %3471 = vmatpush1.msra.mxu0 0.0
      %3472 = vmatprep.subr.mxu0 0.0
      %3473 = vmatpush1.msra.mxu0 0.0
      %3474 = vmatprep.subr.mxu0 0.0
      %3475 = vmatpush1.msra.mxu0 0.0
      %3476 = vmatprep.subr.mxu0 0.0
      %3477 = vmatpush1.msra.mxu0 0.0
      %3478 = vmatprep.subr.mxu0 0.0
      %3479 = vmatpush1.msra.mxu0 0.0
      %3480 = vmatprep.subr.mxu0 0.0
      %3481 = vmatpush1.msra.mxu0 0.0
      %3482 = vmatprep.subr.mxu0 0.0
      %3483 = vmatpush1.msra.mxu0 0.0
      %3484 = vmatprep.subr.mxu0 0.0
      %3485 = vmatpush1.msra.mxu0 0.0
      %3486 = vmatprep.subr.mxu0 0.0
      %3487 = vmatpush1.msra.mxu0 0.0
      %3488 = vmatprep.subr.mxu0 0.0
      %3489 = vmatpush1.msra.mxu0 0.0
      %3490 = vmatprep.subr.mxu0 0.0
      %3491 = vmatpush1.msra.mxu0 0.0
      %3492 = vmatprep.subr.mxu0 0.0
      %3493 = vmatpush1.msra.mxu0 0.0
      %3494 = vmatprep.subr.mxu0 0.0
      %3495 = vmatpush1.msra.mxu0 0.0
      %3496 = vmatprep.subr.mxu0 0.0
      %3497 = vmatpush1.msra.mxu0 0.0
      %3498 = vmatprep.subr.mxu0 0.0
      %3499 = vmatpush1.msra.mxu0 0.0
      %3500 = vmatprep.subr.mxu0 0.0
      %3501 = vmatpush1.msra.mxu0 0.0
      %3502 = vmatprep.subr.mxu0 0.0
      %3503 = vmatpush1.msra.mxu0 0.0
      %3504 = vmatprep.subr.mxu0 0.0
      %3505 = vmatpush1.msra.mxu0 0.0
      %3506 = vmatprep.subr.mxu0 0.0
      %3507 = vmatpush1.msra.mxu0 0.0
      %3508 = vmatprep.subr.mxu0 0.0
      %3509 = vmatpush1.msra.mxu0 0.0
      %3510 = vmatprep.subr.mxu0 0.0
      %3511 = vmatpush1.msra.mxu0 0.0
      %3512 = vmatprep.subr.mxu0 0.0
      %3513 = vmatpush1.msra.mxu0 0.0
      %3514 = vmatprep.subr.mxu0 0.0
      %3515 = vmatpush1.msra.mxu0 0.0
      %3516 = vmatprep.subr.mxu0 0.0
      %3517 = vmatpush1.msra.mxu0 0.0
      %3518 = vmatprep.subr.mxu0 0.0
      %3519 = vmatpush1.msra.mxu0 0.0
      %3520 = vmatprep.subr.mxu0 0.0
      %3521 = vmatpush1.msra.mxu0 0.0
      %3522 = vmatprep.subr.mxu0 0.0
      %3523 = vmatpush1.msra.mxu0 0.0
      %3524 = vmatprep.subr.mxu0 0.0
      %3525 = vmatpush1.msra.mxu0 0.0
      %3526 = vmatprep.mubr.f32.mxu0 0.0
      %3527 = vmatmul.mubr.f32.gmra.mrb[0].mxu0 %v3460
      %v3528 = vpop.f32.mrb[0].mxu0
      %v3529 = vadd.f32 0.0, %v3528
      %v3530 = vpop.f32.mrb[0].mxu0
      %3531 = vdwg.mxu0
      %v3533 = vsel %vm3279, %v3362, 0
      %3535 = vmatprep.subr.mxu0 0.0
      %3536 = vmatpush1.msra.mxu0 %v2309
      %3537 = vmatprep.subr.mxu0 0.0
      %3538 = vmatpush1.msra.mxu0 0.0
      %3539 = vmatprep.subr.mxu0 0.0
      %3540 = vmatpush1.msra.mxu0 0.0
      %3541 = vmatprep.subr.mxu0 0.0
      %3542 = vmatpush1.msra.mxu0 0.0
      %3543 = vmatprep.subr.mxu0 0.0
      %3544 = vmatpush1.msra.mxu0 0.0
      %3545 = vmatprep.subr.mxu0 0.0
      %3546 = vmatpush1.msra.mxu0 0.0
      %3547 = vmatprep.subr.mxu0 0.0
      %3548 = vmatpush1.msra.mxu0 0.0
      %3549 = vmatprep.subr.mxu0 0.0
      %3550 = vmatpush1.msra.mxu0 0.0
      %3551 = vmatprep.subr.mxu0 0.0
      %3552 = vmatpush1.msra.mxu0 0.0
      %3553 = vmatprep.subr.mxu0 0.0
      %3554 = vmatpush1.msra.mxu0 0.0
      %3555 = vmatprep.subr.mxu0 0.0
      %3556 = vmatpush1.msra.mxu0 0.0
      %3557 = vmatprep.subr.mxu0 0.0
      %3558 = vmatpush1.msra.mxu0 0.0
      %3559 = vmatprep.subr.mxu0 0.0
      %3560 = vmatpush1.msra.mxu0 0.0
      %3561 = vmatprep.subr.mxu0 0.0
      %3562 = vmatpush1.msra.mxu0 0.0
      %3563 = vmatprep.subr.mxu0 0.0
      %3564 = vmatpush1.msra.mxu0 0.0
      %3565 = vmatprep.subr.mxu0 0.0
      %3566 = vmatpush1.msra.mxu0 0.0
      %3567 = vmatprep.subr.mxu0 0.0
      %3568 = vmatpush1.msra.mxu0 0.0
      %3569 = vmatprep.subr.mxu0 0.0
      %3570 = vmatpush1.msra.mxu0 0.0
      %3571 = vmatprep.subr.mxu0 0.0
      %3572 = vmatpush1.msra.mxu0 0.0
      %3573 = vmatprep.subr.mxu0 0.0
      %3574 = vmatpush1.msra.mxu0 0.0
      %3575 = vmatprep.subr.mxu0 0.0
      %3576 = vmatpush1.msra.mxu0 0.0
      %3577 = vmatprep.subr.mxu0 0.0
      %3578 = vmatpush1.msra.mxu0 0.0
      %3579 = vmatprep.subr.mxu0 0.0
      %3580 = vmatpush1.msra.mxu0 0.0
      %3581 = vmatprep.subr.mxu0 0.0
      %3582 = vmatpush1.msra.mxu0 0.0
      %3583 = vmatprep.subr.mxu0 0.0
      %3584 = vmatpush1.msra.mxu0 0.0
      %3585 = vmatprep.subr.mxu0 0.0
      %3586 = vmatpush1.msra.mxu0 0.0
      %3587 = vmatprep.subr.mxu0 0.0
      %3588 = vmatpush1.msra.mxu0 0.0
      %3589 = vmatprep.subr.mxu0 0.0
      %3590 = vmatpush1.msra.mxu0 0.0
      %3591 = vmatprep.subr.mxu0 0.0
      %3592 = vmatpush1.msra.mxu0 0.0
      %3593 = vmatprep.subr.mxu0 0.0
      %3594 = vmatpush1.msra.mxu0 0.0
      %3595 = vmatprep.subr.mxu0 0.0
      %3596 = vmatpush1.msra.mxu0 0.0
      %3597 = vmatprep.subr.mxu0 0.0
      %3598 = vmatpush1.msra.mxu0 0.0
      %3599 = vmatprep.mubr.f32.mxu0 0.0
      %3600 = vmatmul.mubr.f32.gmra.mrb[0].mxu0 %v3533
      %v3601 = vpop.f32.mrb[0].mxu0
      %v3602 = vadd.f32 0.0, %v3601
      %v3603 = vpop.f32.mrb[0].mxu0
      %3604 = vdwg.mxu0
      %v3606 = vsel %vm3279, %v3363, 0
      %3608 = vmatprep.subr.mxu0 0.0
      %3609 = vmatpush1.msra.mxu0 %v2379
      %3610 = vmatprep.subr.mxu0 0.0
      %3611 = vmatpush1.msra.mxu0 0.0
      %3612 = vmatprep.subr.mxu0 0.0
      %3613 = vmatpush1.msra.mxu0 0.0
      %3614 = vmatprep.subr.mxu0 0.0
      %3615 = vmatpush1.msra.mxu0 0.0
      %3616 = vmatprep.subr.mxu0 0.0
      %3617 = vmatpush1.msra.mxu0 0.0
      %3618 = vmatprep.subr.mxu0 0.0
      %3619 = vmatpush1.msra.mxu0 0.0
      %3620 = vmatprep.subr.mxu0 0.0
      %3621 = vmatpush1.msra.mxu0 0.0
      %3622 = vmatprep.subr.mxu0 0.0
      %3623 = vmatpush1.msra.mxu0 0.0
      %3624 = vmatprep.subr.mxu0 0.0
      %3625 = vmatpush1.msra.mxu0 0.0
      %3626 = vmatprep.subr.mxu0 0.0
      %3627 = vmatpush1.msra.mxu0 0.0
      %3628 = vmatprep.subr.mxu0 0.0
      %3629 = vmatpush1.msra.mxu0 0.0
      %3630 = vmatprep.subr.mxu0 0.0
      %3631 = vmatpush1.msra.mxu0 0.0
      %3632 = vmatprep.subr.mxu0 0.0
      %3633 = vmatpush1.msra.mxu0 0.0
      %3634 = vmatprep.subr.mxu0 0.0
      %3635 = vmatpush1.msra.mxu0 0.0
      %3636 = vmatprep.subr.mxu0 0.0
      %3637 = vmatpush1.msra.mxu0 0.0
      %3638 = vmatprep.subr.mxu0 0.0
      %3639 = vmatpush1.msra.mxu0 0.0
      %3640 = vmatprep.subr.mxu0 0.0
      %3641 = vmatpush1.msra.mxu0 0.0
      %3642 = vmatprep.subr.mxu0 0.0
      %3643 = vmatpush1.msra.mxu0 0.0
      %3644 = vmatprep.subr.mxu0 0.0
      %3645 = vmatpush1.msra.mxu0 0.0
      %3646 = vmatprep.subr.mxu0 0.0
      %3647 = vmatpush1.msra.mxu0 0.0
      %3648 = vmatprep.subr.mxu0 0.0
      %3649 = vmatpush1.msra.mxu0 0.0
      %3650 = vmatprep.subr.mxu0 0.0
      %3651 = vmatpush1.msra.mxu0 0.0
      %3652 = vmatprep.subr.mxu0 0.0
      %3653 = vmatpush1.msra.mxu0 0.0
      %3654 = vmatprep.subr.mxu0 0.0
      %3655 = vmatpush1.msra.mxu0 0.0
      %3656 = vmatprep.subr.mxu0 0.0
      %3657 = vmatpush1.msra.mxu0 0.0
      %3658 = vmatprep.subr.mxu0 0.0
      %3659 = vmatpush1.msra.mxu0 0.0
      %3660 = vmatprep.subr.mxu0 0.0
      %3661 = vmatpush1.msra.mxu0 0.0
      %3662 = vmatprep.subr.mxu0 0.0
      %3663 = vmatpush1.msra.mxu0 0.0
      %3664 = vmatprep.subr.mxu0 0.0
      %3665 = vmatpush1.msra.mxu0 0.0
      %3666 = vmatprep.subr.mxu0 0.0
      %3667 = vmatpush1.msra.mxu0 0.0
      %3668 = vmatprep.subr.mxu0 0.0
      %3669 = vmatpush1.msra.mxu0 0.0
      %3670 = vmatprep.subr.mxu0 0.0
      %3671 = vmatpush1.msra.mxu0 0.0
      %3672 = vmatprep.mubr.f32.mxu0 0.0
      %3673 = vmatmul.mubr.f32.gmra.mrb[0].mxu0 %v3606
      %v3674 = vpop.f32.mrb[0].mxu0
      %v3675 = vadd.f32 0.0, %v3674
      %v3676 = vpop.f32.mrb[0].mxu0
      %3677 = vdwg.mxu0
      %v3679 = vsel %vm3279, %v3364, 0
      %3681 = vmatprep.subr.mxu0 0.0
      %3682 = vmatpush1.msra.mxu0 %v2449
      %3683 = vmatprep.subr.mxu0 0.0
      %3684 = vmatpush1.msra.mxu0 0.0
      %3685 = vmatprep.subr.mxu0 0.0
      %3686 = vmatpush1.msra.mxu0 0.0
      %3687 = vmatprep.subr.mxu0 0.0
      %3688 = vmatpush1.msra.mxu0 0.0
      %3689 = vmatprep.subr.mxu0 0.0
      %3690 = vmatpush1.msra.mxu0 0.0
      %3691 = vmatprep.subr.mxu0 0.0
      %3692 = vmatpush1.msra.mxu0 0.0
      %3693 = vmatprep.subr.mxu0 0.0
      %3694 = vmatpush1.msra.mxu0 0.0
      %3695 = vmatprep.subr.mxu0 0.0
      %3696 = vmatpush1.msra.mxu0 0.0
      %3697 = vmatprep.subr.mxu0 0.0
      %3698 = vmatpush1.msra.mxu0 0.0
      %3699 = vmatprep.subr.mxu0 0.0
      %3700 = vmatpush1.msra.mxu0 0.0
      %3701 = vmatprep.subr.mxu0 0.0
      %3702 = vmatpush1.msra.mxu0 0.0
      %3703 = vmatprep.subr.mxu0 0.0
      %3704 = vmatpush1.msra.mxu0 0.0
      %3705 = vmatprep.subr.mxu0 0.0
      %3706 = vmatpush1.msra.mxu0 0.0
      %3707 = vmatprep.subr.mxu0 0.0
      %3708 = vmatpush1.msra.mxu0 0.0
      %3709 = vmatprep.subr.mxu0 0.0
      %3710 = vmatpush1.msra.mxu0 0.0
      %3711 = vmatprep.subr.mxu0 0.0
      %3712 = vmatpush1.msra.mxu0 0.0
      %3713 = vmatprep.subr.mxu0 0.0
      %3714 = vmatpush1.msra.mxu0 0.0
      %3715 = vmatprep.subr.mxu0 0.0
      %3716 = vmatpush1.msra.mxu0 0.0
      %3717 = vmatprep.subr.mxu0 0.0
      %3718 = vmatpush1.msra.mxu0 0.0
      %3719 = vmatprep.subr.mxu0 0.0
      %3720 = vmatpush1.msra.mxu0 0.0
      %3721 = vmatprep.subr.mxu0 0.0
      %3722 = vmatpush1.msra.mxu0 0.0
      %3723 = vmatprep.subr.mxu0 0.0
      %3724 = vmatpush1.msra.mxu0 0.0
      %3725 = vmatprep.subr.mxu0 0.0
      %3726 = vmatpush1.msra.mxu0 0.0
      %3727 = vmatprep.subr.mxu0 0.0
      %3728 = vmatpush1.msra.mxu0 0.0
      %3729 = vmatprep.subr.mxu0 0.0
      %3730 = vmatpush1.msra.mxu0 0.0
      %3731 = vmatprep.subr.mxu0 0.0
      %3732 = vmatpush1.msra.mxu0 0.0
      %3733 = vmatprep.subr.mxu0 0.0
      %3734 = vmatpush1.msra.mxu0 0.0
      %3735 = vmatprep.subr.mxu0 0.0
      %3736 = vmatpush1.msra.mxu0 0.0
      %3737 = vmatprep.subr.mxu0 0.0
      %3738 = vmatpush1.msra.mxu0 0.0
      %3739 = vmatprep.subr.mxu0 0.0
      %3740 = vmatpush1.msra.mxu0 0.0
      %3741 = vmatprep.subr.mxu0 0.0
      %3742 = vmatpush1.msra.mxu0 0.0
      %3743 = vmatprep.subr.mxu0 0.0
      %3744 = vmatpush1.msra.mxu0 0.0
      %3745 = vmatprep.mubr.f32.mxu0 0.0
      %3746 = vmatmul.mubr.f32.gmra.mrb[0].mxu0 %v3679
      %v3747 = vpop.f32.mrb[0].mxu0
      %v3748 = vadd.f32 0.0, %v3747
      %v3749 = vpop.f32.mrb[0].mxu0
      %3750 = vdwg.mxu0
      %v3752 = vsel %vm3279, %v3365, 0
      %3754 = vmatprep.subr.mxu0 0.0
      %3755 = vmatpush1.msra.mxu0 %v2519
      %3756 = vmatprep.subr.mxu0 0.0
      %3757 = vmatpush1.msra.mxu0 0.0
      %3758 = vmatprep.subr.mxu0 0.0
      %3759 = vmatpush1.msra.mxu0 0.0
      %3760 = vmatprep.subr.mxu0 0.0
      %3761 = vmatpush1.msra.mxu0 0.0
      %3762 = vmatprep.subr.mxu0 0.0
      %3763 = vmatpush1.msra.mxu0 0.0
      %3764 = vmatprep.subr.mxu0 0.0
      %3765 = vmatpush1.msra.mxu0 0.0
      %3766 = vmatprep.subr.mxu0 0.0
      %3767 = vmatpush1.msra.mxu0 0.0
      %3768 = vmatprep.subr.mxu0 0.0
      %3769 = vmatpush1.msra.mxu0 0.0
      %3770 = vmatprep.subr.mxu0 0.0
      %3771 = vmatpush1.msra.mxu0 0.0
      %3772 = vmatprep.subr.mxu0 0.0
      %3773 = vmatpush1.msra.mxu0 0.0
      %3774 = vmatprep.subr.mxu0 0.0
      %3775 = vmatpush1.msra.mxu0 0.0
      %3776 = vmatprep.subr.mxu0 0.0
      %3777 = vmatpush1.msra.mxu0 0.0
      %3778 = vmatprep.subr.mxu0 0.0
      %3779 = vmatpush1.msra.mxu0 0.0
      %3780 = vmatprep.subr.mxu0 0.0
      %3781 = vmatpush1.msra.mxu0 0.0
      %3782 = vmatprep.subr.mxu0 0.0
      %3783 = vmatpush1.msra.mxu0 0.0
      %3784 = vmatprep.subr.mxu0 0.0
      %3785 = vmatpush1.msra.mxu0 0.0
      %3786 = vmatprep.subr.mxu0 0.0
      %3787 = vmatpush1.msra.mxu0 0.0
      %3788 = vmatprep.subr.mxu0 0.0
      %3789 = vmatpush1.msra.mxu0 0.0
      %3790 = vmatprep.subr.mxu0 0.0
      %3791 = vmatpush1.msra.mxu0 0.0
      %3792 = vmatprep.subr.mxu0 0.0
      %3793 = vmatpush1.msra.mxu0 0.0
      %3794 = vmatprep.subr.mxu0 0.0
      %3795 = vmatpush1.msra.mxu0 0.0
      %3796 = vmatprep.subr.mxu0 0.0
      %3797 = vmatpush1.msra.mxu0 0.0
      %3798 = vmatprep.subr.mxu0 0.0
      %3799 = vmatpush1.msra.mxu0 0.0
      %3800 = vmatprep.subr.mxu0 0.0
      %3801 = vmatpush1.msra.mxu0 0.0
      %3802 = vmatprep.subr.mxu0 0.0
      %3803 = vmatpush1.msra.mxu0 0.0
      %3804 = vmatprep.subr.mxu0 0.0
      %3805 = vmatpush1.msra.mxu0 0.0
      %3806 = vmatprep.subr.mxu0 0.0
      %3807 = vmatpush1.msra.mxu0 0.0
      %3808 = vmatprep.subr.mxu0 0.0
      %3809 = vmatpush1.msra.mxu0 0.0
      %3810 = vmatprep.subr.mxu0 0.0
      %3811 = vmatpush1.msra.mxu0 0.0
      %3812 = vmatprep.subr.mxu0 0.0
      %3813 = vmatpush1.msra.mxu0 0.0
      %3814 = vmatprep.subr.mxu0 0.0
      %3815 = vmatpush1.msra.mxu0 0.0
      %3816 = vmatprep.subr.mxu0 0.0
      %3817 = vmatpush1.msra.mxu0 0.0
      %3818 = vmatprep.mubr.f32.mxu0 0.0
      %3819 = vmatmul.mubr.f32.gmra.mrb[0].mxu0 %v3752
      %v3820 = vpop.f32.mrb[0].mxu0
      %v3821 = vadd.f32 0.0, %v3820
      %v3822 = vpop.f32.mrb[0].mxu0
      %3823 = vdwg.mxu0
      %v3825 = vsel %vm3279, %v3366, 0
      %3827 = vmatprep.subr.mxu0 0.0
      %3828 = vmatpush1.msra.mxu0 %v2589
      %3829 = vmatprep.subr.mxu0 0.0
      %3830 = vmatpush1.msra.mxu0 0.0
      %3831 = vmatprep.subr.mxu0 0.0
      %3832 = vmatpush1.msra.mxu0 0.0
      %3833 = vmatprep.subr.mxu0 0.0
      %3834 = vmatpush1.msra.mxu0 0.0
      %3835 = vmatprep.subr.mxu0 0.0
      %3836 = vmatpush1.msra.mxu0 0.0
      %3837 = vmatprep.subr.mxu0 0.0
      %3838 = vmatpush1.msra.mxu0 0.0
      %3839 = vmatprep.subr.mxu0 0.0
      %3840 = vmatpush1.msra.mxu0 0.0
      %3841 = vmatprep.subr.mxu0 0.0
      %3842 = vmatpush1.msra.mxu0 0.0
      %3843 = vmatprep.subr.mxu0 0.0
      %3844 = vmatpush1.msra.mxu0 0.0
      %3845 = vmatprep.subr.mxu0 0.0
      %3846 = vmatpush1.msra.mxu0 0.0
      %3847 = vmatprep.subr.mxu0 0.0
      %3848 = vmatpush1.msra.mxu0 0.0
      %3849 = vmatprep.subr.mxu0 0.0
      %3850 = vmatpush1.msra.mxu0 0.0
      %3851 = vmatprep.subr.mxu0 0.0
      %3852 = vmatpush1.msra.mxu0 0.0
      %3853 = vmatprep.subr.mxu0 0.0
      %3854 = vmatpush1.msra.mxu0 0.0
      %3855 = vmatprep.subr.mxu0 0.0
      %3856 = vmatpush1.msra.mxu0 0.0
      %3857 = vmatprep.subr.mxu0 0.0
      %3858 = vmatpush1.msra.mxu0 0.0
      %3859 = vmatprep.subr.mxu0 0.0
      %3860 = vmatpush1.msra.mxu0 0.0
      %3861 = vmatprep.subr.mxu0 0.0
      %3862 = vmatpush1.msra.mxu0 0.0
      %3863 = vmatprep.subr.mxu0 0.0
      %3864 = vmatpush1.msra.mxu0 0.0
      %3865 = vmatprep.subr.mxu0 0.0
      %3866 = vmatpush1.msra.mxu0 0.0
      %3867 = vmatprep.subr.mxu0 0.0
      %3868 = vmatpush1.msra.mxu0 0.0
      %3869 = vmatprep.subr.mxu0 0.0
      %3870 = vmatpush1.msra.mxu0 0.0
      %3871 = vmatprep.subr.mxu0 0.0
      %3872 = vmatpush1.msra.mxu0 0.0
      %3873 = vmatprep.subr.mxu0 0.0
      %3874 = vmatpush1.msra.mxu0 0.0
      %3875 = vmatprep.subr.mxu0 0.0
      %3876 = vmatpush1.msra.mxu0 0.0
      %3877 = vmatprep.subr.mxu0 0.0
      %3878 = vmatpush1.msra.mxu0 0.0
      %3879 = vmatprep.subr.mxu0 0.0
      %3880 = vmatpush1.msra.mxu0 0.0
      %3881 = vmatprep.subr.mxu0 0.0
      %3882 = vmatpush1.msra.mxu0 0.0
      %3883 = vmatprep.subr.mxu0 0.0
      %3884 = vmatpush1.msra.mxu0 0.0
      %3885 = vmatprep.subr.mxu0 0.0
      %3886 = vmatpush1.msra.mxu0 0.0
      %3887 = vmatprep.subr.mxu0 0.0
      %3888 = vmatpush1.msra.mxu0 0.0
      %3889 = vmatprep.subr.mxu0 0.0
      %3890 = vmatpush1.msra.mxu0 0.0
      %3891 = vmatprep.mubr.f32.mxu0 0.0
      %3892 = vmatmul.mubr.f32.gmra.mrb[0].mxu0 %v3825
      %v3893 = vpop.f32.mrb[0].mxu0
      %v3894 = vadd.f32 0.0, %v3893
      %v3895 = vpop.f32.mrb[0].mxu0
      %3896 = vdwg.mxu0
      %v3898 = vsel %vm3279, %v3367, 0
      %3900 = vmatprep.subr.mxu0 0.0
      %3901 = vmatpush1.msra.mxu0 %v2659
      %3902 = vmatprep.subr.mxu0 0.0
      %3903 = vmatpush1.msra.mxu0 0.0
      %3904 = vmatprep.subr.mxu0 0.0
      %3905 = vmatpush1.msra.mxu0 0.0
      %3906 = vmatprep.subr.mxu0 0.0
      %3907 = vmatpush1.msra.mxu0 0.0
      %3908 = vmatprep.subr.mxu0 0.0
      %3909 = vmatpush1.msra.mxu0 0.0
      %3910 = vmatprep.subr.mxu0 0.0
      %3911 = vmatpush1.msra.mxu0 0.0
      %3912 = vmatprep.subr.mxu0 0.0
      %3913 = vmatpush1.msra.mxu0 0.0
      %3914 = vmatprep.subr.mxu0 0.0
      %3915 = vmatpush1.msra.mxu0 0.0
      %3916 = vmatprep.subr.mxu0 0.0
      %3917 = vmatpush1.msra.mxu0 0.0
      %3918 = vmatprep.subr.mxu0 0.0
      %3919 = vmatpush1.msra.mxu0 0.0
      %3920 = vmatprep.subr.mxu0 0.0
      %3921 = vmatpush1.msra.mxu0 0.0
      %3922 = vmatprep.subr.mxu0 0.0
      %3923 = vmatpush1.msra.mxu0 0.0
      %3924 = vmatprep.subr.mxu0 0.0
      %3925 = vmatpush1.msra.mxu0 0.0
      %3926 = vmatprep.subr.mxu0 0.0
      %3927 = vmatpush1.msra.mxu0 0.0
      %3928 = vmatprep.subr.mxu0 0.0
      %3929 = vmatpush1.msra.mxu0 0.0
      %3930 = vmatprep.subr.mxu0 0.0
      %3931 = vmatpush1.msra.mxu0 0.0
      %3932 = vmatprep.subr.mxu0 0.0
      %3933 = vmatpush1.msra.mxu0 0.0
      %3934 = vmatprep.subr.mxu0 0.0
      %3935 = vmatpush1.msra.mxu0 0.0
      %3936 = vmatprep.subr.mxu0 0.0
      %3937 = vmatpush1.msra.mxu0 0.0
      %3938 = vmatprep.subr.mxu0 0.0
      %3939 = vmatpush1.msra.mxu0 0.0
      %3940 = vmatprep.subr.mxu0 0.0
      %3941 = vmatpush1.msra.mxu0 0.0
      %3942 = vmatprep.subr.mxu0 0.0
      %3943 = vmatpush1.msra.mxu0 0.0
      %3944 = vmatprep.subr.mxu0 0.0
      %3945 = vmatpush1.msra.mxu0 0.0
      %3946 = vmatprep.subr.mxu0 0.0
      %3947 = vmatpush1.msra.mxu0 0.0
      %3948 = vmatprep.subr.mxu0 0.0
      %3949 = vmatpush1.msra.mxu0 0.0
      %3950 = vmatprep.subr.mxu0 0.0
      %3951 = vmatpush1.msra.mxu0 0.0
      %3952 = vmatprep.subr.mxu0 0.0
      %3953 = vmatpush1.msra.mxu0 0.0
      %3954 = vmatprep.subr.mxu0 0.0
      %3955 = vmatpush1.msra.mxu0 0.0
      %3956 = vmatprep.subr.mxu0 0.0
      %3957 = vmatpush1.msra.mxu0 0.0
      %3958 = vmatprep.subr.mxu0 0.0
      %3959 = vmatpush1.msra.mxu0 0.0
      %3960 = vmatprep.subr.mxu0 0.0
      %3961 = vmatpush1.msra.mxu0 0.0
      %3962 = vmatprep.subr.mxu0 0.0
      %3963 = vmatpush1.msra.mxu0 0.0
      %3964 = vmatprep.mubr.f32.mxu0 0.0
      %3965 = vmatmul.mubr.f32.gmra.mrb[0].mxu0 %v3898
      %v3966 = vpop.f32.mrb[0].mxu0
      %v3967 = vadd.f32 0.0, %v3966
      %v3968 = vpop.f32.mrb[0].mxu0
      %3969 = vdwg.mxu0
      %v3970 = vld [vmem:[%s679] sm:$0xf]
      %v3971 = vld [vmem:[%s679 + $0x4] sm:$0xf]
      %v3972 = vld [vmem:[%s679 + $0x8] sm:$0xf]
      %v3973 = vld [vmem:[%s679 + $0xc] sm:$0xf]
      %v3974 = vld [vmem:[%s679 + $0x10] sm:$0xf]
      %v3975 = vld [vmem:[%s679 + $0x14] sm:$0xf]
      %v3976 = vld [vmem:[%s679 + $0x18] sm:$0xf]
      %v3977 = vld [vmem:[%s679 + $0x1c] sm:$0xf]
      %v3979 = vsel %vm2662, %v3456, 0
      %vm3981 = vcmask 1043456
      %v3983 = vsel %vm3981, %v3970, 0
      %3985 = vmatprep.subr.mxu0 0.0
      %3986 = vmatpush1.msra.mxu0 %v3983
      %3987 = vmatprep.subr.mxu0 0.0
      %3988 = vmatpush1.msra.mxu0 0.0
      %3989 = vmatprep.subr.mxu0 0.0
      %3990 = vmatpush1.msra.mxu0 0.0
      %3991 = vmatprep.subr.mxu0 0.0
      %3992 = vmatpush1.msra.mxu0 0.0
      %3993 = vmatprep.subr.mxu0 0.0
      %3994 = vmatpush1.msra.mxu0 0.0
      %3995 = vmatprep.subr.mxu0 0.0
      %3996 = vmatpush1.msra.mxu0 0.0
      %3997 = vmatprep.subr.mxu0 0.0
      %3998 = vmatpush1.msra.mxu0 0.0
      %3999 = vmatprep.subr.mxu0 0.0
      %4000 = vmatpush1.msra.mxu0 0.0
      %4001 = vmatprep.subr.mxu0 0.0
      %4002 = vmatpush1.msra.mxu0 0.0
      %4003 = vmatprep.subr.mxu0 0.0
      %4004 = vmatpush1.msra.mxu0 0.0
      %4005 = vmatprep.subr.mxu0 0.0
      %4006 = vmatpush1.msra.mxu0 0.0
      %4007 = vmatprep.subr.mxu0 0.0
      %4008 = vmatpush1.msra.mxu0 0.0
      %4009 = vmatprep.subr.mxu0 0.0
      %4010 = vmatpush1.msra.mxu0 0.0
      %4011 = vmatprep.subr.mxu0 0.0
      %4012 = vmatpush1.msra.mxu0 0.0
      %4013 = vmatprep.subr.mxu0 0.0
      %4014 = vmatpush1.msra.mxu0 0.0
      %4015 = vmatprep.subr.mxu0 0.0
      %4016 = vmatpush1.msra.mxu0 0.0
      %4017 = vmatprep.subr.mxu0 0.0
      %4018 = vmatpush1.msra.mxu0 0.0
      %4019 = vmatprep.subr.mxu0 0.0
      %4020 = vmatpush1.msra.mxu0 0.0
      %4021 = vmatprep.subr.mxu0 0.0
      %4022 = vmatpush1.msra.mxu0 0.0
      %4023 = vmatprep.subr.mxu0 0.0
      %4024 = vmatpush1.msra.mxu0 0.0
      %4025 = vmatprep.subr.mxu0 0.0
      %4026 = vmatpush1.msra.mxu0 0.0
      %4027 = vmatprep.subr.mxu0 0.0
      %4028 = vmatpush1.msra.mxu0 0.0
      %4029 = vmatprep.subr.mxu0 0.0
      %4030 = vmatpush1.msra.mxu0 0.0
      %4031 = vmatprep.subr.mxu0 0.0
      %4032 = vmatpush1.msra.mxu0 0.0
      %4033 = vmatprep.subr.mxu0 0.0
      %4034 = vmatpush1.msra.mxu0 0.0
      %4035 = vmatprep.subr.mxu0 0.0
      %4036 = vmatpush1.msra.mxu0 0.0
      %4037 = vmatprep.subr.mxu0 0.0
      %4038 = vmatpush1.msra.mxu0 0.0
      %4039 = vmatprep.subr.mxu0 0.0
      %4040 = vmatpush1.msra.mxu0 0.0
      %4041 = vmatprep.subr.mxu0 0.0
      %4042 = vmatpush1.msra.mxu0 0.0
      %4043 = vmatprep.subr.mxu0 0.0
      %4044 = vmatpush1.msra.mxu0 0.0
      %4045 = vmatprep.subr.mxu0 0.0
      %4046 = vmatpush1.msra.mxu0 0.0
      %4047 = vmatprep.subr.mxu0 0.0
      %4048 = vmatpush1.msra.mxu0 0.0
      %4049 = vmatprep.mubr.f32.mxu0 0.0
      %4050 = vmatmul.mubr.f32.gmra.mrb[0].mxu0 %v3979
      %v4051 = vpop.f32.mrb[0].mxu0
      %v4052 = vadd.f32 0.0, %v4051
      %v4053 = vpop.f32.mrb[0].mxu0
      %4054 = vdwg.mxu0
      %v4056 = vsel %vm2662, %v3529, 0
      %v4059 = vsel %vm3981, %v3971, 0
      %4061 = vmatprep.subr.mxu0 0.0
      %4062 = vmatpush1.msra.mxu0 %v4059
      %4063 = vmatprep.subr.mxu0 0.0
      %4064 = vmatpush1.msra.mxu0 0.0
      %4065 = vmatprep.subr.mxu0 0.0
      %4066 = vmatpush1.msra.mxu0 0.0
      %4067 = vmatprep.subr.mxu0 0.0
      %4068 = vmatpush1.msra.mxu0 0.0
      %4069 = vmatprep.subr.mxu0 0.0
      %4070 = vmatpush1.msra.mxu0 0.0
      %4071 = vmatprep.subr.mxu0 0.0
      %4072 = vmatpush1.msra.mxu0 0.0
      %4073 = vmatprep.subr.mxu0 0.0
      %4074 = vmatpush1.msra.mxu0 0.0
      %4075 = vmatprep.subr.mxu0 0.0
      %4076 = vmatpush1.msra.mxu0 0.0
      %4077 = vmatprep.subr.mxu0 0.0
      %4078 = vmatpush1.msra.mxu0 0.0
      %4079 = vmatprep.subr.mxu0 0.0
      %4080 = vmatpush1.msra.mxu0 0.0
      %4081 = vmatprep.subr.mxu0 0.0
      %4082 = vmatpush1.msra.mxu0 0.0
      %4083 = vmatprep.subr.mxu0 0.0
      %4084 = vmatpush1.msra.mxu0 0.0
      %4085 = vmatprep.subr.mxu0 0.0
      %4086 = vmatpush1.msra.mxu0 0.0
      %4087 = vmatprep.subr.mxu0 0.0
      %4088 = vmatpush1.msra.mxu0 0.0
      %4089 = vmatprep.subr.mxu0 0.0
      %4090 = vmatpush1.msra.mxu0 0.0
      %4091 = vmatprep.subr.mxu0 0.0
      %4092 = vmatpush1.msra.mxu0 0.0
      %4093 = vmatprep.subr.mxu0 0.0
      %4094 = vmatpush1.msra.mxu0 0.0
      %4095 = vmatprep.subr.mxu0 0.0
      %4096 = vmatpush1.msra.mxu0 0.0
      %4097 = vmatprep.subr.mxu0 0.0
      %4098 = vmatpush1.msra.mxu0 0.0
      %4099 = vmatprep.subr.mxu0 0.0
      %4100 = vmatpush1.msra.mxu0 0.0
      %4101 = vmatprep.subr.mxu0 0.0
      %4102 = vmatpush1.msra.mxu0 0.0
      %4103 = vmatprep.subr.mxu0 0.0
      %4104 = vmatpush1.msra.mxu0 0.0
      %4105 = vmatprep.subr.mxu0 0.0
      %4106 = vmatpush1.msra.mxu0 0.0
      %4107 = vmatprep.subr.mxu0 0.0
      %4108 = vmatpush1.msra.mxu0 0.0
      %4109 = vmatprep.subr.mxu0 0.0
      %4110 = vmatpush1.msra.mxu0 0.0
      %4111 = vmatprep.subr.mxu0 0.0
      %4112 = vmatpush1.msra.mxu0 0.0
      %4113 = vmatprep.subr.mxu0 0.0
      %4114 = vmatpush1.msra.mxu0 0.0
      %4115 = vmatprep.subr.mxu0 0.0
      %4116 = vmatpush1.msra.mxu0 0.0
      %4117 = vmatprep.subr.mxu0 0.0
      %4118 = vmatpush1.msra.mxu0 0.0
      %4119 = vmatprep.subr.mxu0 0.0
      %4120 = vmatpush1.msra.mxu0 0.0
      %4121 = vmatprep.subr.mxu0 0.0
      %4122 = vmatpush1.msra.mxu0 0.0
      %4123 = vmatprep.subr.mxu0 0.0
      %4124 = vmatpush1.msra.mxu0 0.0
      %4125 = vmatprep.mubr.f32.mxu0 0.0
      %4126 = vmatmul.mubr.f32.gmra.mrb[0].mxu0 %v4056
      %v4127 = vpop.f32.mrb[0].mxu0
      %v4128 = vadd.f32 0.0, %v4127
      %v4129 = vpop.f32.mrb[0].mxu0
      %4130 = vdwg.mxu0
      %v4132 = vsel %vm2662, %v3602, 0
      %v4135 = vsel %vm3981, %v3972, 0
      %4137 = vmatprep.subr.mxu0 0.0
      %4138 = vmatpush1.msra.mxu0 %v4135
      %4139 = vmatprep.subr.mxu0 0.0
      %4140 = vmatpush1.msra.mxu0 0.0
      %4141 = vmatprep.subr.mxu0 0.0
      %4142 = vmatpush1.msra.mxu0 0.0
      %4143 = vmatprep.subr.mxu0 0.0
      %4144 = vmatpush1.msra.mxu0 0.0
      %4145 = vmatprep.subr.mxu0 0.0
      %4146 = vmatpush1.msra.mxu0 0.0
      %4147 = vmatprep.subr.mxu0 0.0
      %4148 = vmatpush1.msra.mxu0 0.0
      %4149 = vmatprep.subr.mxu0 0.0
      %4150 = vmatpush1.msra.mxu0 0.0
      %4151 = vmatprep.subr.mxu0 0.0
      %4152 = vmatpush1.msra.mxu0 0.0
      %4153 = vmatprep.subr.mxu0 0.0
      %4154 = vmatpush1.msra.mxu0 0.0
      %4155 = vmatprep.subr.mxu0 0.0
      %4156 = vmatpush1.msra.mxu0 0.0
      %4157 = vmatprep.subr.mxu0 0.0
      %4158 = vmatpush1.msra.mxu0 0.0
      %4159 = vmatprep.subr.mxu0 0.0
      %4160 = vmatpush1.msra.mxu0 0.0
      %4161 = vmatprep.subr.mxu0 0.0
      %4162 = vmatpush1.msra.mxu0 0.0
      %4163 = vmatprep.subr.mxu0 0.0
      %4164 = vmatpush1.msra.mxu0 0.0
      %4165 = vmatprep.subr.mxu0 0.0
      %4166 = vmatpush1.msra.mxu0 0.0
      %4167 = vmatprep.subr.mxu0 0.0
      %4168 = vmatpush1.msra.mxu0 0.0
      %4169 = vmatprep.subr.mxu0 0.0
      %4170 = vmatpush1.msra.mxu0 0.0
      %4171 = vmatprep.subr.mxu0 0.0
      %4172 = vmatpush1.msra.mxu0 0.0
      %4173 = vmatprep.subr.mxu0 0.0
      %4174 = vmatpush1.msra.mxu0 0.0
      %4175 = vmatprep.subr.mxu0 0.0
      %4176 = vmatpush1.msra.mxu0 0.0
      %4177 = vmatprep.subr.mxu0 0.0
      %4178 = vmatpush1.msra.mxu0 0.0
      %4179 = vmatprep.subr.mxu0 0.0
      %4180 = vmatpush1.msra.mxu0 0.0
      %4181 = vmatprep.subr.mxu0 0.0
      %4182 = vmatpush1.msra.mxu0 0.0
      %4183 = vmatprep.subr.mxu0 0.0
      %4184 = vmatpush1.msra.mxu0 0.0
      %4185 = vmatprep.subr.mxu0 0.0
      %4186 = vmatpush1.msra.mxu0 0.0
      %4187 = vmatprep.subr.mxu0 0.0
      %4188 = vmatpush1.msra.mxu0 0.0
      %4189 = vmatprep.subr.mxu0 0.0
      %4190 = vmatpush1.msra.mxu0 0.0
      %4191 = vmatprep.subr.mxu0 0.0
      %4192 = vmatpush1.msra.mxu0 0.0
      %4193 = vmatprep.subr.mxu0 0.0
      %4194 = vmatpush1.msra.mxu0 0.0
      %4195 = vmatprep.subr.mxu0 0.0
      %4196 = vmatpush1.msra.mxu0 0.0
      %4197 = vmatprep.subr.mxu0 0.0
      %4198 = vmatpush1.msra.mxu0 0.0
      %4199 = vmatprep.subr.mxu0 0.0
      %4200 = vmatpush1.msra.mxu0 0.0
      %4201 = vmatprep.mubr.f32.mxu0 0.0
      %4202 = vmatmul.mubr.f32.gmra.mrb[0].mxu0 %v4132
      %v4203 = vpop.f32.mrb[0].mxu0
      %v4204 = vadd.f32 0.0, %v4203
      %v4205 = vpop.f32.mrb[0].mxu0
      %4206 = vdwg.mxu0
      %v4208 = vsel %vm2662, %v3675, 0
      %v4211 = vsel %vm3981, %v3973, 0
      %4213 = vmatprep.subr.mxu0 0.0
      %4214 = vmatpush1.msra.mxu0 %v4211
      %4215 = vmatprep.subr.mxu0 0.0
      %4216 = vmatpush1.msra.mxu0 0.0
      %4217 = vmatprep.subr.mxu0 0.0
      %4218 = vmatpush1.msra.mxu0 0.0
      %4219 = vmatprep.subr.mxu0 0.0
      %4220 = vmatpush1.msra.mxu0 0.0
      %4221 = vmatprep.subr.mxu0 0.0
      %4222 = vmatpush1.msra.mxu0 0.0
      %4223 = vmatprep.subr.mxu0 0.0
      %4224 = vmatpush1.msra.mxu0 0.0
      %4225 = vmatprep.subr.mxu0 0.0
      %4226 = vmatpush1.msra.mxu0 0.0
      %4227 = vmatprep.subr.mxu0 0.0
      %4228 = vmatpush1.msra.mxu0 0.0
      %4229 = vmatprep.subr.mxu0 0.0
      %4230 = vmatpush1.msra.mxu0 0.0
      %4231 = vmatprep.subr.mxu0 0.0
      %4232 = vmatpush1.msra.mxu0 0.0
      %4233 = vmatprep.subr.mxu0 0.0
      %4234 = vmatpush1.msra.mxu0 0.0
      %4235 = vmatprep.subr.mxu0 0.0
      %4236 = vmatpush1.msra.mxu0 0.0
      %4237 = vmatprep.subr.mxu0 0.0
      %4238 = vmatpush1.msra.mxu0 0.0
      %4239 = vmatprep.subr.mxu0 0.0
      %4240 = vmatpush1.msra.mxu0 0.0
      %4241 = vmatprep.subr.mxu0 0.0
      %4242 = vmatpush1.msra.mxu0 0.0
      %4243 = vmatprep.subr.mxu0 0.0
      %4244 = vmatpush1.msra.mxu0 0.0
      %4245 = vmatprep.subr.mxu0 0.0
      %4246 = vmatpush1.msra.mxu0 0.0
      %4247 = vmatprep.subr.mxu0 0.0
      %4248 = vmatpush1.msra.mxu0 0.0
      %4249 = vmatprep.subr.mxu0 0.0
      %4250 = vmatpush1.msra.mxu0 0.0
      %4251 = vmatprep.subr.mxu0 0.0
      %4252 = vmatpush1.msra.mxu0 0.0
      %4253 = vmatprep.subr.mxu0 0.0
      %4254 = vmatpush1.msra.mxu0 0.0
      %4255 = vmatprep.subr.mxu0 0.0
      %4256 = vmatpush1.msra.mxu0 0.0
      %4257 = vmatprep.subr.mxu0 0.0
      %4258 = vmatpush1.msra.mxu0 0.0
      %4259 = vmatprep.subr.mxu0 0.0
      %4260 = vmatpush1.msra.mxu0 0.0
      %4261 = vmatprep.subr.mxu0 0.0
      %4262 = vmatpush1.msra.mxu0 0.0
      %4263 = vmatprep.subr.mxu0 0.0
      %4264 = vmatpush1.msra.mxu0 0.0
      %4265 = vmatprep.subr.mxu0 0.0
      %4266 = vmatpush1.msra.mxu0 0.0
      %4267 = vmatprep.subr.mxu0 0.0
      %4268 = vmatpush1.msra.mxu0 0.0
      %4269 = vmatprep.subr.mxu0 0.0
      %4270 = vmatpush1.msra.mxu0 0.0
      %4271 = vmatprep.subr.mxu0 0.0
      %4272 = vmatpush1.msra.mxu0 0.0
      %4273 = vmatprep.subr.mxu0 0.0
      %4274 = vmatpush1.msra.mxu0 0.0
      %4275 = vmatprep.subr.mxu0 0.0
      %4276 = vmatpush1.msra.mxu0 0.0
      %4277 = vmatprep.mubr.f32.mxu0 0.0
      %4278 = vmatmul.mubr.f32.gmra.mrb[0].mxu0 %v4208
      %v4279 = vpop.f32.mrb[0].mxu0
      %v4280 = vadd.f32 0.0, %v4279
      %v4281 = vpop.f32.mrb[0].mxu0
      %4282 = vdwg.mxu0
      %v4284 = vsel %vm2662, %v3748, 0
      %v4287 = vsel %vm3981, %v3974, 0
      %4289 = vmatprep.subr.mxu0 0.0
      %4290 = vmatpush1.msra.mxu0 %v4287
      %4291 = vmatprep.subr.mxu0 0.0
      %4292 = vmatpush1.msra.mxu0 0.0
      %4293 = vmatprep.subr.mxu0 0.0
      %4294 = vmatpush1.msra.mxu0 0.0
      %4295 = vmatprep.subr.mxu0 0.0
      %4296 = vmatpush1.msra.mxu0 0.0
      %4297 = vmatprep.subr.mxu0 0.0
      %4298 = vmatpush1.msra.mxu0 0.0
      %4299 = vmatprep.subr.mxu0 0.0
      %4300 = vmatpush1.msra.mxu0 0.0
      %4301 = vmatprep.subr.mxu0 0.0
      %4302 = vmatpush1.msra.mxu0 0.0
      %4303 = vmatprep.subr.mxu0 0.0
      %4304 = vmatpush1.msra.mxu0 0.0
      %4305 = vmatprep.subr.mxu0 0.0
      %4306 = vmatpush1.msra.mxu0 0.0
      %4307 = vmatprep.subr.mxu0 0.0
      %4308 = vmatpush1.msra.mxu0 0.0
      %4309 = vmatprep.subr.mxu0 0.0
      %4310 = vmatpush1.msra.mxu0 0.0
      %4311 = vmatprep.subr.mxu0 0.0
      %4312 = vmatpush1.msra.mxu0 0.0
      %4313 = vmatprep.subr.mxu0 0.0
      %4314 = vmatpush1.msra.mxu0 0.0
      %4315 = vmatprep.subr.mxu0 0.0
      %4316 = vmatpush1.msra.mxu0 0.0
      %4317 = vmatprep.subr.mxu0 0.0
      %4318 = vmatpush1.msra.mxu0 0.0
      %4319 = vmatprep.subr.mxu0 0.0
      %4320 = vmatpush1.msra.mxu0 0.0
      %4321 = vmatprep.subr.mxu0 0.0
      %4322 = vmatpush1.msra.mxu0 0.0
      %4323 = vmatprep.subr.mxu0 0.0
      %4324 = vmatpush1.msra.mxu0 0.0
      %4325 = vmatprep.subr.mxu0 0.0
      %4326 = vmatpush1.msra.mxu0 0.0
      %4327 = vmatprep.subr.mxu0 0.0
      %4328 = vmatpush1.msra.mxu0 0.0
      %4329 = vmatprep.subr.mxu0 0.0
      %4330 = vmatpush1.msra.mxu0 0.0
      %4331 = vmatprep.subr.mxu0 0.0
      %4332 = vmatpush1.msra.mxu0 0.0
      %4333 = vmatprep.subr.mxu0 0.0
      %4334 = vmatpush1.msra.mxu0 0.0
      %4335 = vmatprep.subr.mxu0 0.0
      %4336 = vmatpush1.msra.mxu0 0.0
      %4337 = vmatprep.subr.mxu0 0.0
      %4338 = vmatpush1.msra.mxu0 0.0
      %4339 = vmatprep.subr.mxu0 0.0
      %4340 = vmatpush1.msra.mxu0 0.0
      %4341 = vmatprep.subr.mxu0 0.0
      %4342 = vmatpush1.msra.mxu0 0.0
      %4343 = vmatprep.subr.mxu0 0.0
      %4344 = vmatpush1.msra.mxu0 0.0
      %4345 = vmatprep.subr.mxu0 0.0
      %4346 = vmatpush1.msra.mxu0 0.0
      %4347 = vmatprep.subr.mxu0 0.0
      %4348 = vmatpush1.msra.mxu0 0.0
      %4349 = vmatprep.subr.mxu0 0.0
      %4350 = vmatpush1.msra.mxu0 0.0
      %4351 = vmatprep.subr.mxu0 0.0
      %4352 = vmatpush1.msra.mxu0 0.0
      %4353 = vmatprep.mubr.f32.mxu0 0.0
      %4354 = vmatmul.mubr.f32.gmra.mrb[0].mxu0 %v4284
      %v4355 = vpop.f32.mrb[0].mxu0
      %v4356 = vadd.f32 0.0, %v4355
      %v4357 = vpop.f32.mrb[0].mxu0
      %4358 = vdwg.mxu0
      %v4360 = vsel %vm2662, %v3821, 0
      %v4363 = vsel %vm3981, %v3975, 0
      %4365 = vmatprep.subr.mxu0 0.0
      %4366 = vmatpush1.msra.mxu0 %v4363
      %4367 = vmatprep.subr.mxu0 0.0
      %4368 = vmatpush1.msra.mxu0 0.0
      %4369 = vmatprep.subr.mxu0 0.0
      %4370 = vmatpush1.msra.mxu0 0.0
      %4371 = vmatprep.subr.mxu0 0.0
      %4372 = vmatpush1.msra.mxu0 0.0
      %4373 = vmatprep.subr.mxu0 0.0
      %4374 = vmatpush1.msra.mxu0 0.0
      %4375 = vmatprep.subr.mxu0 0.0
      %4376 = vmatpush1.msra.mxu0 0.0
      %4377 = vmatprep.subr.mxu0 0.0
      %4378 = vmatpush1.msra.mxu0 0.0
      %4379 = vmatprep.subr.mxu0 0.0
      %4380 = vmatpush1.msra.mxu0 0.0
      %4381 = vmatprep.subr.mxu0 0.0
      %4382 = vmatpush1.msra.mxu0 0.0
      %4383 = vmatprep.subr.mxu0 0.0
      %4384 = vmatpush1.msra.mxu0 0.0
      %4385 = vmatprep.subr.mxu0 0.0
      %4386 = vmatpush1.msra.mxu0 0.0
      %4387 = vmatprep.subr.mxu0 0.0
      %4388 = vmatpush1.msra.mxu0 0.0
      %4389 = vmatprep.subr.mxu0 0.0
      %4390 = vmatpush1.msra.mxu0 0.0
      %4391 = vmatprep.subr.mxu0 0.0
      %4392 = vmatpush1.msra.mxu0 0.0
      %4393 = vmatprep.subr.mxu0 0.0
      %4394 = vmatpush1.msra.mxu0 0.0
      %4395 = vmatprep.subr.mxu0 0.0
      %4396 = vmatpush1.msra.mxu0 0.0
      %4397 = vmatprep.subr.mxu0 0.0
      %4398 = vmatpush1.msra.mxu0 0.0
      %4399 = vmatprep.subr.mxu0 0.0
      %4400 = vmatpush1.msra.mxu0 0.0
      %4401 = vmatprep.subr.mxu0 0.0
      %4402 = vmatpush1.msra.mxu0 0.0
      %4403 = vmatprep.subr.mxu0 0.0
      %4404 = vmatpush1.msra.mxu0 0.0
      %4405 = vmatprep.subr.mxu0 0.0
      %4406 = vmatpush1.msra.mxu0 0.0
      %4407 = vmatprep.subr.mxu0 0.0
      %4408 = vmatpush1.msra.mxu0 0.0
      %4409 = vmatprep.subr.mxu0 0.0
      %4410 = vmatpush1.msra.mxu0 0.0
      %4411 = vmatprep.subr.mxu0 0.0
      %4412 = vmatpush1.msra.mxu0 0.0
      %4413 = vmatprep.subr.mxu0 0.0
      %4414 = vmatpush1.msra.mxu0 0.0
      %4415 = vmatprep.subr.mxu0 0.0
      %4416 = vmatpush1.msra.mxu0 0.0
      %4417 = vmatprep.subr.mxu0 0.0
      %4418 = vmatpush1.msra.mxu0 0.0
      %4419 = vmatprep.subr.mxu0 0.0
      %4420 = vmatpush1.msra.mxu0 0.0
      %4421 = vmatprep.subr.mxu0 0.0
      %4422 = vmatpush1.msra.mxu0 0.0
      %4423 = vmatprep.subr.mxu0 0.0
      %4424 = vmatpush1.msra.mxu0 0.0
      %4425 = vmatprep.subr.mxu0 0.0
      %4426 = vmatpush1.msra.mxu0 0.0
      %4427 = vmatprep.subr.mxu0 0.0
      %4428 = vmatpush1.msra.mxu0 0.0
      %4429 = vmatprep.mubr.f32.mxu0 0.0
      %4430 = vmatmul.mubr.f32.gmra.mrb[0].mxu0 %v4360
      %v4431 = vpop.f32.mrb[0].mxu0
      %v4432 = vadd.f32 0.0, %v4431
      %v4433 = vpop.f32.mrb[0].mxu0
      %4434 = vdwg.mxu0
      %v4436 = vsel %vm2662, %v3894, 0
      %v4439 = vsel %vm3981, %v3976, 0
      %4441 = vmatprep.subr.mxu0 0.0
      %4442 = vmatpush1.msra.mxu0 %v4439
      %4443 = vmatprep.subr.mxu0 0.0
      %4444 = vmatpush1.msra.mxu0 0.0
      %4445 = vmatprep.subr.mxu0 0.0
      %4446 = vmatpush1.msra.mxu0 0.0
      %4447 = vmatprep.subr.mxu0 0.0
      %4448 = vmatpush1.msra.mxu0 0.0
      %4449 = vmatprep.subr.mxu0 0.0
      %4450 = vmatpush1.msra.mxu0 0.0
      %4451 = vmatprep.subr.mxu0 0.0
      %4452 = vmatpush1.msra.mxu0 0.0
      %4453 = vmatprep.subr.mxu0 0.0
      %4454 = vmatpush1.msra.mxu0 0.0
      %4455 = vmatprep.subr.mxu0 0.0
      %4456 = vmatpush1.msra.mxu0 0.0
      %4457 = vmatprep.subr.mxu0 0.0
      %4458 = vmatpush1.msra.mxu0 0.0
      %4459 = vmatprep.subr.mxu0 0.0
      %4460 = vmatpush1.msra.mxu0 0.0
      %4461 = vmatprep.subr.mxu0 0.0
      %4462 = vmatpush1.msra.mxu0 0.0
      %4463 = vmatprep.subr.mxu0 0.0
      %4464 = vmatpush1.msra.mxu0 0.0
      %4465 = vmatprep.subr.mxu0 0.0
      %4466 = vmatpush1.msra.mxu0 0.0
      %4467 = vmatprep.subr.mxu0 0.0
      %4468 = vmatpush1.msra.mxu0 0.0
      %4469 = vmatprep.subr.mxu0 0.0
      %4470 = vmatpush1.msra.mxu0 0.0
      %4471 = vmatprep.subr.mxu0 0.0
      %4472 = vmatpush1.msra.mxu0 0.0
      %4473 = vmatprep.subr.mxu0 0.0
      %4474 = vmatpush1.msra.mxu0 0.0
      %4475 = vmatprep.subr.mxu0 0.0
      %4476 = vmatpush1.msra.mxu0 0.0
      %4477 = vmatprep.subr.mxu0 0.0
      %4478 = vmatpush1.msra.mxu0 0.0
      %4479 = vmatprep.subr.mxu0 0.0
      %4480 = vmatpush1.msra.mxu0 0.0
      %4481 = vmatprep.subr.mxu0 0.0
      %4482 = vmatpush1.msra.mxu0 0.0
      %4483 = vmatprep.subr.mxu0 0.0
      %4484 = vmatpush1.msra.mxu0 0.0
      %4485 = vmatprep.subr.mxu0 0.0
      %4486 = vmatpush1.msra.mxu0 0.0
      %4487 = vmatprep.subr.mxu0 0.0
      %4488 = vmatpush1.msra.mxu0 0.0
      %4489 = vmatprep.subr.mxu0 0.0
      %4490 = vmatpush1.msra.mxu0 0.0
      %4491 = vmatprep.subr.mxu0 0.0
      %4492 = vmatpush1.msra.mxu0 0.0
      %4493 = vmatprep.subr.mxu0 0.0
      %4494 = vmatpush1.msra.mxu0 0.0
      %4495 = vmatprep.subr.mxu0 0.0
      %4496 = vmatpush1.msra.mxu0 0.0
      %4497 = vmatprep.subr.mxu0 0.0
      %4498 = vmatpush1.msra.mxu0 0.0
      %4499 = vmatprep.subr.mxu0 0.0
      %4500 = vmatpush1.msra.mxu0 0.0
      %4501 = vmatprep.subr.mxu0 0.0
      %4502 = vmatpush1.msra.mxu0 0.0
      %4503 = vmatprep.subr.mxu0 0.0
      %4504 = vmatpush1.msra.mxu0 0.0
      %4505 = vmatprep.mubr.f32.mxu0 0.0
      %4506 = vmatmul.mubr.f32.gmra.mrb[0].mxu0 %v4436
      %v4507 = vpop.f32.mrb[0].mxu0
      %v4508 = vadd.f32 0.0, %v4507
      %v4509 = vpop.f32.mrb[0].mxu0
      %4510 = vdwg.mxu0
      %v4512 = vsel %vm2662, %v3967, 0
      %v4515 = vsel %vm3981, %v3977, 0
      %4517 = vmatprep.subr.mxu0 0.0
      %4518 = vmatpush1.msra.mxu0 %v4515
      %4519 = vmatprep.subr.mxu0 0.0
      %4520 = vmatpush1.msra.mxu0 0.0
      %4521 = vmatprep.subr.mxu0 0.0
      %4522 = vmatpush1.msra.mxu0 0.0
      %4523 = vmatprep.subr.mxu0 0.0
      %4524 = vmatpush1.msra.mxu0 0.0
      %4525 = vmatprep.subr.mxu0 0.0
      %4526 = vmatpush1.msra.mxu0 0.0
      %4527 = vmatprep.subr.mxu0 0.0
      %4528 = vmatpush1.msra.mxu0 0.0
      %4529 = vmatprep.subr.mxu0 0.0
      %4530 = vmatpush1.msra.mxu0 0.0
      %4531 = vmatprep.subr.mxu0 0.0
      %4532 = vmatpush1.msra.mxu0 0.0
      %4533 = vmatprep.subr.mxu0 0.0
      %4534 = vmatpush1.msra.mxu0 0.0
      %4535 = vmatprep.subr.mxu0 0.0
      %4536 = vmatpush1.msra.mxu0 0.0
      %4537 = vmatprep.subr.mxu0 0.0
      %4538 = vmatpush1.msra.mxu0 0.0
      %4539 = vmatprep.subr.mxu0 0.0
      %4540 = vmatpush1.msra.mxu0 0.0
      %4541 = vmatprep.subr.mxu0 0.0
      %4542 = vmatpush1.msra.mxu0 0.0
      %4543 = vmatprep.subr.mxu0 0.0
      %4544 = vmatpush1.msra.mxu0 0.0
      %4545 = vmatprep.subr.mxu0 0.0
      %4546 = vmatpush1.msra.mxu0 0.0
      %4547 = vmatprep.subr.mxu0 0.0
      %4548 = vmatpush1.msra.mxu0 0.0
      %4549 = vmatprep.subr.mxu0 0.0
      %4550 = vmatpush1.msra.mxu0 0.0
      %4551 = vmatprep.subr.mxu0 0.0
      %4552 = vmatpush1.msra.mxu0 0.0
      %4553 = vmatprep.subr.mxu0 0.0
      %4554 = vmatpush1.msra.mxu0 0.0
      %4555 = vmatprep.subr.mxu0 0.0
      %4556 = vmatpush1.msra.mxu0 0.0
      %4557 = vmatprep.subr.mxu0 0.0
      %4558 = vmatpush1.msra.mxu0 0.0
      %4559 = vmatprep.subr.mxu0 0.0
      %4560 = vmatpush1.msra.mxu0 0.0
      %4561 = vmatprep.subr.mxu0 0.0
      %4562 = vmatpush1.msra.mxu0 0.0
      %4563 = vmatprep.subr.mxu0 0.0
      %4564 = vmatpush1.msra.mxu0 0.0
      %4565 = vmatprep.subr.mxu0 0.0
      %4566 = vmatpush1.msra.mxu0 0.0
      %4567 = vmatprep.subr.mxu0 0.0
      %4568 = vmatpush1.msra.mxu0 0.0
      %4569 = vmatprep.subr.mxu0 0.0
      %4570 = vmatpush1.msra.mxu0 0.0
      %4571 = vmatprep.subr.mxu0 0.0
      %4572 = vmatpush1.msra.mxu0 0.0
      %4573 = vmatprep.subr.mxu0 0.0
      %4574 = vmatpush1.msra.mxu0 0.0
      %4575 = vmatprep.subr.mxu0 0.0
      %4576 = vmatpush1.msra.mxu0 0.0
      %4577 = vmatprep.subr.mxu0 0.0
      %4578 = vmatpush1.msra.mxu0 0.0
      %4579 = vmatprep.subr.mxu0 0.0
      %4580 = vmatpush1.msra.mxu0 0.0
      %4581 = vmatprep.mubr.f32.mxu0 0.0
      %4582 = vmatmul.mubr.f32.gmra.mrb[0].mxu0 %v4512
      %v4583 = vpop.f32.mrb[0].mxu0
      %v4584 = vadd.f32 0.0, %v4583
      %v4585 = vpop.f32.mrb[0].mxu0
      %4586 = vdwg.mxu0
      %v4587 = vsel %vm799, %v4052, 0.0
      %v4588 = vsel %vm799, %v4128, 0.0
      %v4589 = vadd.f32 %v4587, %v4588
      %v4590 = vsel %vm799, %v4204, 0.0
      %v4591 = vadd.f32 %v4589, %v4590
      %v4592 = vsel %vm799, %v4280, 0.0
      %v4593 = vadd.f32 %v4591, %v4592
      %v4594 = vsel %vm799, %v4356, 0.0
      %v4595 = vadd.f32 %v4593, %v4594
      %v4596 = vsel %vm799, %v4432, 0.0
      %v4597 = vadd.f32 %v4595, %v4596
      %v4598 = vsel %vm799, %v4508, 0.0
      %v4599 = vadd.f32 %v4597, %v4598
      %v4600 = vsel %vm799, %v4584, 0.0
      %v4601 = vadd.f32 %v4599, %v4600
      %v4602 = vld [vmem:[%s682] sm:$0x1]
      %v4604 = vlaneseq
      %v4605 = vshrl.u32 %v4604, 7
      %v4606 = vsub.s32 0, %v4605
      %v4607 = vrot.slane %v4602, %v4606
      %v4609 = vadd.f32 %v4601, %v4607
      %v4610 = vld [vmem:[%s687] sm:$0xff]
      %v4611 = vld [vmem:[%s687 + $0x8] sm:$0xff]
      %v4612 = vld [vmem:[%s687 + $0x10] sm:$0xff]
      %v4613 = vld [vmem:[%s687 + $0x18] sm:$0xff]
      %v4614 = vld [vmem:[%s687 + $0x20] sm:$0xff]
      %v4615 = vld [vmem:[%s687 + $0x28] sm:$0xff]
      %v4616 = vld [vmem:[%s687 + $0x30] sm:$0xff]
      %v4617 = vld [vmem:[%s687 + $0x38] sm:$0xff]
      %v4618 = vld [vmem:[%s687 + $0x40] sm:$0xff]
      %v4619 = vld [vmem:[%s687 + $0x48] sm:$0xff]
      %v4620 = vld [vmem:[%s687 + $0x50] sm:$0xff]
      %v4621 = vld [vmem:[%s687 + $0x58] sm:$0xff]
      %v4622 = vld [vmem:[%s687 + $0x60] sm:$0xff]
      %v4623 = vld [vmem:[%s687 + $0x68] sm:$0xff]
      %v4624 = vld [vmem:[%s687 + $0x70] sm:$0xff]
      %v4625 = vld [vmem:[%s687 + $0x78] sm:$0xff]
      %v4627 = vsel %vm799, %v4609, 0
      %4629 = vmatprep.subr.mxu0 %v4611
      %4630 = vmatpush1.msra.mxu0 %v4610
      %4631 = vmatprep.subr.mxu0 %v4615
      %4632 = vmatpush1.msra.mxu0 %v4614
      %4633 = vmatprep.subr.mxu0 %v4619
      %4634 = vmatpush1.msra.mxu0 %v4618
      %4635 = vmatprep.subr.mxu0 %v4623
      %4636 = vmatpush1.msra.mxu0 %v4622
      %4637 = vmatprep.subr.mxu0 0.0
      %4638 = vmatpush1.msra.mxu0 0.0
      %4639 = vmatprep.subr.mxu0 0.0
      %4640 = vmatpush1.msra.mxu0 0.0
      %4641 = vmatprep.subr.mxu0 0.0
      %4642 = vmatpush1.msra.mxu0 0.0
      %4643 = vmatprep.subr.mxu0 0.0
      %4644 = vmatpush1.msra.mxu0 0.0
      %4645 = vmatprep.subr.mxu0 0.0
      %4646 = vmatpush1.msra.mxu0 0.0
      %4647 = vmatprep.subr.mxu0 0.0
      %4648 = vmatpush1.msra.mxu0 0.0
      %4649 = vmatprep.subr.mxu0 0.0
      %4650 = vmatpush1.msra.mxu0 0.0
      %4651 = vmatprep.subr.mxu0 0.0
      %4652 = vmatpush1.msra.mxu0 0.0
      %4653 = vmatprep.subr.mxu0 0.0
      %4654 = vmatpush1.msra.mxu0 0.0
      %4655 = vmatprep.subr.mxu0 0.0
      %4656 = vmatpush1.msra.mxu0 0.0
      %4657 = vmatprep.subr.mxu0 0.0
      %4658 = vmatpush1.msra.mxu0 0.0
      %4659 = vmatprep.subr.mxu0 0.0
      %4660 = vmatpush1.msra.mxu0 0.0
      %4661 = vmatprep.subr.mxu0 0.0
      %4662 = vmatpush1.msra.mxu0 0.0
      %4663 = vmatprep.subr.mxu0 0.0
      %4664 = vmatpush1.msra.mxu0 0.0
      %4665 = vmatprep.subr.mxu0 0.0
      %4666 = vmatpush1.msra.mxu0 0.0
      %4667 = vmatprep.subr.mxu0 0.0
      %4668 = vmatpush1.msra.mxu0 0.0
      %4669 = vmatprep.subr.mxu0 0.0
      %4670 = vmatpush1.msra.mxu0 0.0
      %4671 = vmatprep.subr.mxu0 0.0
      %4672 = vmatpush1.msra.mxu0 0.0
      %4673 = vmatprep.subr.mxu0 0.0
      %4674 = vmatpush1.msra.mxu0 0.0
      %4675 = vmatprep.subr.mxu0 0.0
      %4676 = vmatpush1.msra.mxu0 0.0
      %4677 = vmatprep.subr.mxu0 0.0
      %4678 = vmatpush1.msra.mxu0 0.0
      %4679 = vmatprep.subr.mxu0 0.0
      %4680 = vmatpush1.msra.mxu0 0.0
      %4681 = vmatprep.subr.mxu0 0.0
      %4682 = vmatpush1.msra.mxu0 0.0
      %4683 = vmatprep.subr.mxu0 0.0
      %4684 = vmatpush1.msra.mxu0 0.0
      %4685 = vmatprep.subr.mxu0 0.0
      %4686 = vmatpush1.msra.mxu0 0.0
      %4687 = vmatprep.subr.mxu0 0.0
      %4688 = vmatpush1.msra.mxu0 0.0
      %4689 = vmatprep.subr.mxu0 0.0
      %4690 = vmatpush1.msra.mxu0 0.0
      %4691 = vmatprep.subr.mxu0 0.0
      %4692 = vmatpush1.msra.mxu0 0.0
      %4693 = vmatprep.mubr.f32.mxu0 0.0
      %4694 = vmatmul.mubr.f32.gmra.mrb[0].mxu0 %v4627
      %v4695 = vpop.f32.mrb[0].mxu0
      %v4696 = vadd.f32 0.0, %v4695
      %v4697 = vpop.f32.mrb[0].mxu0
      %v4698 = vadd.f32 0.0, %v4697
      %4699 = vdwg.mxu0
      %4700 = vmatprep.subr.mxu0 %v4613
      %4701 = vmatpush1.msra.mxu0 %v4612
      %4702 = vmatprep.subr.mxu0 %v4617
      %4703 = vmatpush1.msra.mxu0 %v4616
      %4704 = vmatprep.subr.mxu0 %v4621
      %4705 = vmatpush1.msra.mxu0 %v4620
      %4706 = vmatprep.subr.mxu0 %v4625
      %4707 = vmatpush1.msra.mxu0 %v4624
      %4708 = vmatprep.subr.mxu0 0.0
      %4709 = vmatpush1.msra.mxu0 0.0
      %4710 = vmatprep.subr.mxu0 0.0
      %4711 = vmatpush1.msra.mxu0 0.0
      %4712 = vmatprep.subr.mxu0 0.0
      %4713 = vmatpush1.msra.mxu0 0.0
      %4714 = vmatprep.subr.mxu0 0.0
      %4715 = vmatpush1.msra.mxu0 0.0
      %4716 = vmatprep.subr.mxu0 0.0
      %4717 = vmatpush1.msra.mxu0 0.0
      %4718 = vmatprep.subr.mxu0 0.0
      %4719 = vmatpush1.msra.mxu0 0.0
      %4720 = vmatprep.subr.mxu0 0.0
      %4721 = vmatpush1.msra.mxu0 0.0
      %4722 = vmatprep.subr.mxu0 0.0
      %4723 = vmatpush1.msra.mxu0 0.0
      %4724 = vmatprep.subr.mxu0 0.0
      %4725 = vmatpush1.msra.mxu0 0.0
      %4726 = vmatprep.subr.mxu0 0.0
      %4727 = vmatpush1.msra.mxu0 0.0
      %4728 = vmatprep.subr.mxu0 0.0
      %4729 = vmatpush1.msra.mxu0 0.0
      %4730 = vmatprep.subr.mxu0 0.0
      %4731 = vmatpush1.msra.mxu0 0.0
      %4732 = vmatprep.subr.mxu0 0.0
      %4733 = vmatpush1.msra.mxu0 0.0
      %4734 = vmatprep.subr.mxu0 0.0
      %4735 = vmatpush1.msra.mxu0 0.0
      %4736 = vmatprep.subr.mxu0 0.0
      %4737 = vmatpush1.msra.mxu0 0.0
      %4738 = vmatprep.subr.mxu0 0.0
      %4739 = vmatpush1.msra.mxu0 0.0
      %4740 = vmatprep.subr.mxu0 0.0
      %4741 = vmatpush1.msra.mxu0 0.0
      %4742 = vmatprep.subr.mxu0 0.0
      %4743 = vmatpush1.msra.mxu0 0.0
      %4744 = vmatprep.subr.mxu0 0.0
      %4745 = vmatpush1.msra.mxu0 0.0
      %4746 = vmatprep.subr.mxu0 0.0
      %4747 = vmatpush1.msra.mxu0 0.0
      %4748 = vmatprep.subr.mxu0 0.0
      %4749 = vmatpush1.msra.mxu0 0.0
      %4750 = vmatprep.subr.mxu0 0.0
      %4751 = vmatpush1.msra.mxu0 0.0
      %4752 = vmatprep.subr.mxu0 0.0
      %4753 = vmatpush1.msra.mxu0 0.0
      %4754 = vmatprep.subr.mxu0 0.0
      %4755 = vmatpush1.msra.mxu0 0.0
      %4756 = vmatprep.subr.mxu0 0.0
      %4757 = vmatpush1.msra.mxu0 0.0
      %4758 = vmatprep.subr.mxu0 0.0
      %4759 = vmatpush1.msra.mxu0 0.0
      %4760 = vmatprep.subr.mxu0 0.0
      %4761 = vmatpush1.msra.mxu0 0.0
      %4762 = vmatprep.subr.mxu0 0.0
      %4763 = vmatpush1.msra.mxu0 0.0
      %4764 = vmatprep.mubr.f32.mxu0 0.0
      %4765 = vmatmul.mubr.f32.gmra.mrb[0].mxu0 %v4627
      %v4766 = vpop.f32.mrb[0].mxu0
      %v4767 = vadd.f32 0.0, %v4766
      %v4768 = vpop.f32.mrb[0].mxu0
      %v4769 = vadd.f32 0.0, %v4768
      %4770 = vdwg.mxu0
      %v4771 = vmax.f32 %v4696, 0.0
      %v4772 = vmax.f32 %v4698, 0.0
      %v4773 = vmax.f32 %v4767, 0.0
      %v4774 = vmax.f32 %v4769, 0.0
      %v4775 = vld [vmem:[%s692] sm:$0xff]
      %v4776 = vld [vmem:[%s692 + $0x8] sm:$0xff]
      %v4777 = vld [vmem:[%s692 + $0x10] sm:$0xff]
      %v4778 = vld [vmem:[%s692 + $0x18] sm:$0xff]
      %v4779 = vld [vmem:[%s692 + $0x20] sm:$0xff]
      %v4780 = vld [vmem:[%s692 + $0x28] sm:$0xff]
      %v4781 = vld [vmem:[%s692 + $0x30] sm:$0xff]
      %v4782 = vld [vmem:[%s692 + $0x38] sm:$0xff]
      %v4783 = vld [vmem:[%s692 + $0x40] sm:$0xff]
      %v4784 = vld [vmem:[%s692 + $0x48] sm:$0xff]
      %v4785 = vld [vmem:[%s692 + $0x50] sm:$0xff]
      %v4786 = vld [vmem:[%s692 + $0x58] sm:$0xff]
      %v4787 = vld [vmem:[%s692 + $0x60] sm:$0xff]
      %v4788 = vld [vmem:[%s692 + $0x68] sm:$0xff]
      %v4789 = vld [vmem:[%s692 + $0x70] sm:$0xff]
      %v4790 = vld [vmem:[%s692 + $0x78] sm:$0xff]
      %v4791 = vld [vmem:[%s692 + $0x80] sm:$0xff]
      %v4792 = vld [vmem:[%s692 + $0x88] sm:$0xff]
      %v4793 = vld [vmem:[%s692 + $0x90] sm:$0xff]
      %v4794 = vld [vmem:[%s692 + $0x98] sm:$0xff]
      %v4795 = vld [vmem:[%s692 + $0xa0] sm:$0xff]
      %v4796 = vld [vmem:[%s692 + $0xa8] sm:$0xff]
      %v4797 = vld [vmem:[%s692 + $0xb0] sm:$0xff]
      %v4798 = vld [vmem:[%s692 + $0xb8] sm:$0xff]
      %v4799 = vld [vmem:[%s692 + $0xc0] sm:$0xff]
      %v4800 = vld [vmem:[%s692 + $0xc8] sm:$0xff]
      %v4801 = vld [vmem:[%s692 + $0xd0] sm:$0xff]
      %v4802 = vld [vmem:[%s692 + $0xd8] sm:$0xff]
      %v4803 = vld [vmem:[%s692 + $0xe0] sm:$0xff]
      %v4804 = vld [vmem:[%s692 + $0xe8] sm:$0xff]
      %v4805 = vld [vmem:[%s692 + $0xf0] sm:$0xff]
      %v4806 = vld [vmem:[%s692 + $0xf8] sm:$0xff]
      %v4807 = vld [vmem:[%s692 + $0x100] sm:$0xff]
      %v4808 = vld [vmem:[%s692 + $0x108] sm:$0xff]
      %v4809 = vld [vmem:[%s692 + $0x110] sm:$0xff]
      %v4810 = vld [vmem:[%s692 + $0x118] sm:$0xff]
      %v4811 = vld [vmem:[%s692 + $0x120] sm:$0xff]
      %v4812 = vld [vmem:[%s692 + $0x128] sm:$0xff]
      %v4813 = vld [vmem:[%s692 + $0x130] sm:$0xff]
      %v4814 = vld [vmem:[%s692 + $0x138] sm:$0xff]
      %v4815 = vld [vmem:[%s692 + $0x140] sm:$0xff]
      %v4816 = vld [vmem:[%s692 + $0x148] sm:$0xff]
      %v4817 = vld [vmem:[%s692 + $0x150] sm:$0xff]
      %v4818 = vld [vmem:[%s692 + $0x158] sm:$0xff]
      %v4819 = vld [vmem:[%s692 + $0x160] sm:$0xff]
      %v4820 = vld [vmem:[%s692 + $0x168] sm:$0xff]
      %v4821 = vld [vmem:[%s692 + $0x170] sm:$0xff]
      %v4822 = vld [vmem:[%s692 + $0x178] sm:$0xff]
      %v4823 = vld [vmem:[%s692 + $0x180] sm:$0xff]
      %v4824 = vld [vmem:[%s692 + $0x188] sm:$0xff]
      %v4825 = vld [vmem:[%s692 + $0x190] sm:$0xff]
      %v4826 = vld [vmem:[%s692 + $0x198] sm:$0xff]
      %v4827 = vld [vmem:[%s692 + $0x1a0] sm:$0xff]
      %v4828 = vld [vmem:[%s692 + $0x1a8] sm:$0xff]
      %v4829 = vld [vmem:[%s692 + $0x1b0] sm:$0xff]
      %v4830 = vld [vmem:[%s692 + $0x1b8] sm:$0xff]
      %v4831 = vld [vmem:[%s692 + $0x1c0] sm:$0xff]
      %v4832 = vld [vmem:[%s692 + $0x1c8] sm:$0xff]
      %v4833 = vld [vmem:[%s692 + $0x1d0] sm:$0xff]
      %v4834 = vld [vmem:[%s692 + $0x1d8] sm:$0xff]
      %v4835 = vld [vmem:[%s692 + $0x1e0] sm:$0xff]
      %v4836 = vld [vmem:[%s692 + $0x1e8] sm:$0xff]
      %v4837 = vld [vmem:[%s692 + $0x1f0] sm:$0xff]
      %v4838 = vld [vmem:[%s692 + $0x1f8] sm:$0xff]
      %4839 = vmatprep.subr.mxu0 0.0
      %4840 = vmatpush1.msra.mxu0 %v4775
      %4841 = vmatprep.subr.mxu0 0.0
      %4842 = vmatpush1.msra.mxu0 %v4776
      %4843 = vmatprep.subr.mxu0 0.0
      %4844 = vmatpush1.msra.mxu0 %v4777
      %4845 = vmatprep.subr.mxu0 0.0
      %4846 = vmatpush1.msra.mxu0 %v4778
      %4847 = vmatprep.subr.mxu0 0.0
      %4848 = vmatpush1.msra.mxu0 %v4779
      %4849 = vmatprep.subr.mxu0 0.0
      %4850 = vmatpush1.msra.mxu0 %v4780
      %4851 = vmatprep.subr.mxu0 0.0
      %4852 = vmatpush1.msra.mxu0 %v4781
      %4853 = vmatprep.subr.mxu0 0.0
      %4854 = vmatpush1.msra.mxu0 %v4782
      %4855 = vmatprep.subr.mxu0 0.0
      %4856 = vmatpush1.msra.mxu0 %v4783
      %4857 = vmatprep.subr.mxu0 0.0
      %4858 = vmatpush1.msra.mxu0 %v4784
      %4859 = vmatprep.subr.mxu0 0.0
      %4860 = vmatpush1.msra.mxu0 %v4785
      %4861 = vmatprep.subr.mxu0 0.0
      %4862 = vmatpush1.msra.mxu0 %v4786
      %4863 = vmatprep.subr.mxu0 0.0
      %4864 = vmatpush1.msra.mxu0 %v4787
      %4865 = vmatprep.subr.mxu0 0.0
      %4866 = vmatpush1.msra.mxu0 %v4788
      %4867 = vmatprep.subr.mxu0 0.0
      %4868 = vmatpush1.msra.mxu0 %v4789
      %4869 = vmatprep.subr.mxu0 0.0
      %4870 = vmatpush1.msra.mxu0 %v4790
      %4871 = vmatprep.subr.mxu0 0.0
      %4872 = vmatpush1.msra.mxu0 %v4791
      %4873 = vmatprep.subr.mxu0 0.0
      %4874 = vmatpush1.msra.mxu0 %v4792
      %4875 = vmatprep.subr.mxu0 0.0
      %4876 = vmatpush1.msra.mxu0 %v4793
      %4877 = vmatprep.subr.mxu0 0.0
      %4878 = vmatpush1.msra.mxu0 %v4794
      %4879 = vmatprep.subr.mxu0 0.0
      %4880 = vmatpush1.msra.mxu0 %v4795
      %4881 = vmatprep.subr.mxu0 0.0
      %4882 = vmatpush1.msra.mxu0 %v4796
      %4883 = vmatprep.subr.mxu0 0.0
      %4884 = vmatpush1.msra.mxu0 %v4797
      %4885 = vmatprep.subr.mxu0 0.0
      %4886 = vmatpush1.msra.mxu0 %v4798
      %4887 = vmatprep.subr.mxu0 0.0
      %4888 = vmatpush1.msra.mxu0 %v4799
      %4889 = vmatprep.subr.mxu0 0.0
      %4890 = vmatpush1.msra.mxu0 %v4800
      %4891 = vmatprep.subr.mxu0 0.0
      %4892 = vmatpush1.msra.mxu0 %v4801
      %4893 = vmatprep.subr.mxu0 0.0
      %4894 = vmatpush1.msra.mxu0 %v4802
      %4895 = vmatprep.subr.mxu0 0.0
      %4896 = vmatpush1.msra.mxu0 %v4803
      %4897 = vmatprep.subr.mxu0 0.0
      %4898 = vmatpush1.msra.mxu0 %v4804
      %4899 = vmatprep.subr.mxu0 0.0
      %4900 = vmatpush1.msra.mxu0 %v4805
      %4901 = vmatprep.subr.mxu0 0.0
      %4902 = vmatpush1.msra.mxu0 %v4806
      %4903 = vmatprep.mubr.f32.mxu0 %v4772
      %4904 = vmatmul.mubr.f32.gmra.mrb[0].mxu0 %v4771
      %v4905 = vpop.f32.mrb[0].mxu0
      %v4906 = vadd.f32 %v4609, %v4905
      %v4907 = vpop.f32.mrb[0].mxu0
      %4908 = vdwg.mxu0
      %4909 = vmatprep.subr.mxu0 0.0
      %4910 = vmatpush1.msra.mxu0 %v4807
      %4911 = vmatprep.subr.mxu0 0.0
      %4912 = vmatpush1.msra.mxu0 %v4808
      %4913 = vmatprep.subr.mxu0 0.0
      %4914 = vmatpush1.msra.mxu0 %v4809
      %4915 = vmatprep.subr.mxu0 0.0
      %4916 = vmatpush1.msra.mxu0 %v4810
      %4917 = vmatprep.subr.mxu0 0.0
      %4918 = vmatpush1.msra.mxu0 %v4811
      %4919 = vmatprep.subr.mxu0 0.0
      %4920 = vmatpush1.msra.mxu0 %v4812
      %4921 = vmatprep.subr.mxu0 0.0
      %4922 = vmatpush1.msra.mxu0 %v4813
      %4923 = vmatprep.subr.mxu0 0.0
      %4924 = vmatpush1.msra.mxu0 %v4814
      %4925 = vmatprep.subr.mxu0 0.0
      %4926 = vmatpush1.msra.mxu0 %v4815
      %4927 = vmatprep.subr.mxu0 0.0
      %4928 = vmatpush1.msra.mxu0 %v4816
      %4929 = vmatprep.subr.mxu0 0.0
      %4930 = vmatpush1.msra.mxu0 %v4817
      %4931 = vmatprep.subr.mxu0 0.0
      %4932 = vmatpush1.msra.mxu0 %v4818
      %4933 = vmatprep.subr.mxu0 0.0
      %4934 = vmatpush1.msra.mxu0 %v4819
      %4935 = vmatprep.subr.mxu0 0.0
      %4936 = vmatpush1.msra.mxu0 %v4820
      %4937 = vmatprep.subr.mxu0 0.0
      %4938 = vmatpush1.msra.mxu0 %v4821
      %4939 = vmatprep.subr.mxu0 0.0
      %4940 = vmatpush1.msra.mxu0 %v4822
      %4941 = vmatprep.subr.mxu0 0.0
      %4942 = vmatpush1.msra.mxu0 %v4823
      %4943 = vmatprep.subr.mxu0 0.0
      %4944 = vmatpush1.msra.mxu0 %v4824
      %4945 = vmatprep.subr.mxu0 0.0
      %4946 = vmatpush1.msra.mxu0 %v4825
      %4947 = vmatprep.subr.mxu0 0.0
      %4948 = vmatpush1.msra.mxu0 %v4826
      %4949 = vmatprep.subr.mxu0 0.0
      %4950 = vmatpush1.msra.mxu0 %v4827
      %4951 = vmatprep.subr.mxu0 0.0
      %4952 = vmatpush1.msra.mxu0 %v4828
      %4953 = vmatprep.subr.mxu0 0.0
      %4954 = vmatpush1.msra.mxu0 %v4829
      %4955 = vmatprep.subr.mxu0 0.0
      %4956 = vmatpush1.msra.mxu0 %v4830
      %4957 = vmatprep.subr.mxu0 0.0
      %4958 = vmatpush1.msra.mxu0 %v4831
      %4959 = vmatprep.subr.mxu0 0.0
      %4960 = vmatpush1.msra.mxu0 %v4832
      %4961 = vmatprep.subr.mxu0 0.0
      %4962 = vmatpush1.msra.mxu0 %v4833
      %4963 = vmatprep.subr.mxu0 0.0
      %4964 = vmatpush1.msra.mxu0 %v4834
      %4965 = vmatprep.subr.mxu0 0.0
      %4966 = vmatpush1.msra.mxu0 %v4835
      %4967 = vmatprep.subr.mxu0 0.0
      %4968 = vmatpush1.msra.mxu0 %v4836
      %4969 = vmatprep.subr.mxu0 0.0
      %4970 = vmatpush1.msra.mxu0 %v4837
      %4971 = vmatprep.subr.mxu0 0.0
      %4972 = vmatpush1.msra.mxu0 %v4838
      %4973 = vmatprep.mubr.f32.mxu0 %v4774
      %4974 = vmatmul.mubr.f32.gmra.mrb[0].mxu0 %v4773
      %v4975 = vpop.f32.mrb[0].mxu0
      %v4976 = vadd.f32 %v4906, %v4975
      %v4977 = vpop.f32.mrb[0].mxu0
      %4978 = vdwg.mxu0
      %v4979 = vsel %vm799, %v4976, 0.0
      %4980 = vadd.xlane.f32.xlu0 %v4979
      %v4981 = vpop.xlane.xlu0 %4980
      %v4982 = vrcp.pop 32.0
      %v4983 = vmul.f32 %v4981, %v4982
      %v4984 = vsub.f32 %v4976, %v4983
      %v4985 = vmul.f32 %v4984, %v4984
      %v4986 = vsel %vm799, %v4985, 0.0
      %4987 = vadd.xlane.f32.xlu0 %v4986
      %v4988 = vpop.xlane.xlu0 %4987
      %v4989 = vmul.f32 %v4988, %v4982
      %v4990 = vadd.f32 %v4989, 1e-05
      %v4991 = vrsqrt.pop %v4990
      %v4992 = vmul.f32 %v4984, %v4991
      %4993 = vst.msk [vmem:[%s700] sm:$0xff] %vm799, %v4992
      %p4994 = scmp.lt.s32.totalorder %s29, 1
      %s4995 = scalar_select %p4994, %s29, 1
      %p4996 = scmp.lt.s32.totalorder %s30, 1
      %s4997 = scalar_select %p4996, %s30, 1
      %s4998 = smul.addr %s4995, 2
      %s4999 = sadd.s32 %s4997, %s4998
      %s5000 = smul.addr %s4999, 8
      %s5001 = scalar_lea.vmem %s12, %s5000
      %p5002 = scmp.lt.s32.totalorder %s29, 1
      %s5003 = scalar_select %p5002, %s29, 1
      %p5004 = scmp.lt.s32.totalorder %s30, 1
      %s5005 = scalar_select %p5004, %s30, 1
      %s5006 = smul.addr %s5003, 2
      %s5007 = sadd.s32 %s5005, %s5006
      %s5008 = smul.addr %s5007, 8
      %s5009 = scalar_lea.vmem %s13, %s5008
      // Predicated region
      $region69: #{coattention_encoder_layer.1} parent=67 // pred_check
        %p5010 = pneg %p373
      $region70: #{coattention_encoder_layer.1} parent=67 // pred_check_branch
        %5012 = sbr.rel (%p5010) target = $region72
      $region71: #{coattention_encoder_layer.1} parent=67 // pred_region
        _
      $region72: #{coattention_encoder_layer.1} parent=67 // pred_fallthru
        _
      // Predicated region
      $region73: #{coattention_encoder_layer.1} parent=67 // pred_check
        %p5013 = pneg %p401
      $region74: #{coattention_encoder_layer.1} parent=67 // pred_check_branch
        %5015 = sbr.rel (%p5013) target = $region76
      $region75: #{coattention_encoder_layer.1} parent=67 // pred_region
        _
      $region76: #{coattention_encoder_layer.1} parent=67 // pred_fallthru
        _
    $region68: #{coattention_encoder_layer.1} parent=5 // pred_fallthru
      _
    %p5016 = scmp.le.s32.totalorder 2, %s20
    // Predicated region
    $region77: #{coattention_encoder_layer.1} parent=5 // pred_check
      %p5017 = pneg %p5016
    $region78: #{coattention_encoder_layer.1} parent=5 // pred_check_branch
      %5019 = sbr.rel (%p5017) target = $region80
    $region79: #{coattention_encoder_layer.1} parent=5 // pred_region
      %s5020 = ssub.s32 %s20, 2
      // Predicated region
      $region81: #{coattention_encoder_layer.1} parent=79 // pred_check
        %p5021 = pneg %p379
      $region82: #{coattention_encoder_layer.1} parent=79 // pred_check_branch
        %5023 = sbr.rel (%p5021) target = $region84
      $region83: #{coattention_encoder_layer.1} parent=79 // pred_region
        %p5024 = scmp.lt.s32.totalorder %s31, 1
        %s5025 = scalar_select %p5024, %s31, 1
        %p5026 = scmp.lt.s32.totalorder %s32, 1
        %s5027 = scalar_select %p5026, %s32, 1
        %s5028 = smul.addr %s5025, 2
        %s5029 = sadd.s32 %s5027, %s5028
        %s5030 = smul.addr %s5029, 8
        %s5031 = scalar_lea.vmem %s12, %s5030
      $region84: #{coattention_encoder_layer.1} parent=79 // pred_fallthru
        _
      // Predicated region
      $region85: #{coattention_encoder_layer.1} parent=79 // pred_check
        %p5032 = pneg %p407
      $region86: #{coattention_encoder_layer.1} parent=79 // pred_check_branch
        %5034 = sbr.rel (%p5032) target = $region88
      $region87: #{coattention_encoder_layer.1} parent=79 // pred_region
        %p5035 = scmp.lt.s32.totalorder %s31, 1
        %s5036 = scalar_select %p5035, %s31, 1
        %p5037 = scmp.lt.s32.totalorder %s32, 1
        %s5038 = scalar_select %p5037, %s32, 1
        %s5039 = smul.addr %s5036, 2
        %s5040 = sadd.s32 %s5038, %s5039
        %s5041 = smul.addr %s5040, 8
        %s5042 = scalar_lea.vmem %s13, %s5041
      $region88: #{coattention_encoder_layer.1} parent=79 // pred_fallthru
        _
    $region80: #{coattention_encoder_layer.1} parent=5 // pred_fallthru
      _
  $region6: #{coattention_encoder_layer.1} parent=0 // loop_footer
    %s24 = sadd.s32 1, %s20
  $region7: #{coattention_encoder_layer.1} parent=0 // loop_footer_branch
    %19 = sbr.rel target = $region3
  $region8: #{coattention_encoder_layer.1} parent=0 // loop_exit
    _

</llo_original>
